<compile_context>
chip_gen: v5e
topology: v5e:2x2
jax: 0.10.0
libtpu: 0.0.40
codegen_flags: <defaults>
</compile_context>

<pallas_src>
import math

import jax
import jax.numpy as jnp
from jax.experimental import pallas as pl
from jax.experimental.pallas import tpu as pltpu

WINDOW = 11
HALF = WINDOW // 2
SIGMA = 1.5
CB_EPS = 1e-6          # CharbonnierLoss(eps=1e-06): sqrt(diff^2 + eps)
C1 = 0.01 ** 2
C2 = 0.03 ** 2
_OUT_LANES = 128       # lane-dense partial-sum output blocks


def _gauss_taps():
    xs = [math.exp(-((i - HALF) ** 2) / (2.0 * SIGMA * SIGMA)) for i in range(WINDOW)]
    s = sum(xs)
    return tuple(v / s for v in xs)


GAUSS = _gauss_taps()   # compile-time Python floats (baked into the kernel)


def _make_kernel(NB, H, W):
    NBH = NB * H          # rows per step (whole images stacked along sublanes)
    TOT = 5 * NBH         # rows of the 5 concatenated blur operands
    pow2_h = (H & (H - 1)) == 0

    def kernel(x_ref, y_ref, out_ref, acc_ref, gwt_ref):
        s = pl.program_id(1)

        @pl.when(s == 0)
        def _init():
            acc_ref[...] = jnp.zeros_like(acc_ref)
            # Banded Gaussian for the W (lane) pass: gwt[w, v] = g[w - v + HALF]
            wi = jax.lax.broadcasted_iota(jnp.int32, (W, W), 0)
            vi = jax.lax.broadcasted_iota(jnp.int32, (W, W), 1)
            d = wi - vi
            gw = jnp.zeros((W, W), jnp.float32)
            for tap in range(WINDOW):
                gw = gw + jnp.where(d == (tap - HALF), GAUSS[tap], 0.0)
            gwt_ref[...] = gw

        x = x_ref[...].astype(jnp.float32)     # (NB*H, W)
        y = y_ref[...].astype(jnp.float32)

        # Charbonnier map (mean-mode numerator), native layout.
        diff = x - y
        cb_map = jnp.sqrt(diff * diff + CB_EPS)

        # ---- separable Gaussian blur of the 5 SSIM operands ----------------
        ops = jnp.concatenate([x, y, x * x, y * y, x * y], axis=0)   # (5*NBH, W)

        # W pass: one lane-contraction matmul covering all 5 operands.
        t = jnp.dot(ops, gwt_ref[...], preferred_element_type=jnp.float32)

        # H pass: 11-tap conv along sublanes with zero padding at image edges.
        row = jax.lax.broadcasted_iota(jnp.int32, (TOT, W), 0)
        if pow2_h:
            h_in_img = jnp.bitwise_and(row, H - 1)
        else:
            h_in_img = jax.lax.rem(row, H)

        blurred = jnp.zeros_like(t)
        for sft in range(-HALF, HALF + 1):
            if sft == 0:
                shifted = t
            else:
                shifted = pltpu.roll(t, shift=(-sft) % TOT, axis=0)
                if sft < 0:
                    valid = h_in_img >= (-sft)
                else:
                    valid = h_in_img < (H - sft)
                shifted = jnp.where(valid, shifted, 0.0)
            blurred = blurred + GAUSS[sft + HALF] * shifted

        mu1 = blurred[0 * NBH:1 * NBH]
        mu2 = blurred[1 * NBH:2 * NBH]
        bxx = blurred[2 * NBH:3 * NBH]
        byy = blurred[3 * NBH:4 * NBH]
        bxy = blurred[4 * NBH:5 * NBH]

        mu1_sq = mu1 * mu1
        mu2_sq = mu2 * mu2
        mu1_mu2 = mu1 * mu2
        sigma1_sq = bxx - mu1_sq
        sigma2_sq = byy - mu2_sq
        sigma12 = bxy - mu1_mu2

        num = (2.0 * mu1_mu2 + C1) * (2.0 * sigma12 + C2)
        den = (mu1_sq + mu2_sq + C1) * (sigma1_sq + sigma2_sq + C2)
        # EUP approx reciprocal + one Newton step (matches exact divide to ~1e-7).
        r0 = pl.reciprocal(den, approx=True)
        inv_den = r0 * (2.0 - den * r0)
        ssim_map = num * inv_den

        # Fused elementwise accumulation (VPU only); single reduction at the end.
        acc_ref[...] += cb_map - ssim_map

        @pl.when(s == pl.num_programs(1) - 1)
        def _final():
            out_ref[...] = jnp.sum(acc_ref[...]) + jnp.zeros_like(out_ref)

    return kernel


def _vmem_caps():
    """Generation-aware (budget, vmem_limit_bytes), consistent with each other."""
    try:
        cap = int(pltpu.get_tpu_info().vmem_capacity_bytes)
    except Exception:
        cap = 64 * 1024 * 1024          # conservative (v7x-sized) fallback
    limit = min(int(cap * 0.70), 100 * 1024 * 1024)
    budget = int(limit * 0.60)          # working-set budget <= limit, with headroom
    return budget, limit


def _pick_nb(N, H, W, itemsize, budget):
    """Images per grid step: largest divisor of N with an 8-aligned row count
    whose estimated working set fits the budget."""
    def aligned(nb):
        return (nb * H) % 8 == 0 or nb == N

    def fits(nb):
        rows = nb * H
        live = 26 * rows * W * 4            # f32 in-kernel slabs (ops/blur/ssim/acc/masks)
        live += 2 * 2 * rows * W * itemsize  # double-buffered x / y input blocks
        live += W * W * 4                    # Gw^T scratch (single copy)
        return live <= budget

    for d in range(N, 0, -1):
        if N % d == 0 and aligned(d) and fits(d):
            return d
    for d in range(1, N + 1):                # fallback: smallest aligned divisor
        if N % d == 0 and aligned(d):
            return d
    return N


def combined_loss(x, y):
    assert x.shape == y.shape
    B, C, H, W = x.shape
    N = B * C
    itemsize = jnp.dtype(x.dtype).itemsize

    budget, vmem_limit = _vmem_caps()
    NB = _pick_nb(N, H, W, itemsize, budget)
    num_steps = N // NB

    # Leading "parallel" axis: on v7x the 2 TensorCores each take half of the
    # image-chunk groups and write their own lane-dense partial sum.
    G1 = 2 if (num_steps % 2 == 0 and num_steps >= 2) else 1
    G2 = num_steps // G1

    # Native memory order: pure reshape, no transpose, no extra HBM pass.
    xr = x.reshape(N * H, W)
    yr = y.reshape(N * H, W)

    kernel = _make_kernel(NB, H, W)

    out = pl.pallas_call(
        kernel,
        out_shape=jax.ShapeDtypeStruct((1, G1 * _OUT_LANES), jnp.float32),
        grid_spec=pltpu.PrefetchScalarGridSpec(
            num_scalar_prefetch=0,
            grid=(G1, G2),
            in_specs=[
                pl.BlockSpec((NB * H, W), lambda g, s: (g * G2 + s, 0)),
                pl.BlockSpec((NB * H, W), lambda g, s: (g * G2 + s, 0)),
            ],
            out_specs=pl.BlockSpec((1, _OUT_LANES), lambda g, s: (0, g)),
            scratch_shapes=[
                pltpu.VMEM((NB * H, W), jnp.float32),   # fused (cb - ssim) accumulator
                pltpu.VMEM((W, W), jnp.float32),        # Gw^T band matrix (built once)
            ],
        ),
        compiler_params=pltpu.CompilerParams(
            dimension_semantics=("parallel", "arbitrary"),
            vmem_limit_bytes=vmem_limit,
        ),
    )(xr, yr)

    partials = out.reshape(G1, _OUT_LANES)[:, 0]
    total = jnp.sum(partials)
    n_elems = jnp.float32(N * H * W)
    # mean(cb) - mean(ssim) = total / n_elems ; loss = 1 - mean(ssim) + mean(cb)
    return 1.0 + total / n_elems


def _reference_loss(x, y):
    """Pure-JAX reference (same math, no Pallas) for the correctness check."""
    B, C, H, W = x.shape
    N = B * C
    g = jnp.asarray(GAUSS, dtype=jnp.float32)

    def band(n):
        i = jnp.arange(n)[:, None]
        k = jnp.arange(n)[None, :]
        idx = k - i + HALF
        valid = (idx >= 0) & (idx < WINDOW)
        return jnp.where(valid, g[jnp.clip(idx, 0, WINDOW - 1)], 0.0).astype(jnp.float32)

    gh = band(H)
    gwt = band(W).T
    xi = x.reshape(N, H, W).astype(jnp.float32)
    yi = y.reshape(N, H, W).astype(jnp.float32)

    def blur(im):
        t = jnp.einsum('nhw,wv->nhv', im, gwt)
        return jnp.einsum('hk,nkw->nhw', gh, t)

    mu1, mu2 = blur(xi), blur(yi)
    s1 = blur(xi * xi) - mu1 * mu1
    s2 = blur(yi * yi) - mu2 * mu2
    s12 = blur(xi * yi) - mu1 * mu2
    ssim_map = ((2 * mu1 * mu2 + C1) * (2 * s12 + C2)) / (
        (mu1 * mu1 + mu2 * mu2 + C1) * (s1 + s2 + C2))
    cb = jnp.mean(jnp.sqrt((xi - yi) ** 2 + CB_EPS))
    return 1.0 - jnp.mean(ssim_map) + cb


if __name__ == "__main__":
    key = jax.random.PRNGKey(0)
    kx, ky = jax.random.split(key)
    B, C, H, W = 2, 4, 16, 16
    x = jax.random.uniform(kx, (B, C, H, W), dtype=jnp.float32)
    y = jax.random.uniform(ky, (B, C, H, W), dtype=jnp.float32)

    loss = combined_loss(x, y)
    jax.block_until_ready(loss)

    ref = _reference_loss(x, y)
    assert abs(float(loss) - float(ref)) < 2e-4, (float(loss), float(ref))
    print("KERNEL_OK")
</pallas_src>

<mosaic_0001>
module attributes {stable_mosaic.version = 11 : i64} {
  func.func @kernel(%arg0: i32, %arg1: i32, %arg2: memref<128x16xf32, #tpu.memory_space<vmem>>, %arg3: memref<128x16xf32, #tpu.memory_space<vmem>>, %arg4: memref<1x128xf32, #tpu.memory_space<vmem>>, %arg5: memref<128x16xf32, #tpu.memory_space<vmem>>, %arg6: memref<16x16xf32, #tpu.memory_space<vmem>>) attributes {dimension_semantics = [#tpu.dimension_semantics<parallel>, #tpu.dimension_semantics<arbitrary>], iteration_bounds = array<i64: 1, 1>, scalar_prefetch = 0 : i64, scratch_operands = 2 : i64, tpu.core_type = #tpu.core_type<tc>, window_params = [{transform_indices = @transform_0, window_bounds = array<i64: 128, 16>}, {transform_indices = @transform_1, window_bounds = array<i64: 128, 16>}, {transform_indices = @transform_2, window_bounds = array<i64: 1, 128>}]} {
    %c0_i32 = arith.constant 0 : i32
    %0 = arith.cmpi eq, %arg1, %c0_i32 : i32
    %1 = arith.extui %0 : i1 to i32
    %c0_i32_0 = arith.constant 0 : i32
    %2 = arith.cmpi ne, %1, %c0_i32_0 : i32
    scf.if %2 {
      %cst_48 = arith.constant 0.000000e+00 : f32
      %143 = vector.broadcast %cst_48 : f32 to vector<128x16xf32>
      %c0_49 = arith.constant 0 : index
      %c0_50 = arith.constant 0 : index
      %144 = vector.load %arg5[%c0_49, %c0_50] : memref<128x16xf32, #tpu.memory_space<vmem>>, vector<128x16xf32>
      tpu.vector_store %arg5[%c0_49, %c0_50], %143 {strides = array<i32>} : memref<128x16xf32, #tpu.memory_space<vmem>>, vector<128x16xf32>,
      %145 = tpu.iota {dimensions = array<i32: 0>} : vector<16x16xi32>
      %146 = tpu.iota {dimensions = array<i32: 1>} : vector<16x16xi32>
      %147 = arith.subi %145, %146 : vector<16x16xi32>
      %cst_51 = arith.constant 0.000000e+00 : f32
      %148 = vector.broadcast %cst_51 : f32 to vector<16x16xf32>
      %c-5_i32 = arith.constant -5 : i32
      %149 = vector.broadcast %c-5_i32 : i32 to vector<16x16xi32>
      %150 = arith.cmpi eq, %147, %149 : vector<16x16xi32>
      %cst_52 = arith.constant 0.00102838012 : f32
      %cst_53 = arith.constant 0.000000e+00 : f32
      %151 = vector.broadcast %cst_52 : f32 to vector<16x16xf32>
      %152 = vector.broadcast %cst_53 : f32 to vector<16x16xf32>
      %153 = arith.select %150, %151, %152 : vector<16x16xi1>, vector<16x16xf32>
      %154 = arith.addf %148, %153 : vector<16x16xf32>
      %c-4_i32 = arith.constant -4 : i32
      %155 = vector.broadcast %c-4_i32 : i32 to vector<16x16xi32>
      %156 = arith.cmpi eq, %147, %155 : vector<16x16xi32>
      %cst_54 = arith.constant 0.00759875821 : f32
      %cst_55 = arith.constant 0.000000e+00 : f32
      %157 = vector.broadcast %cst_54 : f32 to vector<16x16xf32>
      %158 = vector.broadcast %cst_55 : f32 to vector<16x16xf32>
      %159 = arith.select %156, %157, %158 : vector<16x16xi1>, vector<16x16xf32>
      %160 = arith.addf %154, %159 : vector<16x16xf32>
      %c-3_i32 = arith.constant -3 : i32
      %161 = vector.broadcast %c-3_i32 : i32 to vector<16x16xi32>
      %162 = arith.cmpi eq, %147, %161 : vector<16x16xi32>
      %cst_56 = arith.constant 0.0360007733 : f32
      %cst_57 = arith.constant 0.000000e+00 : f32
      %163 = vector.broadcast %cst_56 : f32 to vector<16x16xf32>
      %164 = vector.broadcast %cst_57 : f32 to vector<16x16xf32>
      %165 = arith.select %162, %163, %164 : vector<16x16xi1>, vector<16x16xf32>
      %166 = arith.addf %160, %165 : vector<16x16xf32>
      %c-2_i32 = arith.constant -2 : i32
      %167 = vector.broadcast %c-2_i32 : i32 to vector<16x16xi32>
      %168 = arith.cmpi eq, %147, %167 : vector<16x16xi32>
      %cst_58 = arith.constant 0.109360687 : f32
      %cst_59 = arith.constant 0.000000e+00 : f32
      %169 = vector.broadcast %cst_58 : f32 to vector<16x16xf32>
      %170 = vector.broadcast %cst_59 : f32 to vector<16x16xf32>
      %171 = arith.select %168, %169, %170 : vector<16x16xi1>, vector<16x16xf32>
      %172 = arith.addf %166, %171 : vector<16x16xf32>
      %c-1_i32 = arith.constant -1 : i32
      %173 = vector.broadcast %c-1_i32 : i32 to vector<16x16xi32>
      %174 = arith.cmpi eq, %147, %173 : vector<16x16xi32>
      %cst_60 = arith.constant 0.213005543 : f32
      %cst_61 = arith.constant 0.000000e+00 : f32
      %175 = vector.broadcast %cst_60 : f32 to vector<16x16xf32>
      %176 = vector.broadcast %cst_61 : f32 to vector<16x16xf32>
      %177 = arith.select %174, %175, %176 : vector<16x16xi1>, vector<16x16xf32>
      %178 = arith.addf %172, %177 : vector<16x16xf32>
      %c0_i32_62 = arith.constant 0 : i32
      %179 = vector.broadcast %c0_i32_62 : i32 to vector<16x16xi32>
      %180 = arith.cmpi eq, %147, %179 : vector<16x16xi32>
      %cst_63 = arith.constant 0.266011715 : f32
      %cst_64 = arith.constant 0.000000e+00 : f32
      %181 = vector.broadcast %cst_63 : f32 to vector<16x16xf32>
      %182 = vector.broadcast %cst_64 : f32 to vector<16x16xf32>
      %183 = arith.select %180, %181, %182 : vector<16x16xi1>, vector<16x16xf32>
      %184 = arith.addf %178, %183 : vector<16x16xf32>
      %c1_i32_65 = arith.constant 1 : i32
      %185 = vector.broadcast %c1_i32_65 : i32 to vector<16x16xi32>
      %186 = arith.cmpi eq, %147, %185 : vector<16x16xi32>
      %cst_66 = arith.constant 0.213005543 : f32
      %cst_67 = arith.constant 0.000000e+00 : f32
      %187 = vector.broadcast %cst_66 : f32 to vector<16x16xf32>
      %188 = vector.broadcast %cst_67 : f32 to vector<16x16xf32>
      %189 = arith.select %186, %187, %188 : vector<16x16xi1>, vector<16x16xf32>
      %190 = arith.addf %184, %189 : vector<16x16xf32>
      %c2_i32_68 = arith.constant 2 : i32
      %191 = vector.broadcast %c2_i32_68 : i32 to vector<16x16xi32>
      %192 = arith.cmpi eq, %147, %191 : vector<16x16xi32>
      %cst_69 = arith.constant 0.109360687 : f32
      %cst_70 = arith.constant 0.000000e+00 : f32
      %193 = vector.broadcast %cst_69 : f32 to vector<16x16xf32>
      %194 = vector.broadcast %cst_70 : f32 to vector<16x16xf32>
      %195 = arith.select %192, %193, %194 : vector<16x16xi1>, vector<16x16xf32>
      %196 = arith.addf %190, %195 : vector<16x16xf32>
      %c3_i32_71 = arith.constant 3 : i32
      %197 = vector.broadcast %c3_i32_71 : i32 to vector<16x16xi32>
      %198 = arith.cmpi eq, %147, %197 : vector<16x16xi32>
      %cst_72 = arith.constant 0.0360007733 : f32
      %cst_73 = arith.constant 0.000000e+00 : f32
      %199 = vector.broadcast %cst_72 : f32 to vector<16x16xf32>
      %200 = vector.broadcast %cst_73 : f32 to vector<16x16xf32>
      %201 = arith.select %198, %199, %200 : vector<16x16xi1>, vector<16x16xf32>
      %202 = arith.addf %196, %201 : vector<16x16xf32>
      %c4_i32_74 = arith.constant 4 : i32
      %203 = vector.broadcast %c4_i32_74 : i32 to vector<16x16xi32>
      %204 = arith.cmpi eq, %147, %203 : vector<16x16xi32>
      %cst_75 = arith.constant 0.00759875821 : f32
      %cst_76 = arith.constant 0.000000e+00 : f32
      %205 = vector.broadcast %cst_75 : f32 to vector<16x16xf32>
      %206 = vector.broadcast %cst_76 : f32 to vector<16x16xf32>
      %207 = arith.select %204, %205, %206 : vector<16x16xi1>, vector<16x16xf32>
      %208 = arith.addf %202, %207 : vector<16x16xf32>
      %c5_i32_77 = arith.constant 5 : i32
      %209 = vector.broadcast %c5_i32_77 : i32 to vector<16x16xi32>
      %210 = arith.cmpi eq, %147, %209 : vector<16x16xi32>
      %cst_78 = arith.constant 0.00102838012 : f32
      %cst_79 = arith.constant 0.000000e+00 : f32
      %211 = vector.broadcast %cst_78 : f32 to vector<16x16xf32>
      %212 = vector.broadcast %cst_79 : f32 to vector<16x16xf32>
      %213 = arith.select %210, %211, %212 : vector<16x16xi1>, vector<16x16xf32>
      %214 = arith.addf %208, %213 : vector<16x16xf32>
      %c0_80 = arith.constant 0 : index
      %c0_81 = arith.constant 0 : index
      %215 = vector.load %arg6[%c0_80, %c0_81] : memref<16x16xf32, #tpu.memory_space<vmem>>, vector<16x16xf32>
      tpu.vector_store %arg6[%c0_80, %c0_81], %214 {strides = array<i32>} : memref<16x16xf32, #tpu.memory_space<vmem>>, vector<16x16xf32>,
    } else {
    }
    %c0 = arith.constant 0 : index
    %c0_1 = arith.constant 0 : index
    %3 = vector.load %arg2[%c0, %c0_1] : memref<128x16xf32, #tpu.memory_space<vmem>>, vector<128x16xf32>
    %c0_2 = arith.constant 0 : index
    %c0_3 = arith.constant 0 : index
    %4 = vector.load %arg3[%c0_2, %c0_3] : memref<128x16xf32, #tpu.memory_space<vmem>>, vector<128x16xf32>
    %5 = arith.subf %3, %4 : vector<128x16xf32>
    %6 = arith.mulf %5, %5 : vector<128x16xf32>
    %cst = arith.constant 9.99999997E-7 : f32
    %7 = vector.broadcast %cst : f32 to vector<128x16xf32>
    %8 = arith.addf %6, %7 : vector<128x16xf32>
    %9 = math.sqrt %8 : vector<128x16xf32>
    %10 = arith.mulf %3, %3 : vector<128x16xf32>
    %11 = arith.mulf %4, %4 : vector<128x16xf32>
    %12 = arith.mulf %3, %4 : vector<128x16xf32>
    %13 = tpu.concatenate %3, %4, %10, %11, %12 in 0 : vector<128x16xf32>, vector<128x16xf32>, vector<128x16xf32>, vector<128x16xf32>, vector<128x16xf32> -> vector<640x16xf32>
    %c0_4 = arith.constant 0 : index
    %c0_5 = arith.constant 0 : index
    %14 = vector.load %arg6[%c0_4, %c0_5] : memref<16x16xf32, #tpu.memory_space<vmem>>, vector<16x16xf32>
    %cst_6 = arith.constant dense<0.000000e+00> : vector<640x16xf32>
    %15 = tpu.matmul %13, %14, %cst_6 {dimension_numbers = #tpu.dot_dimension_numbers<[1], [0], [0], [1], [0, 0, 1, 1], [], []>} : vector<640x16xf32>, vector<16x16xf32>, vector<640x16xf32> -> vector<640x16xf32>
    %16 = tpu.iota {dimensions = array<i32: 0>} : vector<640x16xi32>
    %c15_i32 = arith.constant 15 : i32
    %17 = vector.broadcast %c15_i32 : i32 to vector<640x16xi32>
    %18 = arith.andi %16, %17 : vector<640x16xi32>
    %cst_7 = arith.constant 0.000000e+00 : f32
    %19 = vector.broadcast %cst_7 : f32 to vector<640x16xf32>
    %c5_i32 = arith.constant 5 : i32
    %20 = tpu.dynamic_rotate %15 by %c5_i32 dim 0 : vector<640x16xf32>, i32 -> vector<640x16xf32>
    %c5_i32_8 = arith.constant 5 : i32
    %21 = vector.broadcast %c5_i32_8 : i32 to vector<640x16xi32>
    %22 = arith.cmpi sge, %18, %21 : vector<640x16xi32>
    %cst_9 = arith.constant 0.000000e+00 : f32
    %23 = vector.broadcast %cst_9 : f32 to vector<640x16xf32>
    %24 = arith.select %22, %20, %23 : vector<640x16xi1>, vector<640x16xf32>
    %cst_10 = arith.constant 0.00102838012 : f32
    %25 = vector.broadcast %cst_10 : f32 to vector<640x16xf32>
    %26 = arith.mulf %25, %24 : vector<640x16xf32>
    %27 = arith.addf %19, %26 : vector<640x16xf32>
    %c4_i32 = arith.constant 4 : i32
    %28 = tpu.dynamic_rotate %15 by %c4_i32 dim 0 : vector<640x16xf32>, i32 -> vector<640x16xf32>
    %c4_i32_11 = arith.constant 4 : i32
    %29 = vector.broadcast %c4_i32_11 : i32 to vector<640x16xi32>
    %30 = arith.cmpi sge, %18, %29 : vector<640x16xi32>
    %cst_12 = arith.constant 0.000000e+00 : f32
    %31 = vector.broadcast %cst_12 : f32 to vector<640x16xf32>
    %32 = arith.select %30, %28, %31 : vector<640x16xi1>, vector<640x16xf32>
    %cst_13 = arith.constant 0.00759875821 : f32
    %33 = vector.broadcast %cst_13 : f32 to vector<640x16xf32>
    %34 = arith.mulf %33, %32 : vector<640x16xf32>
    %35 = arith.addf %27, %34 : vector<640x16xf32>
    %c3_i32 = arith.constant 3 : i32
    %36 = tpu.dynamic_rotate %15 by %c3_i32 dim 0 : vector<640x16xf32>, i32 -> vector<640x16xf32>
    %c3_i32_14 = arith.constant 3 : i32
    %37 = vector.broadcast %c3_i32_14 : i32 to vector<640x16xi32>
    %38 = arith.cmpi sge, %18, %37 : vector<640x16xi32>
    %cst_15 = arith.constant 0.000000e+00 : f32
    %39 = vector.broadcast %cst_15 : f32 to vector<640x16xf32>
    %40 = arith.select %38, %36, %39 : vector<640x16xi1>, vector<640x16xf32>
    %cst_16 = arith.constant 0.0360007733 : f32
    %41 = vector.broadcast %cst_16 : f32 to vector<640x16xf32>
    %42 = arith.mulf %41, %40 : vector<640x16xf32>
    %43 = arith.addf %35, %42 : vector<640x16xf32>
    %c2_i32 = arith.constant 2 : i32
    %44 = tpu.dynamic_rotate %15 by %c2_i32 dim 0 : vector<640x16xf32>, i32 -> vector<640x16xf32>
    %c2_i32_17 = arith.constant 2 : i32
    %45 = vector.broadcast %c2_i32_17 : i32 to vector<640x16xi32>
    %46 = arith.cmpi sge, %18, %45 : vector<640x16xi32>
    %cst_18 = arith.constant 0.000000e+00 : f32
    %47 = vector.broadcast %cst_18 : f32 to vector<640x16xf32>
    %48 = arith.select %46, %44, %47 : vector<640x16xi1>, vector<640x16xf32>
    %cst_19 = arith.constant 0.109360687 : f32
    %49 = vector.broadcast %cst_19 : f32 to vector<640x16xf32>
    %50 = arith.mulf %49, %48 : vector<640x16xf32>
    %51 = arith.addf %43, %50 : vector<640x16xf32>
    %c1_i32 = arith.constant 1 : i32
    %52 = tpu.dynamic_rotate %15 by %c1_i32 dim 0 : vector<640x16xf32>, i32 -> vector<640x16xf32>
    %c1_i32_20 = arith.constant 1 : i32
    %53 = vector.broadcast %c1_i32_20 : i32 to vector<640x16xi32>
    %54 = arith.cmpi sge, %18, %53 : vector<640x16xi32>
    %cst_21 = arith.constant 0.000000e+00 : f32
    %55 = vector.broadcast %cst_21 : f32 to vector<640x16xf32>
    %56 = arith.select %54, %52, %55 : vector<640x16xi1>, vector<640x16xf32>
    %cst_22 = arith.constant 0.213005543 : f32
    %57 = vector.broadcast %cst_22 : f32 to vector<640x16xf32>
    %58 = arith.mulf %57, %56 : vector<640x16xf32>
    %59 = arith.addf %51, %58 : vector<640x16xf32>
    %cst_23 = arith.constant 0.266011715 : f32
    %60 = vector.broadcast %cst_23 : f32 to vector<640x16xf32>
    %61 = arith.mulf %60, %15 : vector<640x16xf32>
    %62 = arith.addf %59, %61 : vector<640x16xf32>
    %c639_i32 = arith.constant 639 : i32
    %63 = tpu.dynamic_rotate %15 by %c639_i32 dim 0 : vector<640x16xf32>, i32 -> vector<640x16xf32>
    %c15_i32_24 = arith.constant 15 : i32
    %64 = vector.broadcast %c15_i32_24 : i32 to vector<640x16xi32>
    %65 = arith.cmpi slt, %18, %64 : vector<640x16xi32>
    %cst_25 = arith.constant 0.000000e+00 : f32
    %66 = vector.broadcast %cst_25 : f32 to vector<640x16xf32>
    %67 = arith.select %65, %63, %66 : vector<640x16xi1>, vector<640x16xf32>
    %cst_26 = arith.constant 0.213005543 : f32
    %68 = vector.broadcast %cst_26 : f32 to vector<640x16xf32>
    %69 = arith.mulf %68, %67 : vector<640x16xf32>
    %70 = arith.addf %62, %69 : vector<640x16xf32>
    %c638_i32 = arith.constant 638 : i32
    %71 = tpu.dynamic_rotate %15 by %c638_i32 dim 0 : vector<640x16xf32>, i32 -> vector<640x16xf32>
    %c14_i32 = arith.constant 14 : i32
    %72 = vector.broadcast %c14_i32 : i32 to vector<640x16xi32>
    %73 = arith.cmpi slt, %18, %72 : vector<640x16xi32>
    %cst_27 = arith.constant 0.000000e+00 : f32
    %74 = vector.broadcast %cst_27 : f32 to vector<640x16xf32>
    %75 = arith.select %73, %71, %74 : vector<640x16xi1>, vector<640x16xf32>
    %cst_28 = arith.constant 0.109360687 : f32
    %76 = vector.broadcast %cst_28 : f32 to vector<640x16xf32>
    %77 = arith.mulf %76, %75 : vector<640x16xf32>
    %78 = arith.addf %70, %77 : vector<640x16xf32>
    %c637_i32 = arith.constant 637 : i32
    %79 = tpu.dynamic_rotate %15 by %c637_i32 dim 0 : vector<640x16xf32>, i32 -> vector<640x16xf32>
    %c13_i32 = arith.constant 13 : i32
    %80 = vector.broadcast %c13_i32 : i32 to vector<640x16xi32>
    %81 = arith.cmpi slt, %18, %80 : vector<640x16xi32>
    %cst_29 = arith.constant 0.000000e+00 : f32
    %82 = vector.broadcast %cst_29 : f32 to vector<640x16xf32>
    %83 = arith.select %81, %79, %82 : vector<640x16xi1>, vector<640x16xf32>
    %cst_30 = arith.constant 0.0360007733 : f32
    %84 = vector.broadcast %cst_30 : f32 to vector<640x16xf32>
    %85 = arith.mulf %84, %83 : vector<640x16xf32>
    %86 = arith.addf %78, %85 : vector<640x16xf32>
    %c636_i32 = arith.constant 636 : i32
    %87 = tpu.dynamic_rotate %15 by %c636_i32 dim 0 : vector<640x16xf32>, i32 -> vector<640x16xf32>
    %c12_i32 = arith.constant 12 : i32
    %88 = vector.broadcast %c12_i32 : i32 to vector<640x16xi32>
    %89 = arith.cmpi slt, %18, %88 : vector<640x16xi32>
    %cst_31 = arith.constant 0.000000e+00 : f32
    %90 = vector.broadcast %cst_31 : f32 to vector<640x16xf32>
    %91 = arith.select %89, %87, %90 : vector<640x16xi1>, vector<640x16xf32>
    %cst_32 = arith.constant 0.00759875821 : f32
    %92 = vector.broadcast %cst_32 : f32 to vector<640x16xf32>
    %93 = arith.mulf %92, %91 : vector<640x16xf32>
    %94 = arith.addf %86, %93 : vector<640x16xf32>
    %c635_i32 = arith.constant 635 : i32
    %95 = tpu.dynamic_rotate %15 by %c635_i32 dim 0 : vector<640x16xf32>, i32 -> vector<640x16xf32>
    %c11_i32 = arith.constant 11 : i32
    %96 = vector.broadcast %c11_i32 : i32 to vector<640x16xi32>
    %97 = arith.cmpi slt, %18, %96 : vector<640x16xi32>
    %cst_33 = arith.constant 0.000000e+00 : f32
    %98 = vector.broadcast %cst_33 : f32 to vector<640x16xf32>
    %99 = arith.select %97, %95, %98 : vector<640x16xi1>, vector<640x16xf32>
    %cst_34 = arith.constant 0.00102838012 : f32
    %100 = vector.broadcast %cst_34 : f32 to vector<640x16xf32>
    %101 = arith.mulf %100, %99 : vector<640x16xf32>
    %102 = arith.addf %94, %101 : vector<640x16xf32>
    %103 = vector.extract_strided_slice %102 {offsets = [0, 0], sizes = [128, 16], strides = [1, 1]} : vector<640x16xf32> to vector<128x16xf32>
    %104 = vector.extract_strided_slice %102 {offsets = [128, 0], sizes = [128, 16], strides = [1, 1]} : vector<640x16xf32> to vector<128x16xf32>
    %105 = vector.extract_strided_slice %102 {offsets = [256, 0], sizes = [128, 16], strides = [1, 1]} : vector<640x16xf32> to vector<128x16xf32>
    %106 = vector.extract_strided_slice %102 {offsets = [384, 0], sizes = [128, 16], strides = [1, 1]} : vector<640x16xf32> to vector<128x16xf32>
    %107 = vector.extract_strided_slice %102 {offsets = [512, 0], sizes = [128, 16], strides = [1, 1]} : vector<640x16xf32> to vector<128x16xf32>
    %108 = arith.mulf %103, %103 : vector<128x16xf32>
    %109 = arith.mulf %104, %104 : vector<128x16xf32>
    %110 = arith.mulf %103, %104 : vector<128x16xf32>
    %111 = arith.subf %105, %108 : vector<128x16xf32>
    %112 = arith.subf %106, %109 : vector<128x16xf32>
    %113 = arith.subf %107, %110 : vector<128x16xf32>
    %cst_35 = arith.constant 2.000000e+00 : f32
    %114 = vector.broadcast %cst_35 : f32 to vector<128x16xf32>
    %115 = arith.mulf %114, %110 : vector<128x16xf32>
    %cst_36 = arith.constant 9.99999974E-5 : f32
    %116 = vector.broadcast %cst_36 : f32 to vector<128x16xf32>
    %117 = arith.addf %115, %116 : vector<128x16xf32>
    %cst_37 = arith.constant 2.000000e+00 : f32
    %118 = vector.broadcast %cst_37 : f32 to vector<128x16xf32>
    %119 = arith.mulf %118, %113 : vector<128x16xf32>
    %cst_38 = arith.constant 8.99999984E-4 : f32
    %120 = vector.broadcast %cst_38 : f32 to vector<128x16xf32>
    %121 = arith.addf %119, %120 : vector<128x16xf32>
    %122 = arith.mulf %117, %121 : vector<128x16xf32>
    %123 = arith.addf %108, %109 : vector<128x16xf32>
    %cst_39 = arith.constant 9.99999974E-5 : f32
    %124 = vector.broadcast %cst_39 : f32 to vector<128x16xf32>
    %125 = arith.addf %123, %124 : vector<128x16xf32>
    %126 = arith.addf %111, %112 : vector<128x16xf32>
    %cst_40 = arith.constant 8.99999984E-4 : f32
    %127 = vector.broadcast %cst_40 : f32 to vector<128x16xf32>
    %128 = arith.addf %126, %127 : vector<128x16xf32>
    %129 = arith.mulf %125, %128 : vector<128x16xf32>
    %130 = tpu.reciprocal %129 {approx = true} : vector<128x16xf32> -> vector<128x16xf32>
    %131 = arith.mulf %129, %130 : vector<128x16xf32>
    %cst_41 = arith.constant 2.000000e+00 : f32
    %132 = vector.broadcast %cst_41 : f32 to vector<128x16xf32>
    %133 = arith.subf %132, %131 : vector<128x16xf32>
    %134 = arith.mulf %130, %133 : vector<128x16xf32>
    %135 = arith.mulf %122, %134 : vector<128x16xf32>
    %c0_42 = arith.constant 0 : index
    %c0_43 = arith.constant 0 : index
    %136 = vector.load %arg5[%c0_42, %c0_43] : memref<128x16xf32, #tpu.memory_space<vmem>>, vector<128x16xf32>
    %137 = arith.subf %9, %135 : vector<128x16xf32>
    %138 = arith.addf %136, %137 : vector<128x16xf32>
    %c0_44 = arith.constant 0 : index
    %c0_45 = arith.constant 0 : index
    %139 = vector.load %arg5[%c0_44, %c0_45] : memref<128x16xf32, #tpu.memory_space<vmem>>, vector<128x16xf32>
    tpu.vector_store %arg5[%c0_44, %c0_45], %138 {strides = array<i32>} : memref<128x16xf32, #tpu.memory_space<vmem>>, vector<128x16xf32>,
    %c0_i32_46 = arith.constant 0 : i32
    %140 = arith.cmpi eq, %arg1, %c0_i32_46 : i32
    %141 = arith.extui %140 : i1 to i32
    %c0_i32_47 = arith.constant 0 : i32
    %142 = arith.cmpi ne, %141, %c0_i32_47 : i32
    scf.if %142 {
      %c0_48 = arith.constant 0 : index
      %c0_49 = arith.constant 0 : index
      %143 = vector.load %arg5[%c0_48, %c0_49] : memref<128x16xf32, #tpu.memory_space<vmem>>, vector<128x16xf32>
      %144 = vector.shape_cast %143 : vector<128x16xf32> to vector<1x128x16xf32>
      %cst_50 = arith.constant dense<0.000000e+00> : vector<1xf32>
      %145 = vector.multi_reduction <add>, %144, %cst_50 [1, 2] : vector<1x128x16xf32> to vector<1xf32>
      %146 = vector.shape_cast %145 : vector<1xf32> to vector<1x1x1xf32>
      %147 = vector.extract %146[0, 0, 0] : f32 from vector<1x1x1xf32>
      %cst_51 = arith.constant 0.000000e+00 : f32
      %148 = vector.broadcast %cst_51 : f32 to vector<1x128xf32>
      %149 = vector.broadcast %147 : f32 to vector<1x128xf32>
      %150 = arith.addf %149, %148 : vector<1x128xf32>
      %c0_52 = arith.constant 0 : index
      %c0_53 = arith.constant 0 : index
      %151 = vector.load %arg4[%c0_52, %c0_53] : memref<1x128xf32, #tpu.memory_space<vmem>>, vector<1x128xf32>
      tpu.vector_store %arg4[%c0_52, %c0_53], %150 {strides = array<i32>} : memref<1x128xf32, #tpu.memory_space<vmem>>, vector<1x128xf32>,
    } else {
    }
    return
  }
  func.func @transform_0(%arg0: i32, %arg1: i32) -> (i32, i32) {
    %c1_i32 = arith.constant 1 : i32
    %0 = arith.muli %arg0, %c1_i32 : i32
    %1 = arith.addi %0, %arg1 : i32
    %c0_i32 = arith.constant 0 : i32
    %c0_i32_0 = arith.constant 0 : i32
    return %1, %c0_i32 : i32, i32
  }
  func.func @transform_1(%arg0: i32, %arg1: i32) -> (i32, i32) {
    %c1_i32 = arith.constant 1 : i32
    %0 = arith.muli %arg0, %c1_i32 : i32
    %1 = arith.addi %0, %arg1 : i32
    %c0_i32 = arith.constant 0 : i32
    %c0_i32_0 = arith.constant 0 : i32
    return %1, %c0_i32 : i32, i32
  }
  func.func @transform_2(%arg0: i32, %arg1: i32) -> (i32, i32) {
    %c0_i32 = arith.constant 0 : i32
    %c0_i32_0 = arith.constant 0 : i32
    return %c0_i32, %arg0 : i32, i32
  }
}

</mosaic_0001>

<llo_original>
// kernel: tpu_custom_call.1
$region0: #{tpu_custom_call.1}
  #allocation0 [shape = 'u32[]', space=smem, size = 0x4, offset = 0x4, fixed_abs, tag = 'smem constant byte address 0x4 - core index']
  #allocation1 [shape = 'u32[72,128]{1,0:T(1,128)}', space=vmem, size = 0x9000, scoped, tag = 'internal scratch']
  #allocation2 [shape = 'f32[128,16]{1,0:T(8,128)}', space=vmem, size = 0x10000, scoped, tag = 'scratch operand']
  #allocation3 [shape = 'f32[16,16]{1,0:T(8,128)}', space=vmem, size = 0x2000, scoped, tag = 'scratch operand']
  %s0 = inlined_call_operand.vmem [shape: f32[128,16], index: 0, kind: input, shape index: {}]
  %s1 = inlined_call_operand.vmem [shape: f32[128,16], index: 1, kind: input, shape index: {}]
  %s2 = inlined_call_operand.hbm [shape: f32[1,128], index: 2, kind: output, shape index: {}]
  %s3 = sld [smem:[#allocation0]]
  $region26: #{tpu_custom_call.1} parent=0
    _
  %s5 = ssub.s32 1, %s3
  %s6 = scalar_select 0, %s5, %s3
  $region1: #{tpu_custom_call.1} parent=0
    #allocation4 [shape = 'u8[512]{0}', space=vmem, size = 0x400, scoped, tag = 'output window, operand 0, single buffered']
    #allocation5 [shape = 's32[1]{0}', space=sflag, size = 0x4, scoped, tag = 'scoped memory for tpu_custom_call.1']
    %7 = vsyncpa [#allocation5], 0
    // Predicated region
    $region2: #{tpu_custom_call.1} parent=1 // pred_check
      _
    $region3: #{tpu_custom_call.1} parent=1 // pred_check_branch
      %9 = sbr.rel (0) target = $region5
    $region4: #{tpu_custom_call.1} parent=1 // pred_region
      %s10 = sadd.s32 0, 0
      %s11 = smul.u32 16, %s10
      %p12 = scmp.lt.s32.totalorder %s11, 15
      %s13 = scalar_select %p12, %s11, 15
      %s14 = smul.addr %s13, 8
      %s15 = scalar_lea.vmem %s0, %s14
      %s16 = sadd.s32 0, 0
      %s17 = smul.u32 16, %s16
    $region5: #{tpu_custom_call.1} parent=1 // pred_fallthru
      _
    // Predicated region
    $region6: #{tpu_custom_call.1} parent=1 // pred_check
      _
    $region7: #{tpu_custom_call.1} parent=1 // pred_check_branch
      %19 = sbr.rel (0) target = $region9
    $region8: #{tpu_custom_call.1} parent=1 // pred_region
      %s20 = sadd.s32 0, 0
      %s21 = smul.u32 16, %s20
      %p22 = scmp.lt.s32.totalorder %s21, 15
      %s23 = scalar_select %p22, %s21, 15
      %s24 = smul.addr %s23, 8
      %s25 = scalar_lea.vmem %s1, %s24
      %s26 = sadd.s32 0, 0
      %s27 = smul.u32 16, %s26
    $region9: #{tpu_custom_call.1} parent=1 // pred_fallthru
      _
    %s28 = sadd.s32 0, 0
    %s29 = smul.u32 16, %s28
    %p30 = scmp.lt.s32.totalorder %s29, 15
    %s31 = scalar_select %p30, %s29, 15
    %s32 = smul.addr %s31, 8
    %s33 = scalar_lea.vmem %s0, %s32
    %s34 = sadd.s32 0, 0
    %s35 = smul.u32 16, %s34
    %p36 = scmp.lt.s32.totalorder %s35, 15
    %s37 = scalar_select %p36, %s35, 15
    %s38 = smul.addr %s37, 8
    %s39 = scalar_lea.vmem %s1, %s38
    %s40 = sadd.s32 0, 0
    %s41 = smul.u32 16, %s40
    %p42 = scmp.lt.s32.totalorder %s41, 15
    %s43 = scalar_select %p42, %s41, 15
    %s44 = smul.addr %s43, 8
    %s45 = scalar_lea.vmem %s0, %s44
    %s46 = sadd.s32 0, 0
    %s47 = smul.u32 16, %s46
    %s48 = sadd.s32 0, 0
    %s49 = smul.u32 16, %s48
    %p50 = scmp.lt.s32.totalorder %s49, 15
    %s51 = scalar_select %p50, %s49, 15
    %s52 = smul.addr %s51, 8
    %s53 = scalar_lea.vmem %s1, %s52
    %s54 = sadd.s32 0, 0
    %s55 = smul.u32 16, %s54
    %p56 = scmp.eq.s32.totalorder 0, 0
    // Predicated region
    $region10: #{tpu_custom_call.1} parent=1 // pred_check
      %p57 = pneg %p56
    $region11: #{tpu_custom_call.1} parent=1 // pred_check_branch
      %59 = sbr.rel (%p57) target = $region13
    $region12: #{tpu_custom_call.1} parent=1 // pred_region
      %vm60 = vcmask 130048
      %61 = vst.msk [vmem:[#allocation2] sm:$0xff] %vm60, 0.0
      %62 = vst.msk [vmem:[#allocation2 + $0x8] sm:$0xff] %vm60, 0.0
      %63 = vst.msk [vmem:[#allocation2 + $0x10] sm:$0xff] %vm60, 0.0
      %64 = vst.msk [vmem:[#allocation2 + $0x18] sm:$0xff] %vm60, 0.0
      %65 = vst.msk [vmem:[#allocation2 + $0x20] sm:$0xff] %vm60, 0.0
      %66 = vst.msk [vmem:[#allocation2 + $0x28] sm:$0xff] %vm60, 0.0
      %67 = vst.msk [vmem:[#allocation2 + $0x30] sm:$0xff] %vm60, 0.0
      %68 = vst.msk [vmem:[#allocation2 + $0x38] sm:$0xff] %vm60, 0.0
      %69 = vst.msk [vmem:[#allocation2 + $0x40] sm:$0xff] %vm60, 0.0
      %70 = vst.msk [vmem:[#allocation2 + $0x48] sm:$0xff] %vm60, 0.0
      %71 = vst.msk [vmem:[#allocation2 + $0x50] sm:$0xff] %vm60, 0.0
      %72 = vst.msk [vmem:[#allocation2 + $0x58] sm:$0xff] %vm60, 0.0
      %73 = vst.msk [vmem:[#allocation2 + $0x60] sm:$0xff] %vm60, 0.0
      %74 = vst.msk [vmem:[#allocation2 + $0x68] sm:$0xff] %vm60, 0.0
      %75 = vst.msk [vmem:[#allocation2 + $0x70] sm:$0xff] %vm60, 0.0
      %76 = vst.msk [vmem:[#allocation2 + $0x78] sm:$0xff] %vm60, 0.0
      %v77 = vlaneseq
      %v78 = vshrl.u32 %v77, 7
      %v79 = vadd.s32 %v78, 8
      %v80 = vlaneseq
      %v81 = vand.u32 %v80, 127
      %v82 = vsub.s32 %v78, %v81
      %v83 = vsub.s32 %v79, %v81
      %vm84 = vcmp.eq.s32.totalorder %v82, 4294967291
      %vm85 = vcmp.eq.s32.totalorder %v83, 4294967291
      %v86 = vsel %vm84, 0.0010283801, 0.0
      %v87 = vsel %vm85, 0.0010283801, 0.0
      %v88 = vadd.f32 %v86, 0.0
      %v89 = vadd.f32 %v87, 0.0
      %vm90 = vcmp.eq.s32.totalorder %v82, 4294967292
      %vm91 = vcmp.eq.s32.totalorder %v83, 4294967292
      %v92 = vsel %vm90, 0.007598758, 0.0
      %v93 = vsel %vm91, 0.007598758, 0.0
      %v94 = vadd.f32 %v88, %v92
      %v95 = vadd.f32 %v89, %v93
      %vm96 = vcmp.eq.s32.totalorder %v82, 4294967293
      %vm97 = vcmp.eq.s32.totalorder %v83, 4294967293
      %v98 = vsel %vm96, 0.036000773, 0.0
      %v99 = vsel %vm97, 0.036000773, 0.0
      %v100 = vadd.f32 %v94, %v98
      %v101 = vadd.f32 %v95, %v99
      %vm102 = vcmp.eq.s32.totalorder %v82, 4294967294
      %vm103 = vcmp.eq.s32.totalorder %v83, 4294967294
      %v104 = vsel %vm102, 0.10936069, 0.0
      %v105 = vsel %vm103, 0.10936069, 0.0
      %v106 = vadd.f32 %v100, %v104
      %v107 = vadd.f32 %v101, %v105
      %vm108 = vcmp.eq.s32.totalorder %v82, 4294967295
      %vm109 = vcmp.eq.s32.totalorder %v83, 4294967295
      %v110 = vsel %vm108, 0.21300554, 0.0
      %v111 = vsel %vm109, 0.21300554, 0.0
      %v112 = vadd.f32 %v106, %v110
      %v113 = vadd.f32 %v107, %v111
      %vm114 = vcmp.eq.s32.totalorder %v82, 0
      %vm115 = vcmp.eq.s32.totalorder %v83, 0
      %v116 = vsel %vm114, 0.26601171, 0.0
      %v117 = vsel %vm115, 0.26601171, 0.0
      %v118 = vadd.f32 %v112, %v116
      %v119 = vadd.f32 %v113, %v117
      %vm120 = vcmp.eq.s32.totalorder %v82, 1
      %vm121 = vcmp.eq.s32.totalorder %v83, 1
      %v122 = vsel %vm120, 0.21300554, 0.0
      %v123 = vsel %vm121, 0.21300554, 0.0
      %v124 = vadd.f32 %v118, %v122
      %v125 = vadd.f32 %v119, %v123
      %vm126 = vcmp.eq.s32.totalorder %v82, 2
      %vm127 = vcmp.eq.s32.totalorder %v83, 2
      %v128 = vsel %vm126, 0.10936069, 0.0
      %v129 = vsel %vm127, 0.10936069, 0.0
      %v130 = vadd.f32 %v124, %v128
      %v131 = vadd.f32 %v125, %v129
      %vm132 = vcmp.eq.s32.totalorder %v82, 3
      %vm133 = vcmp.eq.s32.totalorder %v83, 3
      %v134 = vsel %vm132, 0.036000773, 0.0
      %v135 = vsel %vm133, 0.036000773, 0.0
      %v136 = vadd.f32 %v130, %v134
      %v137 = vadd.f32 %v131, %v135
      %vm138 = vcmp.eq.s32.totalorder %v82, 4
      %vm139 = vcmp.eq.s32.totalorder %v83, 4
      %v140 = vsel %vm138, 0.007598758, 0.0
      %v141 = vsel %vm139, 0.007598758, 0.0
      %v142 = vadd.f32 %v136, %v140
      %v143 = vadd.f32 %v137, %v141
      %vm144 = vcmp.eq.s32.totalorder %v82, 5
      %vm145 = vcmp.eq.s32.totalorder %v83, 5
      %v146 = vsel %vm144, 0.0010283801, 0.0
      %v147 = vsel %vm145, 0.0010283801, 0.0
      %v148 = vadd.f32 %v142, %v146
      %v149 = vadd.f32 %v143, %v147
      %150 = vst.msk [vmem:[#allocation3] sm:$0xff] %vm60, %v148
      %151 = vst.msk [vmem:[#allocation3 + $0x8] sm:$0xff] %vm60, %v149
    $region13: #{tpu_custom_call.1} parent=1 // pred_fallthru
      _
    %v152 = vld [vmem:[%s45] sm:$0xff]
    %v153 = vld [vmem:[%s45 + $0x8] sm:$0xff]
    %v154 = vld [vmem:[%s45 + $0x10] sm:$0xff]
    %v155 = vld [vmem:[%s45 + $0x18] sm:$0xff]
    %v156 = vld [vmem:[%s45 + $0x20] sm:$0xff]
    %v157 = vld [vmem:[%s45 + $0x28] sm:$0xff]
    %v158 = vld [vmem:[%s45 + $0x30] sm:$0xff]
    %v159 = vld [vmem:[%s45 + $0x38] sm:$0xff]
    %v160 = vld [vmem:[%s45 + $0x40] sm:$0xff]
    %v161 = vld [vmem:[%s45 + $0x48] sm:$0xff]
    %v162 = vld [vmem:[%s45 + $0x50] sm:$0xff]
    %v163 = vld [vmem:[%s45 + $0x58] sm:$0xff]
    %v164 = vld [vmem:[%s45 + $0x60] sm:$0xff]
    %v165 = vld [vmem:[%s45 + $0x68] sm:$0xff]
    %v166 = vld [vmem:[%s45 + $0x70] sm:$0xff]
    %v167 = vld [vmem:[%s45 + $0x78] sm:$0xff]
    %v168 = vld [vmem:[%s53] sm:$0xff]
    %v169 = vld [vmem:[%s53 + $0x8] sm:$0xff]
    %v170 = vld [vmem:[%s53 + $0x10] sm:$0xff]
    %v171 = vld [vmem:[%s53 + $0x18] sm:$0xff]
    %v172 = vld [vmem:[%s53 + $0x20] sm:$0xff]
    %v173 = vld [vmem:[%s53 + $0x28] sm:$0xff]
    %v174 = vld [vmem:[%s53 + $0x30] sm:$0xff]
    %v175 = vld [vmem:[%s53 + $0x38] sm:$0xff]
    %v176 = vld [vmem:[%s53 + $0x40] sm:$0xff]
    %v177 = vld [vmem:[%s53 + $0x48] sm:$0xff]
    %v178 = vld [vmem:[%s53 + $0x50] sm:$0xff]
    %v179 = vld [vmem:[%s53 + $0x58] sm:$0xff]
    %v180 = vld [vmem:[%s53 + $0x60] sm:$0xff]
    %v181 = vld [vmem:[%s53 + $0x68] sm:$0xff]
    %v182 = vld [vmem:[%s53 + $0x70] sm:$0xff]
    %v183 = vld [vmem:[%s53 + $0x78] sm:$0xff]
    %v184 = vsub.f32 %v152, %v168
    %v185 = vsub.f32 %v153, %v169
    %v186 = vsub.f32 %v154, %v170
    %v187 = vsub.f32 %v155, %v171
    %v188 = vsub.f32 %v156, %v172
    %v189 = vsub.f32 %v157, %v173
    %v190 = vsub.f32 %v158, %v174
    %v191 = vsub.f32 %v159, %v175
    %v192 = vsub.f32 %v160, %v176
    %v193 = vsub.f32 %v161, %v177
    %v194 = vsub.f32 %v162, %v178
    %v195 = vsub.f32 %v163, %v179
    %v196 = vsub.f32 %v164, %v180
    %v197 = vsub.f32 %v165, %v181
    %v198 = vsub.f32 %v166, %v182
    %v199 = vsub.f32 %v167, %v183
    %v200 = vmul.f32 %v184, %v184
    %v201 = vmul.f32 %v185, %v185
    %v202 = vmul.f32 %v186, %v186
    %v203 = vmul.f32 %v187, %v187
    %v204 = vmul.f32 %v188, %v188
    %v205 = vmul.f32 %v189, %v189
    %v206 = vmul.f32 %v190, %v190
    %v207 = vmul.f32 %v191, %v191
    %v208 = vmul.f32 %v192, %v192
    %v209 = vmul.f32 %v193, %v193
    %v210 = vmul.f32 %v194, %v194
    %v211 = vmul.f32 %v195, %v195
    %v212 = vmul.f32 %v196, %v196
    %v213 = vmul.f32 %v197, %v197
    %v214 = vmul.f32 %v198, %v198
    %v215 = vmul.f32 %v199, %v199
    %v216 = vadd.f32 %v200, 1e-06
    %v217 = vadd.f32 %v201, 1e-06
    %v218 = vadd.f32 %v202, 1e-06
    %v219 = vadd.f32 %v203, 1e-06
    %v220 = vadd.f32 %v204, 1e-06
    %v221 = vadd.f32 %v205, 1e-06
    %v222 = vadd.f32 %v206, 1e-06
    %v223 = vadd.f32 %v207, 1e-06
    %v224 = vadd.f32 %v208, 1e-06
    %v225 = vadd.f32 %v209, 1e-06
    %v226 = vadd.f32 %v210, 1e-06
    %v227 = vadd.f32 %v211, 1e-06
    %v228 = vadd.f32 %v212, 1e-06
    %v229 = vadd.f32 %v213, 1e-06
    %v230 = vadd.f32 %v214, 1e-06
    %v231 = vadd.f32 %v215, 1e-06
    %v232 = vrsqrt.pop %v216
    %v233 = vmul.f32 %v232, %v216
    %v234 = vmul.f32 %v233, %v232
    %v235 = vmul.f32 0.5, %v234
    %v236 = vsub.f32 1.5, %v235
    %v237 = vmul.f32 %v232, %v236
    %v238 = vmul.f32 %v216, %v237
    %vm239 = vcmp.eq.f32.partialorder %v216, inf
    %v240 = vsel %vm239, %v216, %v238
    %vm241 = vcmp.eq.f32.partialorder %v216, 0.0
    %v242 = vand.u32 %v216, 2147483648
    %v243 = vsel %vm241, %v242, %v240
    %v244 = vrsqrt.pop %v217
    %v245 = vmul.f32 %v244, %v217
    %v246 = vmul.f32 %v245, %v244
    %v247 = vmul.f32 0.5, %v246
    %v248 = vsub.f32 1.5, %v247
    %v249 = vmul.f32 %v244, %v248
    %v250 = vmul.f32 %v217, %v249
    %vm251 = vcmp.eq.f32.partialorder %v217, inf
    %v252 = vsel %vm251, %v217, %v250
    %vm253 = vcmp.eq.f32.partialorder %v217, 0.0
    %v254 = vand.u32 %v217, 2147483648
    %v255 = vsel %vm253, %v254, %v252
    %v256 = vrsqrt.pop %v218
    %v257 = vmul.f32 %v256, %v218
    %v258 = vmul.f32 %v257, %v256
    %v259 = vmul.f32 0.5, %v258
    %v260 = vsub.f32 1.5, %v259
    %v261 = vmul.f32 %v256, %v260
    %v262 = vmul.f32 %v218, %v261
    %vm263 = vcmp.eq.f32.partialorder %v218, inf
    %v264 = vsel %vm263, %v218, %v262
    %vm265 = vcmp.eq.f32.partialorder %v218, 0.0
    %v266 = vand.u32 %v218, 2147483648
    %v267 = vsel %vm265, %v266, %v264
    %v268 = vrsqrt.pop %v219
    %v269 = vmul.f32 %v268, %v219
    %v270 = vmul.f32 %v269, %v268
    %v271 = vmul.f32 0.5, %v270
    %v272 = vsub.f32 1.5, %v271
    %v273 = vmul.f32 %v268, %v272
    %v274 = vmul.f32 %v219, %v273
    %vm275 = vcmp.eq.f32.partialorder %v219, inf
    %v276 = vsel %vm275, %v219, %v274
    %vm277 = vcmp.eq.f32.partialorder %v219, 0.0
    %v278 = vand.u32 %v219, 2147483648
    %v279 = vsel %vm277, %v278, %v276
    %v280 = vrsqrt.pop %v220
    %v281 = vmul.f32 %v280, %v220
    %v282 = vmul.f32 %v281, %v280
    %v283 = vmul.f32 0.5, %v282
    %v284 = vsub.f32 1.5, %v283
    %v285 = vmul.f32 %v280, %v284
    %v286 = vmul.f32 %v220, %v285
    %vm287 = vcmp.eq.f32.partialorder %v220, inf
    %v288 = vsel %vm287, %v220, %v286
    %vm289 = vcmp.eq.f32.partialorder %v220, 0.0
    %v290 = vand.u32 %v220, 2147483648
    %v291 = vsel %vm289, %v290, %v288
    %v292 = vrsqrt.pop %v221
    %v293 = vmul.f32 %v292, %v221
    %v294 = vmul.f32 %v293, %v292
    %v295 = vmul.f32 0.5, %v294
    %v296 = vsub.f32 1.5, %v295
    %v297 = vmul.f32 %v292, %v296
    %v298 = vmul.f32 %v221, %v297
    %vm299 = vcmp.eq.f32.partialorder %v221, inf
    %v300 = vsel %vm299, %v221, %v298
    %vm301 = vcmp.eq.f32.partialorder %v221, 0.0
    %v302 = vand.u32 %v221, 2147483648
    %v303 = vsel %vm301, %v302, %v300
    %v304 = vrsqrt.pop %v222
    %v305 = vmul.f32 %v304, %v222
    %v306 = vmul.f32 %v305, %v304
    %v307 = vmul.f32 0.5, %v306
    %v308 = vsub.f32 1.5, %v307
    %v309 = vmul.f32 %v304, %v308
    %v310 = vmul.f32 %v222, %v309
    %vm311 = vcmp.eq.f32.partialorder %v222, inf
    %v312 = vsel %vm311, %v222, %v310
    %vm313 = vcmp.eq.f32.partialorder %v222, 0.0
    %v314 = vand.u32 %v222, 2147483648
    %v315 = vsel %vm313, %v314, %v312
    %v316 = vrsqrt.pop %v223
    %v317 = vmul.f32 %v316, %v223
    %v318 = vmul.f32 %v317, %v316
    %v319 = vmul.f32 0.5, %v318
    %v320 = vsub.f32 1.5, %v319
    %v321 = vmul.f32 %v316, %v320
    %v322 = vmul.f32 %v223, %v321
    %vm323 = vcmp.eq.f32.partialorder %v223, inf
    %v324 = vsel %vm323, %v223, %v322
    %vm325 = vcmp.eq.f32.partialorder %v223, 0.0
    %v326 = vand.u32 %v223, 2147483648
    %v327 = vsel %vm325, %v326, %v324
    %v328 = vrsqrt.pop %v224
    %v329 = vmul.f32 %v328, %v224
    %v330 = vmul.f32 %v329, %v328
    %v331 = vmul.f32 0.5, %v330
    %v332 = vsub.f32 1.5, %v331
    %v333 = vmul.f32 %v328, %v332
    %v334 = vmul.f32 %v224, %v333
    %vm335 = vcmp.eq.f32.partialorder %v224, inf
    %v336 = vsel %vm335, %v224, %v334
    %vm337 = vcmp.eq.f32.partialorder %v224, 0.0
    %v338 = vand.u32 %v224, 2147483648
    %v339 = vsel %vm337, %v338, %v336
    %v340 = vrsqrt.pop %v225
    %v341 = vmul.f32 %v340, %v225
    %v342 = vmul.f32 %v341, %v340
    %v343 = vmul.f32 0.5, %v342
    %v344 = vsub.f32 1.5, %v343
    %v345 = vmul.f32 %v340, %v344
    %v346 = vmul.f32 %v225, %v345
    %vm347 = vcmp.eq.f32.partialorder %v225, inf
    %v348 = vsel %vm347, %v225, %v346
    %vm349 = vcmp.eq.f32.partialorder %v225, 0.0
    %v350 = vand.u32 %v225, 2147483648
    %v351 = vsel %vm349, %v350, %v348
    %v352 = vrsqrt.pop %v226
    %v353 = vmul.f32 %v352, %v226
    %v354 = vmul.f32 %v353, %v352
    %v355 = vmul.f32 0.5, %v354
    %v356 = vsub.f32 1.5, %v355
    %v357 = vmul.f32 %v352, %v356
    %v358 = vmul.f32 %v226, %v357
    %vm359 = vcmp.eq.f32.partialorder %v226, inf
    %v360 = vsel %vm359, %v226, %v358
    %vm361 = vcmp.eq.f32.partialorder %v226, 0.0
    %v362 = vand.u32 %v226, 2147483648
    %v363 = vsel %vm361, %v362, %v360
    %v364 = vrsqrt.pop %v227
    %v365 = vmul.f32 %v364, %v227
    %v366 = vmul.f32 %v365, %v364
    %v367 = vmul.f32 0.5, %v366
    %v368 = vsub.f32 1.5, %v367
    %v369 = vmul.f32 %v364, %v368
    %v370 = vmul.f32 %v227, %v369
    %vm371 = vcmp.eq.f32.partialorder %v227, inf
    %v372 = vsel %vm371, %v227, %v370
    %vm373 = vcmp.eq.f32.partialorder %v227, 0.0
    %v374 = vand.u32 %v227, 2147483648
    %v375 = vsel %vm373, %v374, %v372
    %v376 = vrsqrt.pop %v228
    %v377 = vmul.f32 %v376, %v228
    %v378 = vmul.f32 %v377, %v376
    %v379 = vmul.f32 0.5, %v378
    %v380 = vsub.f32 1.5, %v379
    %v381 = vmul.f32 %v376, %v380
    %v382 = vmul.f32 %v228, %v381
    %vm383 = vcmp.eq.f32.partialorder %v228, inf
    %v384 = vsel %vm383, %v228, %v382
    %vm385 = vcmp.eq.f32.partialorder %v228, 0.0
    %v386 = vand.u32 %v228, 2147483648
    %v387 = vsel %vm385, %v386, %v384
    %v388 = vrsqrt.pop %v229
    %v389 = vmul.f32 %v388, %v229
    %v390 = vmul.f32 %v389, %v388
    %v391 = vmul.f32 0.5, %v390
    %v392 = vsub.f32 1.5, %v391
    %v393 = vmul.f32 %v388, %v392
    %v394 = vmul.f32 %v229, %v393
    %vm395 = vcmp.eq.f32.partialorder %v229, inf
    %v396 = vsel %vm395, %v229, %v394
    %vm397 = vcmp.eq.f32.partialorder %v229, 0.0
    %v398 = vand.u32 %v229, 2147483648
    %v399 = vsel %vm397, %v398, %v396
    %v400 = vrsqrt.pop %v230
    %v401 = vmul.f32 %v400, %v230
    %v402 = vmul.f32 %v401, %v400
    %v403 = vmul.f32 0.5, %v402
    %v404 = vsub.f32 1.5, %v403
    %v405 = vmul.f32 %v400, %v404
    %v406 = vmul.f32 %v230, %v405
    %vm407 = vcmp.eq.f32.partialorder %v230, inf
    %v408 = vsel %vm407, %v230, %v406
    %vm409 = vcmp.eq.f32.partialorder %v230, 0.0
    %v410 = vand.u32 %v230, 2147483648
    %v411 = vsel %vm409, %v410, %v408
    %v412 = vrsqrt.pop %v231
    %v413 = vmul.f32 %v412, %v231
    %v414 = vmul.f32 %v413, %v412
    %v415 = vmul.f32 0.5, %v414
    %v416 = vsub.f32 1.5, %v415
    %v417 = vmul.f32 %v412, %v416
    %v418 = vmul.f32 %v231, %v417
    %vm419 = vcmp.eq.f32.partialorder %v231, inf
    %v420 = vsel %vm419, %v231, %v418
    %vm421 = vcmp.eq.f32.partialorder %v231, 0.0
    %v422 = vand.u32 %v231, 2147483648
    %v423 = vsel %vm421, %v422, %v420
    %v424 = vmul.f32 %v152, %v152
    %v425 = vmul.f32 %v153, %v153
    %v426 = vmul.f32 %v154, %v154
    %v427 = vmul.f32 %v155, %v155
    %v428 = vmul.f32 %v156, %v156
    %v429 = vmul.f32 %v157, %v157
    %v430 = vmul.f32 %v158, %v158
    %v431 = vmul.f32 %v159, %v159
    %v432 = vmul.f32 %v160, %v160
    %v433 = vmul.f32 %v161, %v161
    %v434 = vmul.f32 %v162, %v162
    %v435 = vmul.f32 %v163, %v163
    %v436 = vmul.f32 %v164, %v164
    %v437 = vmul.f32 %v165, %v165
    %v438 = vmul.f32 %v166, %v166
    %v439 = vmul.f32 %v167, %v167
    %v440 = vmul.f32 %v168, %v168
    %v441 = vmul.f32 %v169, %v169
    %v442 = vmul.f32 %v170, %v170
    %v443 = vmul.f32 %v171, %v171
    %v444 = vmul.f32 %v172, %v172
    %v445 = vmul.f32 %v173, %v173
    %v446 = vmul.f32 %v174, %v174
    %v447 = vmul.f32 %v175, %v175
    %v448 = vmul.f32 %v176, %v176
    %v449 = vmul.f32 %v177, %v177
    %v450 = vmul.f32 %v178, %v178
    %v451 = vmul.f32 %v179, %v179
    %v452 = vmul.f32 %v180, %v180
    %v453 = vmul.f32 %v181, %v181
    %v454 = vmul.f32 %v182, %v182
    %v455 = vmul.f32 %v183, %v183
    %v456 = vmul.f32 %v152, %v168
    %v457 = vmul.f32 %v153, %v169
    %v458 = vmul.f32 %v154, %v170
    %v459 = vmul.f32 %v155, %v171
    %v460 = vmul.f32 %v156, %v172
    %v461 = vmul.f32 %v157, %v173
    %v462 = vmul.f32 %v158, %v174
    %v463 = vmul.f32 %v159, %v175
    %v464 = vmul.f32 %v160, %v176
    %v465 = vmul.f32 %v161, %v177
    %v466 = vmul.f32 %v162, %v178
    %v467 = vmul.f32 %v163, %v179
    %v468 = vmul.f32 %v164, %v180
    %v469 = vmul.f32 %v165, %v181
    %v470 = vmul.f32 %v166, %v182
    %v471 = vmul.f32 %v167, %v183
    %v472 = vld [vmem:[#allocation3] sm:$0xff]
    %v473 = vld [vmem:[#allocation3 + $0x8] sm:$0xff]
    %vm474 = vcmask 130048
    %v476 = vsel %vm474, %v152, 0
    %v479 = vsel %vm474, %v153, 0
    %v482 = vsel %vm474, %v154, 0
    %v485 = vsel %vm474, %v155, 0
    %v488 = vsel %vm474, %v156, 0
    %v491 = vsel %vm474, %v157, 0
    %v494 = vsel %vm474, %v158, 0
    %v497 = vsel %vm474, %v159, 0
    %v500 = vsel %vm474, %v160, 0
    %v503 = vsel %vm474, %v161, 0
    %v506 = vsel %vm474, %v162, 0
    %v509 = vsel %vm474, %v163, 0
    %v512 = vsel %vm474, %v164, 0
    %v515 = vsel %vm474, %v165, 0
    %v518 = vsel %vm474, %v166, 0
    %v521 = vsel %vm474, %v167, 0
    %v524 = vsel %vm474, %v168, 0
    %v527 = vsel %vm474, %v169, 0
    %v530 = vsel %vm474, %v170, 0
    %v533 = vsel %vm474, %v171, 0
    %v536 = vsel %vm474, %v172, 0
    %v539 = vsel %vm474, %v173, 0
    %v542 = vsel %vm474, %v174, 0
    %v545 = vsel %vm474, %v175, 0
    %v548 = vsel %vm474, %v176, 0
    %v551 = vsel %vm474, %v177, 0
    %v554 = vsel %vm474, %v178, 0
    %v557 = vsel %vm474, %v179, 0
    %v560 = vsel %vm474, %v180, 0
    %v563 = vsel %vm474, %v181, 0
    %v566 = vsel %vm474, %v182, 0
    %v569 = vsel %vm474, %v183, 0
    %v572 = vsel %vm474, %v424, 0
    %v575 = vsel %vm474, %v425, 0
    %v578 = vsel %vm474, %v426, 0
    %v581 = vsel %vm474, %v427, 0
    %v584 = vsel %vm474, %v428, 0
    %v587 = vsel %vm474, %v429, 0
    %v590 = vsel %vm474, %v430, 0
    %v593 = vsel %vm474, %v431, 0
    %v596 = vsel %vm474, %v432, 0
    %v599 = vsel %vm474, %v433, 0
    %v602 = vsel %vm474, %v434, 0
    %v605 = vsel %vm474, %v435, 0
    %v608 = vsel %vm474, %v436, 0
    %v611 = vsel %vm474, %v437, 0
    %v614 = vsel %vm474, %v438, 0
    %v617 = vsel %vm474, %v439, 0
    %v620 = vsel %vm474, %v440, 0
    %v623 = vsel %vm474, %v441, 0
    %v626 = vsel %vm474, %v442, 0
    %v629 = vsel %vm474, %v443, 0
    %v632 = vsel %vm474, %v444, 0
    %v635 = vsel %vm474, %v445, 0
    %v638 = vsel %vm474, %v446, 0
    %v641 = vsel %vm474, %v447, 0
    %v644 = vsel %vm474, %v448, 0
    %v647 = vsel %vm474, %v449, 0
    %v650 = vsel %vm474, %v450, 0
    %v653 = vsel %vm474, %v451, 0
    %v656 = vsel %vm474, %v452, 0
    %v659 = vsel %vm474, %v453, 0
    %v662 = vsel %vm474, %v454, 0
    %v665 = vsel %vm474, %v455, 0
    %v668 = vsel %vm474, %v456, 0
    %v671 = vsel %vm474, %v457, 0
    %v674 = vsel %vm474, %v458, 0
    %v677 = vsel %vm474, %v459, 0
    %v680 = vsel %vm474, %v460, 0
    %v683 = vsel %vm474, %v461, 0
    %v686 = vsel %vm474, %v462, 0
    %v689 = vsel %vm474, %v463, 0
    %v692 = vsel %vm474, %v464, 0
    %v695 = vsel %vm474, %v465, 0
    %v698 = vsel %vm474, %v466, 0
    %v701 = vsel %vm474, %v467, 0
    %v704 = vsel %vm474, %v468, 0
    %v707 = vsel %vm474, %v469, 0
    %v710 = vsel %vm474, %v470, 0
    %v713 = vsel %vm474, %v471, 0
    %715 = vmatpush.msra.mxu0 0.0
    %716 = vmatpush.msra.mxu0 0.0
    %717 = vmatpush.msra.mxu0 0.0
    %718 = vmatpush.msra.mxu0 0.0
    %719 = vmatpush.msra.mxu0 0.0
    %720 = vmatpush.msra.mxu0 0.0
    %721 = vmatpush.msra.mxu0 0.0
    %722 = vmatpush.msra.mxu0 0.0
    %723 = vmatpush.msra.mxu0 0.0
    %724 = vmatpush.msra.mxu0 0.0
    %725 = vmatpush.msra.mxu0 0.0
    %726 = vmatpush.msra.mxu0 0.0
    %727 = vmatpush.msra.mxu0 0.0
    %728 = vmatpush.msra.mxu0 0.0
    %729 = vmatpush.msra.mxu0 %v473
    %730 = vmatpush.msra.mxu0 %v472
    %731 = vmatmul.f32.gmra.mxu0 %v476
    %v732 = vpop.f32.mrf.mxu0
    %v733 = vadd.f32 0.0, %v732
    %734 = vmatmul.f32.gmra.mxu0 %v479
    %v735 = vpop.f32.mrf.mxu0
    %v736 = vadd.f32 0.0, %v735
    %737 = vmatmul.f32.gmra.mxu0 %v482
    %v738 = vpop.f32.mrf.mxu0
    %v739 = vadd.f32 0.0, %v738
    %740 = vmatmul.f32.gmra.mxu0 %v485
    %v741 = vpop.f32.mrf.mxu0
    %v742 = vadd.f32 0.0, %v741
    %743 = vmatmul.f32.gmra.mxu0 %v488
    %v744 = vpop.f32.mrf.mxu0
    %v745 = vadd.f32 0.0, %v744
    %746 = vmatmul.f32.gmra.mxu0 %v491
    %v747 = vpop.f32.mrf.mxu0
    %v748 = vadd.f32 0.0, %v747
    %749 = vmatmul.f32.gmra.mxu0 %v494
    %v750 = vpop.f32.mrf.mxu0
    %v751 = vadd.f32 0.0, %v750
    %752 = vmatmul.f32.gmra.mxu0 %v497
    %v753 = vpop.f32.mrf.mxu0
    %v754 = vadd.f32 0.0, %v753
    %755 = vmatmul.f32.gmra.mxu0 %v500
    %v756 = vpop.f32.mrf.mxu0
    %v757 = vadd.f32 0.0, %v756
    %758 = vmatmul.f32.gmra.mxu0 %v503
    %v759 = vpop.f32.mrf.mxu0
    %v760 = vadd.f32 0.0, %v759
    %761 = vmatmul.f32.gmra.mxu0 %v506
    %v762 = vpop.f32.mrf.mxu0
    %v763 = vadd.f32 0.0, %v762
    %764 = vmatmul.f32.gmra.mxu0 %v509
    %v765 = vpop.f32.mrf.mxu0
    %v766 = vadd.f32 0.0, %v765
    %767 = vmatmul.f32.gmra.mxu0 %v512
    %v768 = vpop.f32.mrf.mxu0
    %v769 = vadd.f32 0.0, %v768
    %770 = vmatmul.f32.gmra.mxu0 %v515
    %v771 = vpop.f32.mrf.mxu0
    %v772 = vadd.f32 0.0, %v771
    %773 = vmatmul.f32.gmra.mxu0 %v518
    %v774 = vpop.f32.mrf.mxu0
    %v775 = vadd.f32 0.0, %v774
    %776 = vmatmul.f32.gmra.mxu0 %v521
    %v777 = vpop.f32.mrf.mxu0
    %v778 = vadd.f32 0.0, %v777
    %779 = vmatmul.f32.gmra.mxu0 %v524
    %v780 = vpop.f32.mrf.mxu0
    %v781 = vadd.f32 0.0, %v780
    %782 = vmatmul.f32.gmra.mxu0 %v527
    %v783 = vpop.f32.mrf.mxu0
    %v784 = vadd.f32 0.0, %v783
    %785 = vmatmul.f32.gmra.mxu0 %v530
    %v786 = vpop.f32.mrf.mxu0
    %v787 = vadd.f32 0.0, %v786
    %788 = vmatmul.f32.gmra.mxu0 %v533
    %v789 = vpop.f32.mrf.mxu0
    %v790 = vadd.f32 0.0, %v789
    %791 = vmatmul.f32.gmra.mxu0 %v536
    %v792 = vpop.f32.mrf.mxu0
    %v793 = vadd.f32 0.0, %v792
    %794 = vmatmul.f32.gmra.mxu0 %v539
    %v795 = vpop.f32.mrf.mxu0
    %v796 = vadd.f32 0.0, %v795
    %797 = vmatmul.f32.gmra.mxu0 %v542
    %v798 = vpop.f32.mrf.mxu0
    %v799 = vadd.f32 0.0, %v798
    %800 = vmatmul.f32.gmra.mxu0 %v545
    %v801 = vpop.f32.mrf.mxu0
    %v802 = vadd.f32 0.0, %v801
    %803 = vmatmul.f32.gmra.mxu0 %v548
    %v804 = vpop.f32.mrf.mxu0
    %v805 = vadd.f32 0.0, %v804
    %806 = vmatmul.f32.gmra.mxu0 %v551
    %v807 = vpop.f32.mrf.mxu0
    %v808 = vadd.f32 0.0, %v807
    %809 = vmatmul.f32.gmra.mxu0 %v554
    %v810 = vpop.f32.mrf.mxu0
    %v811 = vadd.f32 0.0, %v810
    %812 = vmatmul.f32.gmra.mxu0 %v557
    %v813 = vpop.f32.mrf.mxu0
    %v814 = vadd.f32 0.0, %v813
    %815 = vmatmul.f32.gmra.mxu0 %v560
    %v816 = vpop.f32.mrf.mxu0
    %v817 = vadd.f32 0.0, %v816
    %818 = vmatmul.f32.gmra.mxu0 %v563
    %v819 = vpop.f32.mrf.mxu0
    %v820 = vadd.f32 0.0, %v819
    %821 = vmatmul.f32.gmra.mxu0 %v566
    %v822 = vpop.f32.mrf.mxu0
    %v823 = vadd.f32 0.0, %v822
    %824 = vmatmul.f32.gmra.mxu0 %v569
    %v825 = vpop.f32.mrf.mxu0
    %v826 = vadd.f32 0.0, %v825
    %827 = vmatmul.f32.gmra.mxu0 %v572
    %v828 = vpop.f32.mrf.mxu0
    %v829 = vadd.f32 0.0, %v828
    %830 = vmatmul.f32.gmra.mxu0 %v575
    %v831 = vpop.f32.mrf.mxu0
    %v832 = vadd.f32 0.0, %v831
    %833 = vmatmul.f32.gmra.mxu0 %v578
    %v834 = vpop.f32.mrf.mxu0
    %v835 = vadd.f32 0.0, %v834
    %836 = vmatmul.f32.gmra.mxu0 %v581
    %v837 = vpop.f32.mrf.mxu0
    %v838 = vadd.f32 0.0, %v837
    %839 = vmatmul.f32.gmra.mxu0 %v584
    %v840 = vpop.f32.mrf.mxu0
    %v841 = vadd.f32 0.0, %v840
    %842 = vmatmul.f32.gmra.mxu0 %v587
    %v843 = vpop.f32.mrf.mxu0
    %v844 = vadd.f32 0.0, %v843
    %845 = vmatmul.f32.gmra.mxu0 %v590
    %v846 = vpop.f32.mrf.mxu0
    %v847 = vadd.f32 0.0, %v846
    %848 = vmatmul.f32.gmra.mxu0 %v593
    %v849 = vpop.f32.mrf.mxu0
    %v850 = vadd.f32 0.0, %v849
    %851 = vmatmul.f32.gmra.mxu0 %v596
    %v852 = vpop.f32.mrf.mxu0
    %v853 = vadd.f32 0.0, %v852
    %854 = vmatmul.f32.gmra.mxu0 %v599
    %v855 = vpop.f32.mrf.mxu0
    %v856 = vadd.f32 0.0, %v855
    %857 = vmatmul.f32.gmra.mxu0 %v602
    %v858 = vpop.f32.mrf.mxu0
    %v859 = vadd.f32 0.0, %v858
    %860 = vmatmul.f32.gmra.mxu0 %v605
    %v861 = vpop.f32.mrf.mxu0
    %v862 = vadd.f32 0.0, %v861
    %863 = vmatmul.f32.gmra.mxu0 %v608
    %v864 = vpop.f32.mrf.mxu0
    %v865 = vadd.f32 0.0, %v864
    %866 = vmatmul.f32.gmra.mxu0 %v611
    %v867 = vpop.f32.mrf.mxu0
    %v868 = vadd.f32 0.0, %v867
    %869 = vmatmul.f32.gmra.mxu0 %v614
    %v870 = vpop.f32.mrf.mxu0
    %v871 = vadd.f32 0.0, %v870
    %872 = vmatmul.f32.gmra.mxu0 %v617
    %v873 = vpop.f32.mrf.mxu0
    %v874 = vadd.f32 0.0, %v873
    %875 = vmatmul.f32.gmra.mxu0 %v620
    %v876 = vpop.f32.mrf.mxu0
    %v877 = vadd.f32 0.0, %v876
    %878 = vmatmul.f32.gmra.mxu0 %v623
    %v879 = vpop.f32.mrf.mxu0
    %v880 = vadd.f32 0.0, %v879
    %881 = vmatmul.f32.gmra.mxu0 %v626
    %v882 = vpop.f32.mrf.mxu0
    %v883 = vadd.f32 0.0, %v882
    %884 = vmatmul.f32.gmra.mxu0 %v629
    %v885 = vpop.f32.mrf.mxu0
    %v886 = vadd.f32 0.0, %v885
    %887 = vmatmul.f32.gmra.mxu0 %v632
    %v888 = vpop.f32.mrf.mxu0
    %v889 = vadd.f32 0.0, %v888
    %890 = vmatmul.f32.gmra.mxu0 %v635
    %v891 = vpop.f32.mrf.mxu0
    %v892 = vadd.f32 0.0, %v891
    %893 = vmatmul.f32.gmra.mxu0 %v638
    %v894 = vpop.f32.mrf.mxu0
    %v895 = vadd.f32 0.0, %v894
    %896 = vmatmul.f32.gmra.mxu0 %v641
    %v897 = vpop.f32.mrf.mxu0
    %v898 = vadd.f32 0.0, %v897
    %899 = vmatmul.f32.gmra.mxu0 %v644
    %v900 = vpop.f32.mrf.mxu0
    %v901 = vadd.f32 0.0, %v900
    %902 = vmatmul.f32.gmra.mxu0 %v647
    %v903 = vpop.f32.mrf.mxu0
    %v904 = vadd.f32 0.0, %v903
    %905 = vmatmul.f32.gmra.mxu0 %v650
    %v906 = vpop.f32.mrf.mxu0
    %v907 = vadd.f32 0.0, %v906
    %908 = vmatmul.f32.gmra.mxu0 %v653
    %v909 = vpop.f32.mrf.mxu0
    %v910 = vadd.f32 0.0, %v909
    %911 = vmatmul.f32.gmra.mxu0 %v656
    %v912 = vpop.f32.mrf.mxu0
    %v913 = vadd.f32 0.0, %v912
    %914 = vmatmul.f32.gmra.mxu0 %v659
    %v915 = vpop.f32.mrf.mxu0
    %v916 = vadd.f32 0.0, %v915
    %917 = vmatmul.f32.gmra.mxu0 %v662
    %v918 = vpop.f32.mrf.mxu0
    %v919 = vadd.f32 0.0, %v918
    %920 = vmatmul.f32.gmra.mxu0 %v665
    %v921 = vpop.f32.mrf.mxu0
    %v922 = vadd.f32 0.0, %v921
    %923 = vmatmul.f32.gmra.mxu0 %v668
    %v924 = vpop.f32.mrf.mxu0
    %v925 = vadd.f32 0.0, %v924
    %926 = vmatmul.f32.gmra.mxu0 %v671
    %v927 = vpop.f32.mrf.mxu0
    %v928 = vadd.f32 0.0, %v927
    %929 = vmatmul.f32.gmra.mxu0 %v674
    %v930 = vpop.f32.mrf.mxu0
    %v931 = vadd.f32 0.0, %v930
    %932 = vmatmul.f32.gmra.mxu0 %v677
    %v933 = vpop.f32.mrf.mxu0
    %v934 = vadd.f32 0.0, %v933
    %935 = vmatmul.f32.gmra.mxu0 %v680
    %v936 = vpop.f32.mrf.mxu0
    %v937 = vadd.f32 0.0, %v936
    %938 = vmatmul.f32.gmra.mxu0 %v683
    %v939 = vpop.f32.mrf.mxu0
    %v940 = vadd.f32 0.0, %v939
    %941 = vmatmul.f32.gmra.mxu0 %v686
    %v942 = vpop.f32.mrf.mxu0
    %v943 = vadd.f32 0.0, %v942
    %944 = vmatmul.f32.gmra.mxu0 %v689
    %v945 = vpop.f32.mrf.mxu0
    %v946 = vadd.f32 0.0, %v945
    %947 = vmatmul.f32.gmra.mxu0 %v692
    %v948 = vpop.f32.mrf.mxu0
    %v949 = vadd.f32 0.0, %v948
    %950 = vmatmul.f32.gmra.mxu0 %v695
    %v951 = vpop.f32.mrf.mxu0
    %v952 = vadd.f32 0.0, %v951
    %953 = vmatmul.f32.gmra.mxu0 %v698
    %v954 = vpop.f32.mrf.mxu0
    %v955 = vadd.f32 0.0, %v954
    %956 = vmatmul.f32.gmra.mxu0 %v701
    %v957 = vpop.f32.mrf.mxu0
    %v958 = vadd.f32 0.0, %v957
    %959 = vmatmul.f32.gmra.mxu0 %v704
    %v960 = vpop.f32.mrf.mxu0
    %v961 = vadd.f32 0.0, %v960
    %962 = vmatmul.f32.gmra.mxu0 %v707
    %v963 = vpop.f32.mrf.mxu0
    %v964 = vadd.f32 0.0, %v963
    %965 = vmatmul.f32.gmra.mxu0 %v710
    %v966 = vpop.f32.mrf.mxu0
    %v967 = vadd.f32 0.0, %v966
    %968 = vmatmul.f32.gmra.mxu0 %v713
    %v969 = vpop.f32.mrf.mxu0
    %v970 = vadd.f32 0.0, %v969
    %971 = vdwg.mxu0
    %v972 = vlaneseq
    %v973 = vshrl.u32 %v972, 7
    %v974 = vadd.s32 %v973, 8
    %v975 = vadd.s32 %v973, 16
    %v976 = vadd.s32 %v973, 24
    %v977 = vadd.s32 %v973, 32
    %v978 = vadd.s32 %v973, 40
    %v979 = vadd.s32 %v973, 48
    %v980 = vadd.s32 %v973, 56
    %v981 = vadd.s32 %v973, 64
    %v982 = vadd.s32 %v973, 72
    %v983 = vadd.s32 %v973, 80
    %v984 = vadd.s32 %v973, 88
    %v985 = vadd.s32 %v973, 96
    %v986 = vadd.s32 %v973, 104
    %v987 = vadd.s32 %v973, 112
    %v988 = vadd.s32 %v973, 120
    %v989 = vadd.s32 %v973, 128
    %v990 = vadd.s32 %v973, 136
    %v991 = vadd.s32 %v973, 144
    %v992 = vadd.s32 %v973, 152
    %v993 = vadd.s32 %v973, 160
    %v994 = vadd.s32 %v973, 168
    %v995 = vadd.s32 %v973, 176
    %v996 = vadd.s32 %v973, 184
    %v997 = vadd.s32 %v973, 192
    %v998 = vadd.s32 %v973, 200
    %v999 = vadd.s32 %v973, 208
    %v1000 = vadd.s32 %v973, 216
    %v1001 = vadd.s32 %v973, 224
    %v1002 = vadd.s32 %v973, 232
    %v1003 = vadd.s32 %v973, 240
    %v1004 = vadd.s32 %v973, 248
    %v1005 = vadd.s32 %v973, 256
    %v1006 = vadd.s32 %v973, 264
    %v1007 = vadd.s32 %v973, 272
    %v1008 = vadd.s32 %v973, 280
    %v1009 = vadd.s32 %v973, 288
    %v1010 = vadd.s32 %v973, 296
    %v1011 = vadd.s32 %v973, 304
    %v1012 = vadd.s32 %v973, 312
    %v1013 = vadd.s32 %v973, 320
    %v1014 = vadd.s32 %v973, 328
    %v1015 = vadd.s32 %v973, 336
    %v1016 = vadd.s32 %v973, 344
    %v1017 = vadd.s32 %v973, 352
    %v1018 = vadd.s32 %v973, 360
    %v1019 = vadd.s32 %v973, 368
    %v1020 = vadd.s32 %v973, 376
    %v1021 = vadd.s32 %v973, 384
    %v1022 = vadd.s32 %v973, 392
    %v1023 = vadd.s32 %v973, 400
    %v1024 = vadd.s32 %v973, 408
    %v1025 = vadd.s32 %v973, 416
    %v1026 = vadd.s32 %v973, 424
    %v1027 = vadd.s32 %v973, 432
    %v1028 = vadd.s32 %v973, 440
    %v1029 = vadd.s32 %v973, 448
    %v1030 = vadd.s32 %v973, 456
    %v1031 = vadd.s32 %v973, 464
    %v1032 = vadd.s32 %v973, 472
    %v1033 = vadd.s32 %v973, 480
    %v1034 = vadd.s32 %v973, 488
    %v1035 = vadd.s32 %v973, 496
    %v1036 = vadd.s32 %v973, 504
    %v1037 = vadd.s32 %v973, 512
    %v1038 = vadd.s32 %v973, 520
    %v1039 = vadd.s32 %v973, 528
    %v1040 = vadd.s32 %v973, 536
    %v1041 = vadd.s32 %v973, 544
    %v1042 = vadd.s32 %v973, 552
    %v1043 = vadd.s32 %v973, 560
    %v1044 = vadd.s32 %v973, 568
    %v1045 = vadd.s32 %v973, 576
    %v1046 = vadd.s32 %v973, 584
    %v1047 = vadd.s32 %v973, 592
    %v1048 = vadd.s32 %v973, 600
    %v1049 = vadd.s32 %v973, 608
    %v1050 = vadd.s32 %v973, 616
    %v1051 = vadd.s32 %v973, 624
    %v1052 = vadd.s32 %v973, 632
    %v1053 = vand.u32 %v973, 15
    %v1054 = vand.u32 %v974, 15
    %v1055 = vand.u32 %v975, 15
    %v1056 = vand.u32 %v976, 15
    %v1057 = vand.u32 %v977, 15
    %v1058 = vand.u32 %v978, 15
    %v1059 = vand.u32 %v979, 15
    %v1060 = vand.u32 %v980, 15
    %v1061 = vand.u32 %v981, 15
    %v1062 = vand.u32 %v982, 15
    %v1063 = vand.u32 %v983, 15
    %v1064 = vand.u32 %v984, 15
    %v1065 = vand.u32 %v985, 15
    %v1066 = vand.u32 %v986, 15
    %v1067 = vand.u32 %v987, 15
    %v1068 = vand.u32 %v988, 15
    %v1069 = vand.u32 %v989, 15
    %v1070 = vand.u32 %v990, 15
    %v1071 = vand.u32 %v991, 15
    %v1072 = vand.u32 %v992, 15
    %v1073 = vand.u32 %v993, 15
    %v1074 = vand.u32 %v994, 15
    %v1075 = vand.u32 %v995, 15
    %v1076 = vand.u32 %v996, 15
    %v1077 = vand.u32 %v997, 15
    %v1078 = vand.u32 %v998, 15
    %v1079 = vand.u32 %v999, 15
    %v1080 = vand.u32 %v1000, 15
    %v1081 = vand.u32 %v1001, 15
    %v1082 = vand.u32 %v1002, 15
    %v1083 = vand.u32 %v1003, 15
    %v1084 = vand.u32 %v1004, 15
    %v1085 = vand.u32 %v1005, 15
    %v1086 = vand.u32 %v1006, 15
    %v1087 = vand.u32 %v1007, 15
    %v1088 = vand.u32 %v1008, 15
    %v1089 = vand.u32 %v1009, 15
    %v1090 = vand.u32 %v1010, 15
    %v1091 = vand.u32 %v1011, 15
    %v1092 = vand.u32 %v1012, 15
    %v1093 = vand.u32 %v1013, 15
    %v1094 = vand.u32 %v1014, 15
    %v1095 = vand.u32 %v1015, 15
    %v1096 = vand.u32 %v1016, 15
    %v1097 = vand.u32 %v1017, 15
    %v1098 = vand.u32 %v1018, 15
    %v1099 = vand.u32 %v1019, 15
    %v1100 = vand.u32 %v1020, 15
    %v1101 = vand.u32 %v1021, 15
    %v1102 = vand.u32 %v1022, 15
    %v1103 = vand.u32 %v1023, 15
    %v1104 = vand.u32 %v1024, 15
    %v1105 = vand.u32 %v1025, 15
    %v1106 = vand.u32 %v1026, 15
    %v1107 = vand.u32 %v1027, 15
    %v1108 = vand.u32 %v1028, 15
    %v1109 = vand.u32 %v1029, 15
    %v1110 = vand.u32 %v1030, 15
    %v1111 = vand.u32 %v1031, 15
    %v1112 = vand.u32 %v1032, 15
    %v1113 = vand.u32 %v1033, 15
    %v1114 = vand.u32 %v1034, 15
    %v1115 = vand.u32 %v1035, 15
    %v1116 = vand.u32 %v1036, 15
    %v1117 = vand.u32 %v1037, 15
    %v1118 = vand.u32 %v1038, 15
    %v1119 = vand.u32 %v1039, 15
    %v1120 = vand.u32 %v1040, 15
    %v1121 = vand.u32 %v1041, 15
    %v1122 = vand.u32 %v1042, 15
    %v1123 = vand.u32 %v1043, 15
    %v1124 = vand.u32 %v1044, 15
    %v1125 = vand.u32 %v1045, 15
    %v1126 = vand.u32 %v1046, 15
    %v1127 = vand.u32 %v1047, 15
    %v1128 = vand.u32 %v1048, 15
    %v1129 = vand.u32 %v1049, 15
    %v1130 = vand.u32 %v1050, 15
    %v1131 = vand.u32 %v1051, 15
    %v1132 = vand.u32 %v1052, 15
    %v1133 = vrot.slane %v733, 3
    %v1134 = vrot.slane %v736, 3
    %v1135 = vrot.slane %v739, 3
    %v1136 = vrot.slane %v742, 3
    %v1137 = vrot.slane %v745, 3
    %v1138 = vrot.slane %v748, 3
    %v1139 = vrot.slane %v751, 3
    %v1140 = vrot.slane %v754, 3
    %v1141 = vrot.slane %v757, 3
    %v1142 = vrot.slane %v760, 3
    %v1143 = vrot.slane %v763, 3
    %v1144 = vrot.slane %v766, 3
    %v1145 = vrot.slane %v769, 3
    %v1146 = vrot.slane %v772, 3
    %v1147 = vrot.slane %v775, 3
    %v1148 = vrot.slane %v778, 3
    %v1149 = vrot.slane %v781, 3
    %v1150 = vrot.slane %v784, 3
    %v1151 = vrot.slane %v787, 3
    %v1152 = vrot.slane %v790, 3
    %v1153 = vrot.slane %v793, 3
    %v1154 = vrot.slane %v796, 3
    %v1155 = vrot.slane %v799, 3
    %v1156 = vrot.slane %v802, 3
    %v1157 = vrot.slane %v805, 3
    %v1158 = vrot.slane %v808, 3
    %v1159 = vrot.slane %v811, 3
    %v1160 = vrot.slane %v814, 3
    %v1161 = vrot.slane %v817, 3
    %v1162 = vrot.slane %v820, 3
    %v1163 = vrot.slane %v823, 3
    %v1164 = vrot.slane %v826, 3
    %v1165 = vrot.slane %v829, 3
    %v1166 = vrot.slane %v832, 3
    %v1167 = vrot.slane %v835, 3
    %v1168 = vrot.slane %v838, 3
    %v1169 = vrot.slane %v841, 3
    %v1170 = vrot.slane %v844, 3
    %v1171 = vrot.slane %v847, 3
    %v1172 = vrot.slane %v850, 3
    %v1173 = vrot.slane %v853, 3
    %v1174 = vrot.slane %v856, 3
    %v1175 = vrot.slane %v859, 3
    %v1176 = vrot.slane %v862, 3
    %v1177 = vrot.slane %v865, 3
    %v1178 = vrot.slane %v868, 3
    %v1179 = vrot.slane %v871, 3
    %v1180 = vrot.slane %v874, 3
    %v1181 = vrot.slane %v877, 3
    %v1182 = vrot.slane %v880, 3
    %v1183 = vrot.slane %v883, 3
    %v1184 = vrot.slane %v886, 3
    %v1185 = vrot.slane %v889, 3
    %v1186 = vrot.slane %v892, 3
    %v1187 = vrot.slane %v895, 3
    %v1188 = vrot.slane %v898, 3
    %v1189 = vrot.slane %v901, 3
    %v1190 = vrot.slane %v904, 3
    %v1191 = vrot.slane %v907, 3
    %v1192 = vrot.slane %v910, 3
    %v1193 = vrot.slane %v913, 3
    %v1194 = vrot.slane %v916, 3
    %v1195 = vrot.slane %v919, 3
    %v1196 = vrot.slane %v922, 3
    %v1197 = vrot.slane %v925, 3
    %v1198 = vrot.slane %v928, 3
    %v1199 = vrot.slane %v931, 3
    %v1200 = vrot.slane %v934, 3
    %v1201 = vrot.slane %v937, 3
    %v1202 = vrot.slane %v940, 3
    %v1203 = vrot.slane %v943, 3
    %v1204 = vrot.slane %v946, 3
    %v1205 = vrot.slane %v949, 3
    %v1206 = vrot.slane %v952, 3
    %v1207 = vrot.slane %v955, 3
    %v1208 = vrot.slane %v958, 3
    %v1209 = vrot.slane %v961, 3
    %v1210 = vrot.slane %v964, 3
    %v1211 = vrot.slane %v967, 3
    %v1212 = vrot.slane %v970, 3
    %vm1213 = vcmp.lt.s32.totalorder %v973, 5
    %v1214 = vsel %vm1213, %v1211, %v1212
    %v1215 = vsel %vm1213, %v1210, %v1211
    %v1216 = vsel %vm1213, %v1209, %v1210
    %v1217 = vsel %vm1213, %v1208, %v1209
    %v1218 = vsel %vm1213, %v1207, %v1208
    %v1219 = vsel %vm1213, %v1206, %v1207
    %v1220 = vsel %vm1213, %v1205, %v1206
    %v1221 = vsel %vm1213, %v1204, %v1205
    %v1222 = vsel %vm1213, %v1203, %v1204
    %v1223 = vsel %vm1213, %v1202, %v1203
    %v1224 = vsel %vm1213, %v1201, %v1202
    %v1225 = vsel %vm1213, %v1200, %v1201
    %v1226 = vsel %vm1213, %v1199, %v1200
    %v1227 = vsel %vm1213, %v1198, %v1199
    %v1228 = vsel %vm1213, %v1197, %v1198
    %v1229 = vsel %vm1213, %v1196, %v1197
    %v1230 = vsel %vm1213, %v1195, %v1196
    %v1231 = vsel %vm1213, %v1194, %v1195
    %v1232 = vsel %vm1213, %v1193, %v1194
    %v1233 = vsel %vm1213, %v1192, %v1193
    %v1234 = vsel %vm1213, %v1191, %v1192
    %v1235 = vsel %vm1213, %v1190, %v1191
    %v1236 = vsel %vm1213, %v1189, %v1190
    %v1237 = vsel %vm1213, %v1188, %v1189
    %v1238 = vsel %vm1213, %v1187, %v1188
    %v1239 = vsel %vm1213, %v1186, %v1187
    %v1240 = vsel %vm1213, %v1185, %v1186
    %v1241 = vsel %vm1213, %v1184, %v1185
    %v1242 = vsel %vm1213, %v1183, %v1184
    %v1243 = vsel %vm1213, %v1182, %v1183
    %v1244 = vsel %vm1213, %v1181, %v1182
    %v1245 = vsel %vm1213, %v1180, %v1181
    %v1246 = vsel %vm1213, %v1179, %v1180
    %v1247 = vsel %vm1213, %v1178, %v1179
    %v1248 = vsel %vm1213, %v1177, %v1178
    %v1249 = vsel %vm1213, %v1176, %v1177
    %v1250 = vsel %vm1213, %v1175, %v1176
    %v1251 = vsel %vm1213, %v1174, %v1175
    %v1252 = vsel %vm1213, %v1173, %v1174
    %v1253 = vsel %vm1213, %v1172, %v1173
    %v1254 = vsel %vm1213, %v1171, %v1172
    %v1255 = vsel %vm1213, %v1170, %v1171
    %v1256 = vsel %vm1213, %v1169, %v1170
    %v1257 = vsel %vm1213, %v1168, %v1169
    %v1258 = vsel %vm1213, %v1167, %v1168
    %v1259 = vsel %vm1213, %v1166, %v1167
    %v1260 = vsel %vm1213, %v1165, %v1166
    %v1261 = vsel %vm1213, %v1164, %v1165
    %v1262 = vsel %vm1213, %v1163, %v1164
    %v1263 = vsel %vm1213, %v1162, %v1163
    %v1264 = vsel %vm1213, %v1161, %v1162
    %v1265 = vsel %vm1213, %v1160, %v1161
    %v1266 = vsel %vm1213, %v1159, %v1160
    %v1267 = vsel %vm1213, %v1158, %v1159
    %v1268 = vsel %vm1213, %v1157, %v1158
    %v1269 = vsel %vm1213, %v1156, %v1157
    %v1270 = vsel %vm1213, %v1155, %v1156
    %v1271 = vsel %vm1213, %v1154, %v1155
    %v1272 = vsel %vm1213, %v1153, %v1154
    %v1273 = vsel %vm1213, %v1152, %v1153
    %v1274 = vsel %vm1213, %v1151, %v1152
    %v1275 = vsel %vm1213, %v1150, %v1151
    %v1276 = vsel %vm1213, %v1149, %v1150
    %v1277 = vsel %vm1213, %v1148, %v1149
    %v1278 = vsel %vm1213, %v1147, %v1148
    %v1279 = vsel %vm1213, %v1146, %v1147
    %v1280 = vsel %vm1213, %v1145, %v1146
    %v1281 = vsel %vm1213, %v1144, %v1145
    %v1282 = vsel %vm1213, %v1143, %v1144
    %v1283 = vsel %vm1213, %v1142, %v1143
    %v1284 = vsel %vm1213, %v1141, %v1142
    %v1285 = vsel %vm1213, %v1140, %v1141
    %v1286 = vsel %vm1213, %v1139, %v1140
    %v1287 = vsel %vm1213, %v1138, %v1139
    %v1288 = vsel %vm1213, %v1137, %v1138
    %v1289 = vsel %vm1213, %v1136, %v1137
    %v1290 = vsel %vm1213, %v1135, %v1136
    %v1291 = vsel %vm1213, %v1134, %v1135
    %v1292 = vsel %vm1213, %v1133, %v1134
    %v1293 = vsel %vm1213, %v1212, %v1133
    %vm1294 = vcmp.ge.s32.totalorder %v1053, 5
    %vm1295 = vcmp.ge.s32.totalorder %v1054, 5
    %vm1296 = vcmp.ge.s32.totalorder %v1055, 5
    %vm1297 = vcmp.ge.s32.totalorder %v1056, 5
    %vm1298 = vcmp.ge.s32.totalorder %v1057, 5
    %vm1299 = vcmp.ge.s32.totalorder %v1058, 5
    %vm1300 = vcmp.ge.s32.totalorder %v1059, 5
    %vm1301 = vcmp.ge.s32.totalorder %v1060, 5
    %vm1302 = vcmp.ge.s32.totalorder %v1061, 5
    %vm1303 = vcmp.ge.s32.totalorder %v1062, 5
    %vm1304 = vcmp.ge.s32.totalorder %v1063, 5
    %vm1305 = vcmp.ge.s32.totalorder %v1064, 5
    %vm1306 = vcmp.ge.s32.totalorder %v1065, 5
    %vm1307 = vcmp.ge.s32.totalorder %v1066, 5
    %vm1308 = vcmp.ge.s32.totalorder %v1067, 5
    %vm1309 = vcmp.ge.s32.totalorder %v1068, 5
    %vm1310 = vcmp.ge.s32.totalorder %v1069, 5
    %vm1311 = vcmp.ge.s32.totalorder %v1070, 5
    %vm1312 = vcmp.ge.s32.totalorder %v1071, 5
    %vm1313 = vcmp.ge.s32.totalorder %v1072, 5
    %vm1314 = vcmp.ge.s32.totalorder %v1073, 5
    %vm1315 = vcmp.ge.s32.totalorder %v1074, 5
    %vm1316 = vcmp.ge.s32.totalorder %v1075, 5
    %vm1317 = vcmp.ge.s32.totalorder %v1076, 5
    %vm1318 = vcmp.ge.s32.totalorder %v1077, 5
    %vm1319 = vcmp.ge.s32.totalorder %v1078, 5
    %vm1320 = vcmp.ge.s32.totalorder %v1079, 5
    %vm1321 = vcmp.ge.s32.totalorder %v1080, 5
    %vm1322 = vcmp.ge.s32.totalorder %v1081, 5
    %vm1323 = vcmp.ge.s32.totalorder %v1082, 5
    %vm1324 = vcmp.ge.s32.totalorder %v1083, 5
    %vm1325 = vcmp.ge.s32.totalorder %v1084, 5
    %vm1326 = vcmp.ge.s32.totalorder %v1085, 5
    %vm1327 = vcmp.ge.s32.totalorder %v1086, 5
    %vm1328 = vcmp.ge.s32.totalorder %v1087, 5
    %vm1329 = vcmp.ge.s32.totalorder %v1088, 5
    %vm1330 = vcmp.ge.s32.totalorder %v1089, 5
    %vm1331 = vcmp.ge.s32.totalorder %v1090, 5
    %vm1332 = vcmp.ge.s32.totalorder %v1091, 5
    %vm1333 = vcmp.ge.s32.totalorder %v1092, 5
    %vm1334 = vcmp.ge.s32.totalorder %v1093, 5
    %vm1335 = vcmp.ge.s32.totalorder %v1094, 5
    %vm1336 = vcmp.ge.s32.totalorder %v1095, 5
    %vm1337 = vcmp.ge.s32.totalorder %v1096, 5
    %vm1338 = vcmp.ge.s32.totalorder %v1097, 5
    %vm1339 = vcmp.ge.s32.totalorder %v1098, 5
    %vm1340 = vcmp.ge.s32.totalorder %v1099, 5
    %vm1341 = vcmp.ge.s32.totalorder %v1100, 5
    %vm1342 = vcmp.ge.s32.totalorder %v1101, 5
    %vm1343 = vcmp.ge.s32.totalorder %v1102, 5
    %vm1344 = vcmp.ge.s32.totalorder %v1103, 5
    %vm1345 = vcmp.ge.s32.totalorder %v1104, 5
    %vm1346 = vcmp.ge.s32.totalorder %v1105, 5
    %vm1347 = vcmp.ge.s32.totalorder %v1106, 5
    %vm1348 = vcmp.ge.s32.totalorder %v1107, 5
    %vm1349 = vcmp.ge.s32.totalorder %v1108, 5
    %vm1350 = vcmp.ge.s32.totalorder %v1109, 5
    %vm1351 = vcmp.ge.s32.totalorder %v1110, 5
    %vm1352 = vcmp.ge.s32.totalorder %v1111, 5
    %vm1353 = vcmp.ge.s32.totalorder %v1112, 5
    %vm1354 = vcmp.ge.s32.totalorder %v1113, 5
    %vm1355 = vcmp.ge.s32.totalorder %v1114, 5
    %vm1356 = vcmp.ge.s32.totalorder %v1115, 5
    %vm1357 = vcmp.ge.s32.totalorder %v1116, 5
    %vm1358 = vcmp.ge.s32.totalorder %v1117, 5
    %vm1359 = vcmp.ge.s32.totalorder %v1118, 5
    %vm1360 = vcmp.ge.s32.totalorder %v1119, 5
    %vm1361 = vcmp.ge.s32.totalorder %v1120, 5
    %vm1362 = vcmp.ge.s32.totalorder %v1121, 5
    %vm1363 = vcmp.ge.s32.totalorder %v1122, 5
    %vm1364 = vcmp.ge.s32.totalorder %v1123, 5
    %vm1365 = vcmp.ge.s32.totalorder %v1124, 5
    %vm1366 = vcmp.ge.s32.totalorder %v1125, 5
    %vm1367 = vcmp.ge.s32.totalorder %v1126, 5
    %vm1368 = vcmp.ge.s32.totalorder %v1127, 5
    %vm1369 = vcmp.ge.s32.totalorder %v1128, 5
    %vm1370 = vcmp.ge.s32.totalorder %v1129, 5
    %vm1371 = vcmp.ge.s32.totalorder %v1130, 5
    %vm1372 = vcmp.ge.s32.totalorder %v1131, 5
    %vm1373 = vcmp.ge.s32.totalorder %v1132, 5
    %v1374 = vsel %vm1294, %v1293, 0.0
    %v1375 = vsel %vm1295, %v1292, 0.0
    %v1376 = vsel %vm1296, %v1291, 0.0
    %v1377 = vsel %vm1297, %v1290, 0.0
    %v1378 = vsel %vm1298, %v1289, 0.0
    %v1379 = vsel %vm1299, %v1288, 0.0
    %v1380 = vsel %vm1300, %v1287, 0.0
    %v1381 = vsel %vm1301, %v1286, 0.0
    %v1382 = vsel %vm1302, %v1285, 0.0
    %v1383 = vsel %vm1303, %v1284, 0.0
    %v1384 = vsel %vm1304, %v1283, 0.0
    %v1385 = vsel %vm1305, %v1282, 0.0
    %v1386 = vsel %vm1306, %v1281, 0.0
    %v1387 = vsel %vm1307, %v1280, 0.0
    %v1388 = vsel %vm1308, %v1279, 0.0
    %v1389 = vsel %vm1309, %v1278, 0.0
    %v1390 = vsel %vm1310, %v1277, 0.0
    %v1391 = vsel %vm1311, %v1276, 0.0
    %v1392 = vsel %vm1312, %v1275, 0.0
    %v1393 = vsel %vm1313, %v1274, 0.0
    %v1394 = vsel %vm1314, %v1273, 0.0
    %v1395 = vsel %vm1315, %v1272, 0.0
    %v1396 = vsel %vm1316, %v1271, 0.0
    %v1397 = vsel %vm1317, %v1270, 0.0
    %v1398 = vsel %vm1318, %v1269, 0.0
    %v1399 = vsel %vm1319, %v1268, 0.0
    %v1400 = vsel %vm1320, %v1267, 0.0
    %v1401 = vsel %vm1321, %v1266, 0.0
    %v1402 = vsel %vm1322, %v1265, 0.0
    %v1403 = vsel %vm1323, %v1264, 0.0
    %v1404 = vsel %vm1324, %v1263, 0.0
    %v1405 = vsel %vm1325, %v1262, 0.0
    %v1406 = vsel %vm1326, %v1261, 0.0
    %v1407 = vsel %vm1327, %v1260, 0.0
    %v1408 = vsel %vm1328, %v1259, 0.0
    %v1409 = vsel %vm1329, %v1258, 0.0
    %v1410 = vsel %vm1330, %v1257, 0.0
    %v1411 = vsel %vm1331, %v1256, 0.0
    %v1412 = vsel %vm1332, %v1255, 0.0
    %v1413 = vsel %vm1333, %v1254, 0.0
    %v1414 = vsel %vm1334, %v1253, 0.0
    %v1415 = vsel %vm1335, %v1252, 0.0
    %v1416 = vsel %vm1336, %v1251, 0.0
    %v1417 = vsel %vm1337, %v1250, 0.0
    %v1418 = vsel %vm1338, %v1249, 0.0
    %v1419 = vsel %vm1339, %v1248, 0.0
    %v1420 = vsel %vm1340, %v1247, 0.0
    %v1421 = vsel %vm1341, %v1246, 0.0
    %v1422 = vsel %vm1342, %v1245, 0.0
    %v1423 = vsel %vm1343, %v1244, 0.0
    %v1424 = vsel %vm1344, %v1243, 0.0
    %v1425 = vsel %vm1345, %v1242, 0.0
    %v1426 = vsel %vm1346, %v1241, 0.0
    %v1427 = vsel %vm1347, %v1240, 0.0
    %v1428 = vsel %vm1348, %v1239, 0.0
    %v1429 = vsel %vm1349, %v1238, 0.0
    %v1430 = vsel %vm1350, %v1237, 0.0
    %v1431 = vsel %vm1351, %v1236, 0.0
    %v1432 = vsel %vm1352, %v1235, 0.0
    %v1433 = vsel %vm1353, %v1234, 0.0
    %v1434 = vsel %vm1354, %v1233, 0.0
    %v1435 = vsel %vm1355, %v1232, 0.0
    %v1436 = vsel %vm1356, %v1231, 0.0
    %v1437 = vsel %vm1357, %v1230, 0.0
    %v1438 = vsel %vm1358, %v1229, 0.0
    %v1439 = vsel %vm1359, %v1228, 0.0
    %v1440 = vsel %vm1360, %v1227, 0.0
    %v1441 = vsel %vm1361, %v1226, 0.0
    %v1442 = vsel %vm1362, %v1225, 0.0
    %v1443 = vsel %vm1363, %v1224, 0.0
    %v1444 = vsel %vm1364, %v1223, 0.0
    %v1445 = vsel %vm1365, %v1222, 0.0
    %v1446 = vsel %vm1366, %v1221, 0.0
    %v1447 = vsel %vm1367, %v1220, 0.0
    %v1448 = vsel %vm1368, %v1219, 0.0
    %v1449 = vsel %vm1369, %v1218, 0.0
    %v1450 = vsel %vm1370, %v1217, 0.0
    %v1451 = vsel %vm1371, %v1216, 0.0
    %v1452 = vsel %vm1372, %v1215, 0.0
    %v1453 = vsel %vm1373, %v1214, 0.0
    %v1454 = vmul.f32 %v1374, 0.0010283801
    %v1455 = vmul.f32 %v1375, 0.0010283801
    %v1456 = vmul.f32 %v1376, 0.0010283801
    %v1457 = vmul.f32 %v1377, 0.0010283801
    %v1458 = vmul.f32 %v1378, 0.0010283801
    %v1459 = vmul.f32 %v1379, 0.0010283801
    %v1460 = vmul.f32 %v1380, 0.0010283801
    %v1461 = vmul.f32 %v1381, 0.0010283801
    %v1462 = vmul.f32 %v1382, 0.0010283801
    %v1463 = vmul.f32 %v1383, 0.0010283801
    %v1464 = vmul.f32 %v1384, 0.0010283801
    %v1465 = vmul.f32 %v1385, 0.0010283801
    %v1466 = vmul.f32 %v1386, 0.0010283801
    %v1467 = vmul.f32 %v1387, 0.0010283801
    %v1468 = vmul.f32 %v1388, 0.0010283801
    %v1469 = vmul.f32 %v1389, 0.0010283801
    %v1470 = vmul.f32 %v1390, 0.0010283801
    %v1471 = vmul.f32 %v1391, 0.0010283801
    %v1472 = vmul.f32 %v1392, 0.0010283801
    %v1473 = vmul.f32 %v1393, 0.0010283801
    %v1474 = vmul.f32 %v1394, 0.0010283801
    %v1475 = vmul.f32 %v1395, 0.0010283801
    %v1476 = vmul.f32 %v1396, 0.0010283801
    %v1477 = vmul.f32 %v1397, 0.0010283801
    %v1478 = vmul.f32 %v1398, 0.0010283801
    %v1479 = vmul.f32 %v1399, 0.0010283801
    %v1480 = vmul.f32 %v1400, 0.0010283801
    %v1481 = vmul.f32 %v1401, 0.0010283801
    %v1482 = vmul.f32 %v1402, 0.0010283801
    %v1483 = vmul.f32 %v1403, 0.0010283801
    %v1484 = vmul.f32 %v1404, 0.0010283801
    %v1485 = vmul.f32 %v1405, 0.0010283801
    %v1486 = vmul.f32 %v1406, 0.0010283801
    %v1487 = vmul.f32 %v1407, 0.0010283801
    %v1488 = vmul.f32 %v1408, 0.0010283801
    %v1489 = vmul.f32 %v1409, 0.0010283801
    %v1490 = vmul.f32 %v1410, 0.0010283801
    %v1491 = vmul.f32 %v1411, 0.0010283801
    %v1492 = vmul.f32 %v1412, 0.0010283801
    %v1493 = vmul.f32 %v1413, 0.0010283801
    %v1494 = vmul.f32 %v1414, 0.0010283801
    %v1495 = vmul.f32 %v1415, 0.0010283801
    %v1496 = vmul.f32 %v1416, 0.0010283801
    %v1497 = vmul.f32 %v1417, 0.0010283801
    %v1498 = vmul.f32 %v1418, 0.0010283801
    %v1499 = vmul.f32 %v1419, 0.0010283801
    %v1500 = vmul.f32 %v1420, 0.0010283801
    %v1501 = vmul.f32 %v1421, 0.0010283801
    %v1502 = vmul.f32 %v1422, 0.0010283801
    %v1503 = vmul.f32 %v1423, 0.0010283801
    %v1504 = vmul.f32 %v1424, 0.0010283801
    %v1505 = vmul.f32 %v1425, 0.0010283801
    %v1506 = vmul.f32 %v1426, 0.0010283801
    %v1507 = vmul.f32 %v1427, 0.0010283801
    %v1508 = vmul.f32 %v1428, 0.0010283801
    %v1509 = vmul.f32 %v1429, 0.0010283801
    %v1510 = vmul.f32 %v1430, 0.0010283801
    %v1511 = vmul.f32 %v1431, 0.0010283801
    %v1512 = vmul.f32 %v1432, 0.0010283801
    %v1513 = vmul.f32 %v1433, 0.0010283801
    %v1514 = vmul.f32 %v1434, 0.0010283801
    %v1515 = vmul.f32 %v1435, 0.0010283801
    %v1516 = vmul.f32 %v1436, 0.0010283801
    %v1517 = vmul.f32 %v1437, 0.0010283801
    %v1518 = vmul.f32 %v1438, 0.0010283801
    %v1519 = vmul.f32 %v1439, 0.0010283801
    %v1520 = vmul.f32 %v1440, 0.0010283801
    %v1521 = vmul.f32 %v1441, 0.0010283801
    %v1522 = vmul.f32 %v1442, 0.0010283801
    %v1523 = vmul.f32 %v1443, 0.0010283801
    %v1524 = vmul.f32 %v1444, 0.0010283801
    %v1525 = vmul.f32 %v1445, 0.0010283801
    %v1526 = vmul.f32 %v1446, 0.0010283801
    %v1527 = vmul.f32 %v1447, 0.0010283801
    %v1528 = vmul.f32 %v1448, 0.0010283801
    %v1529 = vmul.f32 %v1449, 0.0010283801
    %v1530 = vmul.f32 %v1450, 0.0010283801
    %v1531 = vmul.f32 %v1451, 0.0010283801
    %v1532 = vmul.f32 %v1452, 0.0010283801
    %v1533 = vmul.f32 %v1453, 0.0010283801
    %v1534 = vadd.f32 %v1454, 0.0
    %v1535 = vadd.f32 %v1455, 0.0
    %v1536 = vadd.f32 %v1456, 0.0
    %v1537 = vadd.f32 %v1457, 0.0
    %v1538 = vadd.f32 %v1458, 0.0
    %v1539 = vadd.f32 %v1459, 0.0
    %v1540 = vadd.f32 %v1460, 0.0
    %v1541 = vadd.f32 %v1461, 0.0
    %v1542 = vadd.f32 %v1462, 0.0
    %v1543 = vadd.f32 %v1463, 0.0
    %v1544 = vadd.f32 %v1464, 0.0
    %v1545 = vadd.f32 %v1465, 0.0
    %v1546 = vadd.f32 %v1466, 0.0
    %v1547 = vadd.f32 %v1467, 0.0
    %v1548 = vadd.f32 %v1468, 0.0
    %v1549 = vadd.f32 %v1469, 0.0
    %v1550 = vadd.f32 %v1470, 0.0
    %v1551 = vadd.f32 %v1471, 0.0
    %v1552 = vadd.f32 %v1472, 0.0
    %v1553 = vadd.f32 %v1473, 0.0
    %v1554 = vadd.f32 %v1474, 0.0
    %v1555 = vadd.f32 %v1475, 0.0
    %v1556 = vadd.f32 %v1476, 0.0
    %v1557 = vadd.f32 %v1477, 0.0
    %v1558 = vadd.f32 %v1478, 0.0
    %v1559 = vadd.f32 %v1479, 0.0
    %v1560 = vadd.f32 %v1480, 0.0
    %v1561 = vadd.f32 %v1481, 0.0
    %v1562 = vadd.f32 %v1482, 0.0
    %v1563 = vadd.f32 %v1483, 0.0
    %v1564 = vadd.f32 %v1484, 0.0
    %v1565 = vadd.f32 %v1485, 0.0
    %v1566 = vadd.f32 %v1486, 0.0
    %v1567 = vadd.f32 %v1487, 0.0
    %v1568 = vadd.f32 %v1488, 0.0
    %v1569 = vadd.f32 %v1489, 0.0
    %v1570 = vadd.f32 %v1490, 0.0
    %v1571 = vadd.f32 %v1491, 0.0
    %v1572 = vadd.f32 %v1492, 0.0
    %v1573 = vadd.f32 %v1493, 0.0
    %v1574 = vadd.f32 %v1494, 0.0
    %v1575 = vadd.f32 %v1495, 0.0
    %v1576 = vadd.f32 %v1496, 0.0
    %v1577 = vadd.f32 %v1497, 0.0
    %v1578 = vadd.f32 %v1498, 0.0
    %v1579 = vadd.f32 %v1499, 0.0
    %v1580 = vadd.f32 %v1500, 0.0
    %v1581 = vadd.f32 %v1501, 0.0
    %v1582 = vadd.f32 %v1502, 0.0
    %v1583 = vadd.f32 %v1503, 0.0
    %v1584 = vadd.f32 %v1504, 0.0
    %v1585 = vadd.f32 %v1505, 0.0
    %v1586 = vadd.f32 %v1506, 0.0
    %v1587 = vadd.f32 %v1507, 0.0
    %v1588 = vadd.f32 %v1508, 0.0
    %v1589 = vadd.f32 %v1509, 0.0
    %v1590 = vadd.f32 %v1510, 0.0
    %v1591 = vadd.f32 %v1511, 0.0
    %v1592 = vadd.f32 %v1512, 0.0
    %v1593 = vadd.f32 %v1513, 0.0
    %v1594 = vadd.f32 %v1514, 0.0
    %v1595 = vadd.f32 %v1515, 0.0
    %v1596 = vadd.f32 %v1516, 0.0
    %v1597 = vadd.f32 %v1517, 0.0
    %v1598 = vadd.f32 %v1518, 0.0
    %v1599 = vadd.f32 %v1519, 0.0
    %v1600 = vadd.f32 %v1520, 0.0
    %v1601 = vadd.f32 %v1521, 0.0
    %v1602 = vadd.f32 %v1522, 0.0
    %v1603 = vadd.f32 %v1523, 0.0
    %v1604 = vadd.f32 %v1524, 0.0
    %v1605 = vadd.f32 %v1525, 0.0
    %v1606 = vadd.f32 %v1526, 0.0
    %v1607 = vadd.f32 %v1527, 0.0
    %v1608 = vadd.f32 %v1528, 0.0
    %v1609 = vadd.f32 %v1529, 0.0
    %v1610 = vadd.f32 %v1530, 0.0
    %v1611 = vadd.f32 %v1531, 0.0
    %v1612 = vadd.f32 %v1532, 0.0
    %v1613 = vadd.f32 %v1533, 0.0
    %v1614 = vrot.slane %v733, 4
    %v1615 = vrot.slane %v736, 4
    %v1616 = vrot.slane %v739, 4
    %v1617 = vrot.slane %v742, 4
    %v1618 = vrot.slane %v745, 4
    %v1619 = vrot.slane %v748, 4
    %v1620 = vrot.slane %v751, 4
    %v1621 = vrot.slane %v754, 4
    %v1622 = vrot.slane %v757, 4
    %v1623 = vrot.slane %v760, 4
    %v1624 = vrot.slane %v763, 4
    %v1625 = vrot.slane %v766, 4
    %v1626 = vrot.slane %v769, 4
    %v1627 = vrot.slane %v772, 4
    %v1628 = vrot.slane %v775, 4
    %v1629 = vrot.slane %v778, 4
    %v1630 = vrot.slane %v781, 4
    %v1631 = vrot.slane %v784, 4
    %v1632 = vrot.slane %v787, 4
    %v1633 = vrot.slane %v790, 4
    %v1634 = vrot.slane %v793, 4
    %v1635 = vrot.slane %v796, 4
    %v1636 = vrot.slane %v799, 4
    %v1637 = vrot.slane %v802, 4
    %v1638 = vrot.slane %v805, 4
    %v1639 = vrot.slane %v808, 4
    %v1640 = vrot.slane %v811, 4
    %v1641 = vrot.slane %v814, 4
    %v1642 = vrot.slane %v817, 4
    %v1643 = vrot.slane %v820, 4
    %v1644 = vrot.slane %v823, 4
    %v1645 = vrot.slane %v826, 4
    %v1646 = vrot.slane %v829, 4
    %v1647 = vrot.slane %v832, 4
    %v1648 = vrot.slane %v835, 4
    %v1649 = vrot.slane %v838, 4
    %v1650 = vrot.slane %v841, 4
    %v1651 = vrot.slane %v844, 4
    %v1652 = vrot.slane %v847, 4
    %v1653 = vrot.slane %v850, 4
    %v1654 = vrot.slane %v853, 4
    %v1655 = vrot.slane %v856, 4
    %v1656 = vrot.slane %v859, 4
    %v1657 = vrot.slane %v862, 4
    %v1658 = vrot.slane %v865, 4
    %v1659 = vrot.slane %v868, 4
    %v1660 = vrot.slane %v871, 4
    %v1661 = vrot.slane %v874, 4
    %v1662 = vrot.slane %v877, 4
    %v1663 = vrot.slane %v880, 4
    %v1664 = vrot.slane %v883, 4
    %v1665 = vrot.slane %v886, 4
    %v1666 = vrot.slane %v889, 4
    %v1667 = vrot.slane %v892, 4
    %v1668 = vrot.slane %v895, 4
    %v1669 = vrot.slane %v898, 4
    %v1670 = vrot.slane %v901, 4
    %v1671 = vrot.slane %v904, 4
    %v1672 = vrot.slane %v907, 4
    %v1673 = vrot.slane %v910, 4
    %v1674 = vrot.slane %v913, 4
    %v1675 = vrot.slane %v916, 4
    %v1676 = vrot.slane %v919, 4
    %v1677 = vrot.slane %v922, 4
    %v1678 = vrot.slane %v925, 4
    %v1679 = vrot.slane %v928, 4
    %v1680 = vrot.slane %v931, 4
    %v1681 = vrot.slane %v934, 4
    %v1682 = vrot.slane %v937, 4
    %v1683 = vrot.slane %v940, 4
    %v1684 = vrot.slane %v943, 4
    %v1685 = vrot.slane %v946, 4
    %v1686 = vrot.slane %v949, 4
    %v1687 = vrot.slane %v952, 4
    %v1688 = vrot.slane %v955, 4
    %v1689 = vrot.slane %v958, 4
    %v1690 = vrot.slane %v961, 4
    %v1691 = vrot.slane %v964, 4
    %v1692 = vrot.slane %v967, 4
    %v1693 = vrot.slane %v970, 4
    %vm1694 = vcmp.lt.s32.totalorder %v973, 4
    %v1695 = vsel %vm1694, %v1692, %v1693
    %v1696 = vsel %vm1694, %v1691, %v1692
    %v1697 = vsel %vm1694, %v1690, %v1691
    %v1698 = vsel %vm1694, %v1689, %v1690
    %v1699 = vsel %vm1694, %v1688, %v1689
    %v1700 = vsel %vm1694, %v1687, %v1688
    %v1701 = vsel %vm1694, %v1686, %v1687
    %v1702 = vsel %vm1694, %v1685, %v1686
    %v1703 = vsel %vm1694, %v1684, %v1685
    %v1704 = vsel %vm1694, %v1683, %v1684
    %v1705 = vsel %vm1694, %v1682, %v1683
    %v1706 = vsel %vm1694, %v1681, %v1682
    %v1707 = vsel %vm1694, %v1680, %v1681
    %v1708 = vsel %vm1694, %v1679, %v1680
    %v1709 = vsel %vm1694, %v1678, %v1679
    %v1710 = vsel %vm1694, %v1677, %v1678
    %v1711 = vsel %vm1694, %v1676, %v1677
    %v1712 = vsel %vm1694, %v1675, %v1676
    %v1713 = vsel %vm1694, %v1674, %v1675
    %v1714 = vsel %vm1694, %v1673, %v1674
    %v1715 = vsel %vm1694, %v1672, %v1673
    %v1716 = vsel %vm1694, %v1671, %v1672
    %v1717 = vsel %vm1694, %v1670, %v1671
    %v1718 = vsel %vm1694, %v1669, %v1670
    %v1719 = vsel %vm1694, %v1668, %v1669
    %v1720 = vsel %vm1694, %v1667, %v1668
    %v1721 = vsel %vm1694, %v1666, %v1667
    %v1722 = vsel %vm1694, %v1665, %v1666
    %v1723 = vsel %vm1694, %v1664, %v1665
    %v1724 = vsel %vm1694, %v1663, %v1664
    %v1725 = vsel %vm1694, %v1662, %v1663
    %v1726 = vsel %vm1694, %v1661, %v1662
    %v1727 = vsel %vm1694, %v1660, %v1661
    %v1728 = vsel %vm1694, %v1659, %v1660
    %v1729 = vsel %vm1694, %v1658, %v1659
    %v1730 = vsel %vm1694, %v1657, %v1658
    %v1731 = vsel %vm1694, %v1656, %v1657
    %v1732 = vsel %vm1694, %v1655, %v1656
    %v1733 = vsel %vm1694, %v1654, %v1655
    %v1734 = vsel %vm1694, %v1653, %v1654
    %v1735 = vsel %vm1694, %v1652, %v1653
    %v1736 = vsel %vm1694, %v1651, %v1652
    %v1737 = vsel %vm1694, %v1650, %v1651
    %v1738 = vsel %vm1694, %v1649, %v1650
    %v1739 = vsel %vm1694, %v1648, %v1649
    %v1740 = vsel %vm1694, %v1647, %v1648
    %v1741 = vsel %vm1694, %v1646, %v1647
    %v1742 = vsel %vm1694, %v1645, %v1646
    %v1743 = vsel %vm1694, %v1644, %v1645
    %v1744 = vsel %vm1694, %v1643, %v1644
    %v1745 = vsel %vm1694, %v1642, %v1643
    %v1746 = vsel %vm1694, %v1641, %v1642
    %v1747 = vsel %vm1694, %v1640, %v1641
    %v1748 = vsel %vm1694, %v1639, %v1640
    %v1749 = vsel %vm1694, %v1638, %v1639
    %v1750 = vsel %vm1694, %v1637, %v1638
    %v1751 = vsel %vm1694, %v1636, %v1637
    %v1752 = vsel %vm1694, %v1635, %v1636
    %v1753 = vsel %vm1694, %v1634, %v1635
    %v1754 = vsel %vm1694, %v1633, %v1634
    %v1755 = vsel %vm1694, %v1632, %v1633
    %v1756 = vsel %vm1694, %v1631, %v1632
    %v1757 = vsel %vm1694, %v1630, %v1631
    %v1758 = vsel %vm1694, %v1629, %v1630
    %v1759 = vsel %vm1694, %v1628, %v1629
    %v1760 = vsel %vm1694, %v1627, %v1628
    %v1761 = vsel %vm1694, %v1626, %v1627
    %v1762 = vsel %vm1694, %v1625, %v1626
    %v1763 = vsel %vm1694, %v1624, %v1625
    %v1764 = vsel %vm1694, %v1623, %v1624
    %v1765 = vsel %vm1694, %v1622, %v1623
    %v1766 = vsel %vm1694, %v1621, %v1622
    %v1767 = vsel %vm1694, %v1620, %v1621
    %v1768 = vsel %vm1694, %v1619, %v1620
    %v1769 = vsel %vm1694, %v1618, %v1619
    %v1770 = vsel %vm1694, %v1617, %v1618
    %v1771 = vsel %vm1694, %v1616, %v1617
    %v1772 = vsel %vm1694, %v1615, %v1616
    %v1773 = vsel %vm1694, %v1614, %v1615
    %v1774 = vsel %vm1694, %v1693, %v1614
    %vm1775 = vcmp.ge.s32.totalorder %v1053, 4
    %vm1776 = vcmp.ge.s32.totalorder %v1054, 4
    %vm1777 = vcmp.ge.s32.totalorder %v1055, 4
    %vm1778 = vcmp.ge.s32.totalorder %v1056, 4
    %vm1779 = vcmp.ge.s32.totalorder %v1057, 4
    %vm1780 = vcmp.ge.s32.totalorder %v1058, 4
    %vm1781 = vcmp.ge.s32.totalorder %v1059, 4
    %vm1782 = vcmp.ge.s32.totalorder %v1060, 4
    %vm1783 = vcmp.ge.s32.totalorder %v1061, 4
    %vm1784 = vcmp.ge.s32.totalorder %v1062, 4
    %vm1785 = vcmp.ge.s32.totalorder %v1063, 4
    %vm1786 = vcmp.ge.s32.totalorder %v1064, 4
    %vm1787 = vcmp.ge.s32.totalorder %v1065, 4
    %vm1788 = vcmp.ge.s32.totalorder %v1066, 4
    %vm1789 = vcmp.ge.s32.totalorder %v1067, 4
    %vm1790 = vcmp.ge.s32.totalorder %v1068, 4
    %vm1791 = vcmp.ge.s32.totalorder %v1069, 4
    %vm1792 = vcmp.ge.s32.totalorder %v1070, 4
    %vm1793 = vcmp.ge.s32.totalorder %v1071, 4
    %vm1794 = vcmp.ge.s32.totalorder %v1072, 4
    %vm1795 = vcmp.ge.s32.totalorder %v1073, 4
    %vm1796 = vcmp.ge.s32.totalorder %v1074, 4
    %vm1797 = vcmp.ge.s32.totalorder %v1075, 4
    %vm1798 = vcmp.ge.s32.totalorder %v1076, 4
    %vm1799 = vcmp.ge.s32.totalorder %v1077, 4
    %vm1800 = vcmp.ge.s32.totalorder %v1078, 4
    %vm1801 = vcmp.ge.s32.totalorder %v1079, 4
    %vm1802 = vcmp.ge.s32.totalorder %v1080, 4
    %vm1803 = vcmp.ge.s32.totalorder %v1081, 4
    %vm1804 = vcmp.ge.s32.totalorder %v1082, 4
    %vm1805 = vcmp.ge.s32.totalorder %v1083, 4
    %vm1806 = vcmp.ge.s32.totalorder %v1084, 4
    %vm1807 = vcmp.ge.s32.totalorder %v1085, 4
    %vm1808 = vcmp.ge.s32.totalorder %v1086, 4
    %vm1809 = vcmp.ge.s32.totalorder %v1087, 4
    %vm1810 = vcmp.ge.s32.totalorder %v1088, 4
    %vm1811 = vcmp.ge.s32.totalorder %v1089, 4
    %vm1812 = vcmp.ge.s32.totalorder %v1090, 4
    %vm1813 = vcmp.ge.s32.totalorder %v1091, 4
    %vm1814 = vcmp.ge.s32.totalorder %v1092, 4
    %vm1815 = vcmp.ge.s32.totalorder %v1093, 4
    %vm1816 = vcmp.ge.s32.totalorder %v1094, 4
    %vm1817 = vcmp.ge.s32.totalorder %v1095, 4
    %vm1818 = vcmp.ge.s32.totalorder %v1096, 4
    %vm1819 = vcmp.ge.s32.totalorder %v1097, 4
    %vm1820 = vcmp.ge.s32.totalorder %v1098, 4
    %vm1821 = vcmp.ge.s32.totalorder %v1099, 4
    %vm1822 = vcmp.ge.s32.totalorder %v1100, 4
    %vm1823 = vcmp.ge.s32.totalorder %v1101, 4
    %vm1824 = vcmp.ge.s32.totalorder %v1102, 4
    %vm1825 = vcmp.ge.s32.totalorder %v1103, 4
    %vm1826 = vcmp.ge.s32.totalorder %v1104, 4
    %vm1827 = vcmp.ge.s32.totalorder %v1105, 4
    %vm1828 = vcmp.ge.s32.totalorder %v1106, 4
    %vm1829 = vcmp.ge.s32.totalorder %v1107, 4
    %vm1830 = vcmp.ge.s32.totalorder %v1108, 4
    %vm1831 = vcmp.ge.s32.totalorder %v1109, 4
    %vm1832 = vcmp.ge.s32.totalorder %v1110, 4
    %vm1833 = vcmp.ge.s32.totalorder %v1111, 4
    %vm1834 = vcmp.ge.s32.totalorder %v1112, 4
    %vm1835 = vcmp.ge.s32.totalorder %v1113, 4
    %vm1836 = vcmp.ge.s32.totalorder %v1114, 4
    %vm1837 = vcmp.ge.s32.totalorder %v1115, 4
    %vm1838 = vcmp.ge.s32.totalorder %v1116, 4
    %vm1839 = vcmp.ge.s32.totalorder %v1117, 4
    %vm1840 = vcmp.ge.s32.totalorder %v1118, 4
    %vm1841 = vcmp.ge.s32.totalorder %v1119, 4
    %vm1842 = vcmp.ge.s32.totalorder %v1120, 4
    %vm1843 = vcmp.ge.s32.totalorder %v1121, 4
    %vm1844 = vcmp.ge.s32.totalorder %v1122, 4
    %vm1845 = vcmp.ge.s32.totalorder %v1123, 4
    %vm1846 = vcmp.ge.s32.totalorder %v1124, 4
    %vm1847 = vcmp.ge.s32.totalorder %v1125, 4
    %vm1848 = vcmp.ge.s32.totalorder %v1126, 4
    %vm1849 = vcmp.ge.s32.totalorder %v1127, 4
    %vm1850 = vcmp.ge.s32.totalorder %v1128, 4
    %vm1851 = vcmp.ge.s32.totalorder %v1129, 4
    %vm1852 = vcmp.ge.s32.totalorder %v1130, 4
    %vm1853 = vcmp.ge.s32.totalorder %v1131, 4
    %vm1854 = vcmp.ge.s32.totalorder %v1132, 4
    %v1855 = vsel %vm1775, %v1774, 0.0
    %v1856 = vsel %vm1776, %v1773, 0.0
    %v1857 = vsel %vm1777, %v1772, 0.0
    %v1858 = vsel %vm1778, %v1771, 0.0
    %v1859 = vsel %vm1779, %v1770, 0.0
    %v1860 = vsel %vm1780, %v1769, 0.0
    %v1861 = vsel %vm1781, %v1768, 0.0
    %v1862 = vsel %vm1782, %v1767, 0.0
    %v1863 = vsel %vm1783, %v1766, 0.0
    %v1864 = vsel %vm1784, %v1765, 0.0
    %v1865 = vsel %vm1785, %v1764, 0.0
    %v1866 = vsel %vm1786, %v1763, 0.0
    %v1867 = vsel %vm1787, %v1762, 0.0
    %v1868 = vsel %vm1788, %v1761, 0.0
    %v1869 = vsel %vm1789, %v1760, 0.0
    %v1870 = vsel %vm1790, %v1759, 0.0
    %v1871 = vsel %vm1791, %v1758, 0.0
    %v1872 = vsel %vm1792, %v1757, 0.0
    %v1873 = vsel %vm1793, %v1756, 0.0
    %v1874 = vsel %vm1794, %v1755, 0.0
    %v1875 = vsel %vm1795, %v1754, 0.0
    %v1876 = vsel %vm1796, %v1753, 0.0
    %v1877 = vsel %vm1797, %v1752, 0.0
    %v1878 = vsel %vm1798, %v1751, 0.0
    %v1879 = vsel %vm1799, %v1750, 0.0
    %v1880 = vsel %vm1800, %v1749, 0.0
    %v1881 = vsel %vm1801, %v1748, 0.0
    %v1882 = vsel %vm1802, %v1747, 0.0
    %v1883 = vsel %vm1803, %v1746, 0.0
    %v1884 = vsel %vm1804, %v1745, 0.0
    %v1885 = vsel %vm1805, %v1744, 0.0
    %v1886 = vsel %vm1806, %v1743, 0.0
    %v1887 = vsel %vm1807, %v1742, 0.0
    %v1888 = vsel %vm1808, %v1741, 0.0
    %v1889 = vsel %vm1809, %v1740, 0.0
    %v1890 = vsel %vm1810, %v1739, 0.0
    %v1891 = vsel %vm1811, %v1738, 0.0
    %v1892 = vsel %vm1812, %v1737, 0.0
    %v1893 = vsel %vm1813, %v1736, 0.0
    %v1894 = vsel %vm1814, %v1735, 0.0
    %v1895 = vsel %vm1815, %v1734, 0.0
    %v1896 = vsel %vm1816, %v1733, 0.0
    %v1897 = vsel %vm1817, %v1732, 0.0
    %v1898 = vsel %vm1818, %v1731, 0.0
    %v1899 = vsel %vm1819, %v1730, 0.0
    %v1900 = vsel %vm1820, %v1729, 0.0
    %v1901 = vsel %vm1821, %v1728, 0.0
    %v1902 = vsel %vm1822, %v1727, 0.0
    %v1903 = vsel %vm1823, %v1726, 0.0
    %v1904 = vsel %vm1824, %v1725, 0.0
    %v1905 = vsel %vm1825, %v1724, 0.0
    %v1906 = vsel %vm1826, %v1723, 0.0
    %v1907 = vsel %vm1827, %v1722, 0.0
    %v1908 = vsel %vm1828, %v1721, 0.0
    %v1909 = vsel %vm1829, %v1720, 0.0
    %v1910 = vsel %vm1830, %v1719, 0.0
    %v1911 = vsel %vm1831, %v1718, 0.0
    %v1912 = vsel %vm1832, %v1717, 0.0
    %v1913 = vsel %vm1833, %v1716, 0.0
    %v1914 = vsel %vm1834, %v1715, 0.0
    %v1915 = vsel %vm1835, %v1714, 0.0
    %v1916 = vsel %vm1836, %v1713, 0.0
    %v1917 = vsel %vm1837, %v1712, 0.0
    %v1918 = vsel %vm1838, %v1711, 0.0
    %v1919 = vsel %vm1839, %v1710, 0.0
    %v1920 = vsel %vm1840, %v1709, 0.0
    %v1921 = vsel %vm1841, %v1708, 0.0
    %v1922 = vsel %vm1842, %v1707, 0.0
    %v1923 = vsel %vm1843, %v1706, 0.0
    %v1924 = vsel %vm1844, %v1705, 0.0
    %v1925 = vsel %vm1845, %v1704, 0.0
    %v1926 = vsel %vm1846, %v1703, 0.0
    %v1927 = vsel %vm1847, %v1702, 0.0
    %v1928 = vsel %vm1848, %v1701, 0.0
    %v1929 = vsel %vm1849, %v1700, 0.0
    %v1930 = vsel %vm1850, %v1699, 0.0
    %v1931 = vsel %vm1851, %v1698, 0.0
    %v1932 = vsel %vm1852, %v1697, 0.0
    %v1933 = vsel %vm1853, %v1696, 0.0
    %v1934 = vsel %vm1854, %v1695, 0.0
    %v1935 = vmul.f32 %v1855, 0.007598758
    %v1936 = vmul.f32 %v1856, 0.007598758
    %v1937 = vmul.f32 %v1857, 0.007598758
    %v1938 = vmul.f32 %v1858, 0.007598758
    %v1939 = vmul.f32 %v1859, 0.007598758
    %v1940 = vmul.f32 %v1860, 0.007598758
    %v1941 = vmul.f32 %v1861, 0.007598758
    %v1942 = vmul.f32 %v1862, 0.007598758
    %v1943 = vmul.f32 %v1863, 0.007598758
    %v1944 = vmul.f32 %v1864, 0.007598758
    %v1945 = vmul.f32 %v1865, 0.007598758
    %v1946 = vmul.f32 %v1866, 0.007598758
    %v1947 = vmul.f32 %v1867, 0.007598758
    %v1948 = vmul.f32 %v1868, 0.007598758
    %v1949 = vmul.f32 %v1869, 0.007598758
    %v1950 = vmul.f32 %v1870, 0.007598758
    %v1951 = vmul.f32 %v1871, 0.007598758
    %v1952 = vmul.f32 %v1872, 0.007598758
    %v1953 = vmul.f32 %v1873, 0.007598758
    %v1954 = vmul.f32 %v1874, 0.007598758
    %v1955 = vmul.f32 %v1875, 0.007598758
    %v1956 = vmul.f32 %v1876, 0.007598758
    %v1957 = vmul.f32 %v1877, 0.007598758
    %v1958 = vmul.f32 %v1878, 0.007598758
    %v1959 = vmul.f32 %v1879, 0.007598758
    %v1960 = vmul.f32 %v1880, 0.007598758
    %v1961 = vmul.f32 %v1881, 0.007598758
    %v1962 = vmul.f32 %v1882, 0.007598758
    %v1963 = vmul.f32 %v1883, 0.007598758
    %v1964 = vmul.f32 %v1884, 0.007598758
    %v1965 = vmul.f32 %v1885, 0.007598758
    %v1966 = vmul.f32 %v1886, 0.007598758
    %v1967 = vmul.f32 %v1887, 0.007598758
    %v1968 = vmul.f32 %v1888, 0.007598758
    %v1969 = vmul.f32 %v1889, 0.007598758
    %v1970 = vmul.f32 %v1890, 0.007598758
    %v1971 = vmul.f32 %v1891, 0.007598758
    %v1972 = vmul.f32 %v1892, 0.007598758
    %v1973 = vmul.f32 %v1893, 0.007598758
    %v1974 = vmul.f32 %v1894, 0.007598758
    %v1975 = vmul.f32 %v1895, 0.007598758
    %v1976 = vmul.f32 %v1896, 0.007598758
    %v1977 = vmul.f32 %v1897, 0.007598758
    %v1978 = vmul.f32 %v1898, 0.007598758
    %v1979 = vmul.f32 %v1899, 0.007598758
    %v1980 = vmul.f32 %v1900, 0.007598758
    %v1981 = vmul.f32 %v1901, 0.007598758
    %v1982 = vmul.f32 %v1902, 0.007598758
    %v1983 = vmul.f32 %v1903, 0.007598758
    %v1984 = vmul.f32 %v1904, 0.007598758
    %v1985 = vmul.f32 %v1905, 0.007598758
    %v1986 = vmul.f32 %v1906, 0.007598758
    %v1987 = vmul.f32 %v1907, 0.007598758
    %v1988 = vmul.f32 %v1908, 0.007598758
    %v1989 = vmul.f32 %v1909, 0.007598758
    %v1990 = vmul.f32 %v1910, 0.007598758
    %v1991 = vmul.f32 %v1911, 0.007598758
    %v1992 = vmul.f32 %v1912, 0.007598758
    %v1993 = vmul.f32 %v1913, 0.007598758
    %v1994 = vmul.f32 %v1914, 0.007598758
    %v1995 = vmul.f32 %v1915, 0.007598758
    %v1996 = vmul.f32 %v1916, 0.007598758
    %v1997 = vmul.f32 %v1917, 0.007598758
    %v1998 = vmul.f32 %v1918, 0.007598758
    %v1999 = vmul.f32 %v1919, 0.007598758
    %v2000 = vmul.f32 %v1920, 0.007598758
    %v2001 = vmul.f32 %v1921, 0.007598758
    %v2002 = vmul.f32 %v1922, 0.007598758
    %v2003 = vmul.f32 %v1923, 0.007598758
    %v2004 = vmul.f32 %v1924, 0.007598758
    %v2005 = vmul.f32 %v1925, 0.007598758
    %v2006 = vmul.f32 %v1926, 0.007598758
    %v2007 = vmul.f32 %v1927, 0.007598758
    %v2008 = vmul.f32 %v1928, 0.007598758
    %v2009 = vmul.f32 %v1929, 0.007598758
    %v2010 = vmul.f32 %v1930, 0.007598758
    %v2011 = vmul.f32 %v1931, 0.007598758
    %v2012 = vmul.f32 %v1932, 0.007598758
    %v2013 = vmul.f32 %v1933, 0.007598758
    %v2014 = vmul.f32 %v1934, 0.007598758
    %v2015 = vadd.f32 %v1534, %v1935
    %v2016 = vadd.f32 %v1535, %v1936
    %v2017 = vadd.f32 %v1536, %v1937
    %v2018 = vadd.f32 %v1537, %v1938
    %v2019 = vadd.f32 %v1538, %v1939
    %v2020 = vadd.f32 %v1539, %v1940
    %v2021 = vadd.f32 %v1540, %v1941
    %v2022 = vadd.f32 %v1541, %v1942
    %v2023 = vadd.f32 %v1542, %v1943
    %v2024 = vadd.f32 %v1543, %v1944
    %v2025 = vadd.f32 %v1544, %v1945
    %v2026 = vadd.f32 %v1545, %v1946
    %v2027 = vadd.f32 %v1546, %v1947
    %v2028 = vadd.f32 %v1547, %v1948
    %v2029 = vadd.f32 %v1548, %v1949
    %v2030 = vadd.f32 %v1549, %v1950
    %v2031 = vadd.f32 %v1550, %v1951
    %v2032 = vadd.f32 %v1551, %v1952
    %v2033 = vadd.f32 %v1552, %v1953
    %v2034 = vadd.f32 %v1553, %v1954
    %v2035 = vadd.f32 %v1554, %v1955
    %v2036 = vadd.f32 %v1555, %v1956
    %v2037 = vadd.f32 %v1556, %v1957
    %v2038 = vadd.f32 %v1557, %v1958
    %v2039 = vadd.f32 %v1558, %v1959
    %v2040 = vadd.f32 %v1559, %v1960
    %v2041 = vadd.f32 %v1560, %v1961
    %v2042 = vadd.f32 %v1561, %v1962
    %v2043 = vadd.f32 %v1562, %v1963
    %v2044 = vadd.f32 %v1563, %v1964
    %v2045 = vadd.f32 %v1564, %v1965
    %v2046 = vadd.f32 %v1565, %v1966
    %v2047 = vadd.f32 %v1566, %v1967
    %v2048 = vadd.f32 %v1567, %v1968
    %v2049 = vadd.f32 %v1568, %v1969
    %v2050 = vadd.f32 %v1569, %v1970
    %v2051 = vadd.f32 %v1570, %v1971
    %v2052 = vadd.f32 %v1571, %v1972
    %v2053 = vadd.f32 %v1572, %v1973
    %v2054 = vadd.f32 %v1573, %v1974
    %v2055 = vadd.f32 %v1574, %v1975
    %v2056 = vadd.f32 %v1575, %v1976
    %v2057 = vadd.f32 %v1576, %v1977
    %v2058 = vadd.f32 %v1577, %v1978
    %v2059 = vadd.f32 %v1578, %v1979
    %v2060 = vadd.f32 %v1579, %v1980
    %v2061 = vadd.f32 %v1580, %v1981
    %v2062 = vadd.f32 %v1581, %v1982
    %v2063 = vadd.f32 %v1582, %v1983
    %v2064 = vadd.f32 %v1583, %v1984
    %v2065 = vadd.f32 %v1584, %v1985
    %v2066 = vadd.f32 %v1585, %v1986
    %v2067 = vadd.f32 %v1586, %v1987
    %v2068 = vadd.f32 %v1587, %v1988
    %v2069 = vadd.f32 %v1588, %v1989
    %v2070 = vadd.f32 %v1589, %v1990
    %v2071 = vadd.f32 %v1590, %v1991
    %v2072 = vadd.f32 %v1591, %v1992
    %v2073 = vadd.f32 %v1592, %v1993
    %v2074 = vadd.f32 %v1593, %v1994
    %v2075 = vadd.f32 %v1594, %v1995
    %v2076 = vadd.f32 %v1595, %v1996
    %v2077 = vadd.f32 %v1596, %v1997
    %v2078 = vadd.f32 %v1597, %v1998
    %v2079 = vadd.f32 %v1598, %v1999
    %v2080 = vadd.f32 %v1599, %v2000
    %v2081 = vadd.f32 %v1600, %v2001
    %v2082 = vadd.f32 %v1601, %v2002
    %v2083 = vadd.f32 %v1602, %v2003
    %v2084 = vadd.f32 %v1603, %v2004
    %v2085 = vadd.f32 %v1604, %v2005
    %v2086 = vadd.f32 %v1605, %v2006
    %v2087 = vadd.f32 %v1606, %v2007
    %v2088 = vadd.f32 %v1607, %v2008
    %v2089 = vadd.f32 %v1608, %v2009
    %v2090 = vadd.f32 %v1609, %v2010
    %v2091 = vadd.f32 %v1610, %v2011
    %v2092 = vadd.f32 %v1611, %v2012
    %v2093 = vadd.f32 %v1612, %v2013
    %v2094 = vadd.f32 %v1613, %v2014
    %v2095 = vrot.slane %v733, 5
    %v2096 = vrot.slane %v736, 5
    %v2097 = vrot.slane %v739, 5
    %v2098 = vrot.slane %v742, 5
    %v2099 = vrot.slane %v745, 5
    %v2100 = vrot.slane %v748, 5
    %v2101 = vrot.slane %v751, 5
    %v2102 = vrot.slane %v754, 5
    %v2103 = vrot.slane %v757, 5
    %v2104 = vrot.slane %v760, 5
    %v2105 = vrot.slane %v763, 5
    %v2106 = vrot.slane %v766, 5
    %v2107 = vrot.slane %v769, 5
    %v2108 = vrot.slane %v772, 5
    %v2109 = vrot.slane %v775, 5
    %v2110 = vrot.slane %v778, 5
    %v2111 = vrot.slane %v781, 5
    %v2112 = vrot.slane %v784, 5
    %v2113 = vrot.slane %v787, 5
    %v2114 = vrot.slane %v790, 5
    %v2115 = vrot.slane %v793, 5
    %v2116 = vrot.slane %v796, 5
    %v2117 = vrot.slane %v799, 5
    %v2118 = vrot.slane %v802, 5
    %v2119 = vrot.slane %v805, 5
    %v2120 = vrot.slane %v808, 5
    %v2121 = vrot.slane %v811, 5
    %v2122 = vrot.slane %v814, 5
    %v2123 = vrot.slane %v817, 5
    %v2124 = vrot.slane %v820, 5
    %v2125 = vrot.slane %v823, 5
    %v2126 = vrot.slane %v826, 5
    %v2127 = vrot.slane %v829, 5
    %v2128 = vrot.slane %v832, 5
    %v2129 = vrot.slane %v835, 5
    %v2130 = vrot.slane %v838, 5
    %v2131 = vrot.slane %v841, 5
    %v2132 = vrot.slane %v844, 5
    %v2133 = vrot.slane %v847, 5
    %v2134 = vrot.slane %v850, 5
    %v2135 = vrot.slane %v853, 5
    %v2136 = vrot.slane %v856, 5
    %v2137 = vrot.slane %v859, 5
    %v2138 = vrot.slane %v862, 5
    %v2139 = vrot.slane %v865, 5
    %v2140 = vrot.slane %v868, 5
    %v2141 = vrot.slane %v871, 5
    %v2142 = vrot.slane %v874, 5
    %v2143 = vrot.slane %v877, 5
    %v2144 = vrot.slane %v880, 5
    %v2145 = vrot.slane %v883, 5
    %v2146 = vrot.slane %v886, 5
    %v2147 = vrot.slane %v889, 5
    %v2148 = vrot.slane %v892, 5
    %v2149 = vrot.slane %v895, 5
    %v2150 = vrot.slane %v898, 5
    %v2151 = vrot.slane %v901, 5
    %v2152 = vrot.slane %v904, 5
    %v2153 = vrot.slane %v907, 5
    %v2154 = vrot.slane %v910, 5
    %v2155 = vrot.slane %v913, 5
    %v2156 = vrot.slane %v916, 5
    %v2157 = vrot.slane %v919, 5
    %v2158 = vrot.slane %v922, 5
    %v2159 = vrot.slane %v925, 5
    %v2160 = vrot.slane %v928, 5
    %v2161 = vrot.slane %v931, 5
    %v2162 = vrot.slane %v934, 5
    %v2163 = vrot.slane %v937, 5
    %v2164 = vrot.slane %v940, 5
    %v2165 = vrot.slane %v943, 5
    %v2166 = vrot.slane %v946, 5
    %v2167 = vrot.slane %v949, 5
    %v2168 = vrot.slane %v952, 5
    %v2169 = vrot.slane %v955, 5
    %v2170 = vrot.slane %v958, 5
    %v2171 = vrot.slane %v961, 5
    %v2172 = vrot.slane %v964, 5
    %v2173 = vrot.slane %v967, 5
    %v2174 = vrot.slane %v970, 5
    %vm2175 = vcmp.lt.s32.totalorder %v973, 3
    %v2176 = vsel %vm2175, %v2173, %v2174
    %v2177 = vsel %vm2175, %v2172, %v2173
    %v2178 = vsel %vm2175, %v2171, %v2172
    %v2179 = vsel %vm2175, %v2170, %v2171
    %v2180 = vsel %vm2175, %v2169, %v2170
    %v2181 = vsel %vm2175, %v2168, %v2169
    %v2182 = vsel %vm2175, %v2167, %v2168
    %v2183 = vsel %vm2175, %v2166, %v2167
    %v2184 = vsel %vm2175, %v2165, %v2166
    %v2185 = vsel %vm2175, %v2164, %v2165
    %v2186 = vsel %vm2175, %v2163, %v2164
    %v2187 = vsel %vm2175, %v2162, %v2163
    %v2188 = vsel %vm2175, %v2161, %v2162
    %v2189 = vsel %vm2175, %v2160, %v2161
    %v2190 = vsel %vm2175, %v2159, %v2160
    %v2191 = vsel %vm2175, %v2158, %v2159
    %v2192 = vsel %vm2175, %v2157, %v2158
    %v2193 = vsel %vm2175, %v2156, %v2157
    %v2194 = vsel %vm2175, %v2155, %v2156
    %v2195 = vsel %vm2175, %v2154, %v2155
    %v2196 = vsel %vm2175, %v2153, %v2154
    %v2197 = vsel %vm2175, %v2152, %v2153
    %v2198 = vsel %vm2175, %v2151, %v2152
    %v2199 = vsel %vm2175, %v2150, %v2151
    %v2200 = vsel %vm2175, %v2149, %v2150
    %v2201 = vsel %vm2175, %v2148, %v2149
    %v2202 = vsel %vm2175, %v2147, %v2148
    %v2203 = vsel %vm2175, %v2146, %v2147
    %v2204 = vsel %vm2175, %v2145, %v2146
    %v2205 = vsel %vm2175, %v2144, %v2145
    %v2206 = vsel %vm2175, %v2143, %v2144
    %v2207 = vsel %vm2175, %v2142, %v2143
    %v2208 = vsel %vm2175, %v2141, %v2142
    %v2209 = vsel %vm2175, %v2140, %v2141
    %v2210 = vsel %vm2175, %v2139, %v2140
    %v2211 = vsel %vm2175, %v2138, %v2139
    %v2212 = vsel %vm2175, %v2137, %v2138
    %v2213 = vsel %vm2175, %v2136, %v2137
    %v2214 = vsel %vm2175, %v2135, %v2136
    %v2215 = vsel %vm2175, %v2134, %v2135
    %v2216 = vsel %vm2175, %v2133, %v2134
    %v2217 = vsel %vm2175, %v2132, %v2133
    %v2218 = vsel %vm2175, %v2131, %v2132
    %v2219 = vsel %vm2175, %v2130, %v2131
    %v2220 = vsel %vm2175, %v2129, %v2130
    %v2221 = vsel %vm2175, %v2128, %v2129
    %v2222 = vsel %vm2175, %v2127, %v2128
    %v2223 = vsel %vm2175, %v2126, %v2127
    %v2224 = vsel %vm2175, %v2125, %v2126
    %v2225 = vsel %vm2175, %v2124, %v2125
    %v2226 = vsel %vm2175, %v2123, %v2124
    %v2227 = vsel %vm2175, %v2122, %v2123
    %v2228 = vsel %vm2175, %v2121, %v2122
    %v2229 = vsel %vm2175, %v2120, %v2121
    %v2230 = vsel %vm2175, %v2119, %v2120
    %v2231 = vsel %vm2175, %v2118, %v2119
    %v2232 = vsel %vm2175, %v2117, %v2118
    %v2233 = vsel %vm2175, %v2116, %v2117
    %v2234 = vsel %vm2175, %v2115, %v2116
    %v2235 = vsel %vm2175, %v2114, %v2115
    %v2236 = vsel %vm2175, %v2113, %v2114
    %v2237 = vsel %vm2175, %v2112, %v2113
    %v2238 = vsel %vm2175, %v2111, %v2112
    %v2239 = vsel %vm2175, %v2110, %v2111
    %v2240 = vsel %vm2175, %v2109, %v2110
    %v2241 = vsel %vm2175, %v2108, %v2109
    %v2242 = vsel %vm2175, %v2107, %v2108
    %v2243 = vsel %vm2175, %v2106, %v2107
    %v2244 = vsel %vm2175, %v2105, %v2106
    %v2245 = vsel %vm2175, %v2104, %v2105
    %v2246 = vsel %vm2175, %v2103, %v2104
    %v2247 = vsel %vm2175, %v2102, %v2103
    %v2248 = vsel %vm2175, %v2101, %v2102
    %v2249 = vsel %vm2175, %v2100, %v2101
    %v2250 = vsel %vm2175, %v2099, %v2100
    %v2251 = vsel %vm2175, %v2098, %v2099
    %v2252 = vsel %vm2175, %v2097, %v2098
    %v2253 = vsel %vm2175, %v2096, %v2097
    %v2254 = vsel %vm2175, %v2095, %v2096
    %v2255 = vsel %vm2175, %v2174, %v2095
    %vm2256 = vcmp.ge.s32.totalorder %v1053, 3
    %vm2257 = vcmp.ge.s32.totalorder %v1054, 3
    %vm2258 = vcmp.ge.s32.totalorder %v1055, 3
    %vm2259 = vcmp.ge.s32.totalorder %v1056, 3
    %vm2260 = vcmp.ge.s32.totalorder %v1057, 3
    %vm2261 = vcmp.ge.s32.totalorder %v1058, 3
    %vm2262 = vcmp.ge.s32.totalorder %v1059, 3
    %vm2263 = vcmp.ge.s32.totalorder %v1060, 3
    %vm2264 = vcmp.ge.s32.totalorder %v1061, 3
    %vm2265 = vcmp.ge.s32.totalorder %v1062, 3
    %vm2266 = vcmp.ge.s32.totalorder %v1063, 3
    %vm2267 = vcmp.ge.s32.totalorder %v1064, 3
    %vm2268 = vcmp.ge.s32.totalorder %v1065, 3
    %vm2269 = vcmp.ge.s32.totalorder %v1066, 3
    %vm2270 = vcmp.ge.s32.totalorder %v1067, 3
    %vm2271 = vcmp.ge.s32.totalorder %v1068, 3
    %vm2272 = vcmp.ge.s32.totalorder %v1069, 3
    %vm2273 = vcmp.ge.s32.totalorder %v1070, 3
    %vm2274 = vcmp.ge.s32.totalorder %v1071, 3
    %vm2275 = vcmp.ge.s32.totalorder %v1072, 3
    %vm2276 = vcmp.ge.s32.totalorder %v1073, 3
    %vm2277 = vcmp.ge.s32.totalorder %v1074, 3
    %vm2278 = vcmp.ge.s32.totalorder %v1075, 3
    %vm2279 = vcmp.ge.s32.totalorder %v1076, 3
    %vm2280 = vcmp.ge.s32.totalorder %v1077, 3
    %vm2281 = vcmp.ge.s32.totalorder %v1078, 3
    %vm2282 = vcmp.ge.s32.totalorder %v1079, 3
    %vm2283 = vcmp.ge.s32.totalorder %v1080, 3
    %vm2284 = vcmp.ge.s32.totalorder %v1081, 3
    %vm2285 = vcmp.ge.s32.totalorder %v1082, 3
    %vm2286 = vcmp.ge.s32.totalorder %v1083, 3
    %vm2287 = vcmp.ge.s32.totalorder %v1084, 3
    %vm2288 = vcmp.ge.s32.totalorder %v1085, 3
    %vm2289 = vcmp.ge.s32.totalorder %v1086, 3
    %vm2290 = vcmp.ge.s32.totalorder %v1087, 3
    %vm2291 = vcmp.ge.s32.totalorder %v1088, 3
    %vm2292 = vcmp.ge.s32.totalorder %v1089, 3
    %vm2293 = vcmp.ge.s32.totalorder %v1090, 3
    %vm2294 = vcmp.ge.s32.totalorder %v1091, 3
    %vm2295 = vcmp.ge.s32.totalorder %v1092, 3
    %vm2296 = vcmp.ge.s32.totalorder %v1093, 3
    %vm2297 = vcmp.ge.s32.totalorder %v1094, 3
    %vm2298 = vcmp.ge.s32.totalorder %v1095, 3
    %vm2299 = vcmp.ge.s32.totalorder %v1096, 3
    %vm2300 = vcmp.ge.s32.totalorder %v1097, 3
    %vm2301 = vcmp.ge.s32.totalorder %v1098, 3
    %vm2302 = vcmp.ge.s32.totalorder %v1099, 3
    %vm2303 = vcmp.ge.s32.totalorder %v1100, 3
    %vm2304 = vcmp.ge.s32.totalorder %v1101, 3
    %vm2305 = vcmp.ge.s32.totalorder %v1102, 3
    %vm2306 = vcmp.ge.s32.totalorder %v1103, 3
    %vm2307 = vcmp.ge.s32.totalorder %v1104, 3
    %vm2308 = vcmp.ge.s32.totalorder %v1105, 3
    %vm2309 = vcmp.ge.s32.totalorder %v1106, 3
    %vm2310 = vcmp.ge.s32.totalorder %v1107, 3
    %vm2311 = vcmp.ge.s32.totalorder %v1108, 3
    %vm2312 = vcmp.ge.s32.totalorder %v1109, 3
    %vm2313 = vcmp.ge.s32.totalorder %v1110, 3
    %vm2314 = vcmp.ge.s32.totalorder %v1111, 3
    %vm2315 = vcmp.ge.s32.totalorder %v1112, 3
    %vm2316 = vcmp.ge.s32.totalorder %v1113, 3
    %vm2317 = vcmp.ge.s32.totalorder %v1114, 3
    %vm2318 = vcmp.ge.s32.totalorder %v1115, 3
    %vm2319 = vcmp.ge.s32.totalorder %v1116, 3
    %vm2320 = vcmp.ge.s32.totalorder %v1117, 3
    %vm2321 = vcmp.ge.s32.totalorder %v1118, 3
    %vm2322 = vcmp.ge.s32.totalorder %v1119, 3
    %vm2323 = vcmp.ge.s32.totalorder %v1120, 3
    %vm2324 = vcmp.ge.s32.totalorder %v1121, 3
    %vm2325 = vcmp.ge.s32.totalorder %v1122, 3
    %vm2326 = vcmp.ge.s32.totalorder %v1123, 3
    %vm2327 = vcmp.ge.s32.totalorder %v1124, 3
    %vm2328 = vcmp.ge.s32.totalorder %v1125, 3
    %vm2329 = vcmp.ge.s32.totalorder %v1126, 3
    %vm2330 = vcmp.ge.s32.totalorder %v1127, 3
    %vm2331 = vcmp.ge.s32.totalorder %v1128, 3
    %vm2332 = vcmp.ge.s32.totalorder %v1129, 3
    %vm2333 = vcmp.ge.s32.totalorder %v1130, 3
    %vm2334 = vcmp.ge.s32.totalorder %v1131, 3
    %vm2335 = vcmp.ge.s32.totalorder %v1132, 3
    %v2336 = vsel %vm2256, %v2255, 0.0
    %v2337 = vsel %vm2257, %v2254, 0.0
    %v2338 = vsel %vm2258, %v2253, 0.0
    %v2339 = vsel %vm2259, %v2252, 0.0
    %v2340 = vsel %vm2260, %v2251, 0.0
    %v2341 = vsel %vm2261, %v2250, 0.0
    %v2342 = vsel %vm2262, %v2249, 0.0
    %v2343 = vsel %vm2263, %v2248, 0.0
    %v2344 = vsel %vm2264, %v2247, 0.0
    %v2345 = vsel %vm2265, %v2246, 0.0
    %v2346 = vsel %vm2266, %v2245, 0.0
    %v2347 = vsel %vm2267, %v2244, 0.0
    %v2348 = vsel %vm2268, %v2243, 0.0
    %v2349 = vsel %vm2269, %v2242, 0.0
    %v2350 = vsel %vm2270, %v2241, 0.0
    %v2351 = vsel %vm2271, %v2240, 0.0
    %v2352 = vsel %vm2272, %v2239, 0.0
    %v2353 = vsel %vm2273, %v2238, 0.0
    %v2354 = vsel %vm2274, %v2237, 0.0
    %v2355 = vsel %vm2275, %v2236, 0.0
    %v2356 = vsel %vm2276, %v2235, 0.0
    %v2357 = vsel %vm2277, %v2234, 0.0
    %v2358 = vsel %vm2278, %v2233, 0.0
    %v2359 = vsel %vm2279, %v2232, 0.0
    %v2360 = vsel %vm2280, %v2231, 0.0
    %v2361 = vsel %vm2281, %v2230, 0.0
    %v2362 = vsel %vm2282, %v2229, 0.0
    %v2363 = vsel %vm2283, %v2228, 0.0
    %v2364 = vsel %vm2284, %v2227, 0.0
    %v2365 = vsel %vm2285, %v2226, 0.0
    %v2366 = vsel %vm2286, %v2225, 0.0
    %v2367 = vsel %vm2287, %v2224, 0.0
    %v2368 = vsel %vm2288, %v2223, 0.0
    %v2369 = vsel %vm2289, %v2222, 0.0
    %v2370 = vsel %vm2290, %v2221, 0.0
    %v2371 = vsel %vm2291, %v2220, 0.0
    %v2372 = vsel %vm2292, %v2219, 0.0
    %v2373 = vsel %vm2293, %v2218, 0.0
    %v2374 = vsel %vm2294, %v2217, 0.0
    %v2375 = vsel %vm2295, %v2216, 0.0
    %v2376 = vsel %vm2296, %v2215, 0.0
    %v2377 = vsel %vm2297, %v2214, 0.0
    %v2378 = vsel %vm2298, %v2213, 0.0
    %v2379 = vsel %vm2299, %v2212, 0.0
    %v2380 = vsel %vm2300, %v2211, 0.0
    %v2381 = vsel %vm2301, %v2210, 0.0
    %v2382 = vsel %vm2302, %v2209, 0.0
    %v2383 = vsel %vm2303, %v2208, 0.0
    %v2384 = vsel %vm2304, %v2207, 0.0
    %v2385 = vsel %vm2305, %v2206, 0.0
    %v2386 = vsel %vm2306, %v2205, 0.0
    %v2387 = vsel %vm2307, %v2204, 0.0
    %v2388 = vsel %vm2308, %v2203, 0.0
    %v2389 = vsel %vm2309, %v2202, 0.0
    %v2390 = vsel %vm2310, %v2201, 0.0
    %v2391 = vsel %vm2311, %v2200, 0.0
    %v2392 = vsel %vm2312, %v2199, 0.0
    %v2393 = vsel %vm2313, %v2198, 0.0
    %v2394 = vsel %vm2314, %v2197, 0.0
    %v2395 = vsel %vm2315, %v2196, 0.0
    %v2396 = vsel %vm2316, %v2195, 0.0
    %v2397 = vsel %vm2317, %v2194, 0.0
    %v2398 = vsel %vm2318, %v2193, 0.0
    %v2399 = vsel %vm2319, %v2192, 0.0
    %v2400 = vsel %vm2320, %v2191, 0.0
    %v2401 = vsel %vm2321, %v2190, 0.0
    %v2402 = vsel %vm2322, %v2189, 0.0
    %v2403 = vsel %vm2323, %v2188, 0.0
    %v2404 = vsel %vm2324, %v2187, 0.0
    %v2405 = vsel %vm2325, %v2186, 0.0
    %v2406 = vsel %vm2326, %v2185, 0.0
    %v2407 = vsel %vm2327, %v2184, 0.0
    %v2408 = vsel %vm2328, %v2183, 0.0
    %v2409 = vsel %vm2329, %v2182, 0.0
    %v2410 = vsel %vm2330, %v2181, 0.0
    %v2411 = vsel %vm2331, %v2180, 0.0
    %v2412 = vsel %vm2332, %v2179, 0.0
    %v2413 = vsel %vm2333, %v2178, 0.0
    %v2414 = vsel %vm2334, %v2177, 0.0
    %v2415 = vsel %vm2335, %v2176, 0.0
    %v2416 = vmul.f32 %v2336, 0.036000773
    %v2417 = vmul.f32 %v2337, 0.036000773
    %v2418 = vmul.f32 %v2338, 0.036000773
    %v2419 = vmul.f32 %v2339, 0.036000773
    %v2420 = vmul.f32 %v2340, 0.036000773
    %v2421 = vmul.f32 %v2341, 0.036000773
    %v2422 = vmul.f32 %v2342, 0.036000773
    %v2423 = vmul.f32 %v2343, 0.036000773
    %v2424 = vmul.f32 %v2344, 0.036000773
    %v2425 = vmul.f32 %v2345, 0.036000773
    %v2426 = vmul.f32 %v2346, 0.036000773
    %v2427 = vmul.f32 %v2347, 0.036000773
    %v2428 = vmul.f32 %v2348, 0.036000773
    %v2429 = vmul.f32 %v2349, 0.036000773
    %v2430 = vmul.f32 %v2350, 0.036000773
    %v2431 = vmul.f32 %v2351, 0.036000773
    %v2432 = vmul.f32 %v2352, 0.036000773
    %v2433 = vmul.f32 %v2353, 0.036000773
    %v2434 = vmul.f32 %v2354, 0.036000773
    %v2435 = vmul.f32 %v2355, 0.036000773
    %v2436 = vmul.f32 %v2356, 0.036000773
    %v2437 = vmul.f32 %v2357, 0.036000773
    %v2438 = vmul.f32 %v2358, 0.036000773
    %v2439 = vmul.f32 %v2359, 0.036000773
    %v2440 = vmul.f32 %v2360, 0.036000773
    %v2441 = vmul.f32 %v2361, 0.036000773
    %v2442 = vmul.f32 %v2362, 0.036000773
    %v2443 = vmul.f32 %v2363, 0.036000773
    %v2444 = vmul.f32 %v2364, 0.036000773
    %v2445 = vmul.f32 %v2365, 0.036000773
    %v2446 = vmul.f32 %v2366, 0.036000773
    %v2447 = vmul.f32 %v2367, 0.036000773
    %v2448 = vmul.f32 %v2368, 0.036000773
    %v2449 = vmul.f32 %v2369, 0.036000773
    %v2450 = vmul.f32 %v2370, 0.036000773
    %v2451 = vmul.f32 %v2371, 0.036000773
    %v2452 = vmul.f32 %v2372, 0.036000773
    %v2453 = vmul.f32 %v2373, 0.036000773
    %v2454 = vmul.f32 %v2374, 0.036000773
    %v2455 = vmul.f32 %v2375, 0.036000773
    %v2456 = vmul.f32 %v2376, 0.036000773
    %v2457 = vmul.f32 %v2377, 0.036000773
    %v2458 = vmul.f32 %v2378, 0.036000773
    %v2459 = vmul.f32 %v2379, 0.036000773
    %v2460 = vmul.f32 %v2380, 0.036000773
    %v2461 = vmul.f32 %v2381, 0.036000773
    %v2462 = vmul.f32 %v2382, 0.036000773
    %v2463 = vmul.f32 %v2383, 0.036000773
    %v2464 = vmul.f32 %v2384, 0.036000773
    %v2465 = vmul.f32 %v2385, 0.036000773
    %v2466 = vmul.f32 %v2386, 0.036000773
    %v2467 = vmul.f32 %v2387, 0.036000773
    %v2468 = vmul.f32 %v2388, 0.036000773
    %v2469 = vmul.f32 %v2389, 0.036000773
    %v2470 = vmul.f32 %v2390, 0.036000773
    %v2471 = vmul.f32 %v2391, 0.036000773
    %v2472 = vmul.f32 %v2392, 0.036000773
    %v2473 = vmul.f32 %v2393, 0.036000773
    %v2474 = vmul.f32 %v2394, 0.036000773
    %v2475 = vmul.f32 %v2395, 0.036000773
    %v2476 = vmul.f32 %v2396, 0.036000773
    %v2477 = vmul.f32 %v2397, 0.036000773
    %v2478 = vmul.f32 %v2398, 0.036000773
    %v2479 = vmul.f32 %v2399, 0.036000773
    %v2480 = vmul.f32 %v2400, 0.036000773
    %v2481 = vmul.f32 %v2401, 0.036000773
    %v2482 = vmul.f32 %v2402, 0.036000773
    %v2483 = vmul.f32 %v2403, 0.036000773
    %v2484 = vmul.f32 %v2404, 0.036000773
    %v2485 = vmul.f32 %v2405, 0.036000773
    %v2486 = vmul.f32 %v2406, 0.036000773
    %v2487 = vmul.f32 %v2407, 0.036000773
    %v2488 = vmul.f32 %v2408, 0.036000773
    %v2489 = vmul.f32 %v2409, 0.036000773
    %v2490 = vmul.f32 %v2410, 0.036000773
    %v2491 = vmul.f32 %v2411, 0.036000773
    %v2492 = vmul.f32 %v2412, 0.036000773
    %v2493 = vmul.f32 %v2413, 0.036000773
    %v2494 = vmul.f32 %v2414, 0.036000773
    %v2495 = vmul.f32 %v2415, 0.036000773
    %v2496 = vadd.f32 %v2015, %v2416
    %v2497 = vadd.f32 %v2016, %v2417
    %v2498 = vadd.f32 %v2017, %v2418
    %v2499 = vadd.f32 %v2018, %v2419
    %v2500 = vadd.f32 %v2019, %v2420
    %v2501 = vadd.f32 %v2020, %v2421
    %v2502 = vadd.f32 %v2021, %v2422
    %v2503 = vadd.f32 %v2022, %v2423
    %v2504 = vadd.f32 %v2023, %v2424
    %v2505 = vadd.f32 %v2024, %v2425
    %v2506 = vadd.f32 %v2025, %v2426
    %v2507 = vadd.f32 %v2026, %v2427
    %v2508 = vadd.f32 %v2027, %v2428
    %v2509 = vadd.f32 %v2028, %v2429
    %v2510 = vadd.f32 %v2029, %v2430
    %v2511 = vadd.f32 %v2030, %v2431
    %v2512 = vadd.f32 %v2031, %v2432
    %v2513 = vadd.f32 %v2032, %v2433
    %v2514 = vadd.f32 %v2033, %v2434
    %v2515 = vadd.f32 %v2034, %v2435
    %v2516 = vadd.f32 %v2035, %v2436
    %v2517 = vadd.f32 %v2036, %v2437
    %v2518 = vadd.f32 %v2037, %v2438
    %v2519 = vadd.f32 %v2038, %v2439
    %v2520 = vadd.f32 %v2039, %v2440
    %v2521 = vadd.f32 %v2040, %v2441
    %v2522 = vadd.f32 %v2041, %v2442
    %v2523 = vadd.f32 %v2042, %v2443
    %v2524 = vadd.f32 %v2043, %v2444
    %v2525 = vadd.f32 %v2044, %v2445
    %v2526 = vadd.f32 %v2045, %v2446
    %v2527 = vadd.f32 %v2046, %v2447
    %v2528 = vadd.f32 %v2047, %v2448
    %v2529 = vadd.f32 %v2048, %v2449
    %v2530 = vadd.f32 %v2049, %v2450
    %v2531 = vadd.f32 %v2050, %v2451
    %v2532 = vadd.f32 %v2051, %v2452
    %v2533 = vadd.f32 %v2052, %v2453
    %v2534 = vadd.f32 %v2053, %v2454
    %v2535 = vadd.f32 %v2054, %v2455
    %v2536 = vadd.f32 %v2055, %v2456
    %v2537 = vadd.f32 %v2056, %v2457
    %v2538 = vadd.f32 %v2057, %v2458
    %v2539 = vadd.f32 %v2058, %v2459
    %v2540 = vadd.f32 %v2059, %v2460
    %v2541 = vadd.f32 %v2060, %v2461
    %v2542 = vadd.f32 %v2061, %v2462
    %v2543 = vadd.f32 %v2062, %v2463
    %v2544 = vadd.f32 %v2063, %v2464
    %v2545 = vadd.f32 %v2064, %v2465
    %v2546 = vadd.f32 %v2065, %v2466
    %v2547 = vadd.f32 %v2066, %v2467
    %v2548 = vadd.f32 %v2067, %v2468
    %v2549 = vadd.f32 %v2068, %v2469
    %v2550 = vadd.f32 %v2069, %v2470
    %v2551 = vadd.f32 %v2070, %v2471
    %v2552 = vadd.f32 %v2071, %v2472
    %v2553 = vadd.f32 %v2072, %v2473
    %v2554 = vadd.f32 %v2073, %v2474
    %v2555 = vadd.f32 %v2074, %v2475
    %v2556 = vadd.f32 %v2075, %v2476
    %v2557 = vadd.f32 %v2076, %v2477
    %v2558 = vadd.f32 %v2077, %v2478
    %v2559 = vadd.f32 %v2078, %v2479
    %v2560 = vadd.f32 %v2079, %v2480
    %v2561 = vadd.f32 %v2080, %v2481
    %v2562 = vadd.f32 %v2081, %v2482
    %v2563 = vadd.f32 %v2082, %v2483
    %v2564 = vadd.f32 %v2083, %v2484
    %v2565 = vadd.f32 %v2084, %v2485
    %v2566 = vadd.f32 %v2085, %v2486
    %v2567 = vadd.f32 %v2086, %v2487
    %v2568 = vadd.f32 %v2087, %v2488
    %v2569 = vadd.f32 %v2088, %v2489
    %v2570 = vadd.f32 %v2089, %v2490
    %v2571 = vadd.f32 %v2090, %v2491
    %v2572 = vadd.f32 %v2091, %v2492
    %v2573 = vadd.f32 %v2092, %v2493
    %v2574 = vadd.f32 %v2093, %v2494
    %v2575 = vadd.f32 %v2094, %v2495
    %v2576 = vrot.slane %v733, 6
    %v2577 = vrot.slane %v736, 6
    %v2578 = vrot.slane %v739, 6
    %v2579 = vrot.slane %v742, 6
    %v2580 = vrot.slane %v745, 6
    %v2581 = vrot.slane %v748, 6
    %v2582 = vrot.slane %v751, 6
    %v2583 = vrot.slane %v754, 6
    %v2584 = vrot.slane %v757, 6
    %v2585 = vrot.slane %v760, 6
    %v2586 = vrot.slane %v763, 6
    %v2587 = vrot.slane %v766, 6
    %v2588 = vrot.slane %v769, 6
    %v2589 = vrot.slane %v772, 6
    %v2590 = vrot.slane %v775, 6
    %v2591 = vrot.slane %v778, 6
    %v2592 = vrot.slane %v781, 6
    %v2593 = vrot.slane %v784, 6
    %v2594 = vrot.slane %v787, 6
    %v2595 = vrot.slane %v790, 6
    %v2596 = vrot.slane %v793, 6
    %v2597 = vrot.slane %v796, 6
    %v2598 = vrot.slane %v799, 6
    %v2599 = vrot.slane %v802, 6
    %v2600 = vrot.slane %v805, 6
    %v2601 = vrot.slane %v808, 6
    %v2602 = vrot.slane %v811, 6
    %v2603 = vrot.slane %v814, 6
    %v2604 = vrot.slane %v817, 6
    %v2605 = vrot.slane %v820, 6
    %v2606 = vrot.slane %v823, 6
    %v2607 = vrot.slane %v826, 6
    %v2608 = vrot.slane %v829, 6
    %v2609 = vrot.slane %v832, 6
    %v2610 = vrot.slane %v835, 6
    %v2611 = vrot.slane %v838, 6
    %v2612 = vrot.slane %v841, 6
    %v2613 = vrot.slane %v844, 6
    %v2614 = vrot.slane %v847, 6
    %v2615 = vrot.slane %v850, 6
    %v2616 = vrot.slane %v853, 6
    %v2617 = vrot.slane %v856, 6
    %v2618 = vrot.slane %v859, 6
    %v2619 = vrot.slane %v862, 6
    %v2620 = vrot.slane %v865, 6
    %v2621 = vrot.slane %v868, 6
    %v2622 = vrot.slane %v871, 6
    %v2623 = vrot.slane %v874, 6
    %v2624 = vrot.slane %v877, 6
    %v2625 = vrot.slane %v880, 6
    %v2626 = vrot.slane %v883, 6
    %v2627 = vrot.slane %v886, 6
    %v2628 = vrot.slane %v889, 6
    %v2629 = vrot.slane %v892, 6
    %v2630 = vrot.slane %v895, 6
    %v2631 = vrot.slane %v898, 6
    %v2632 = vrot.slane %v901, 6
    %v2633 = vrot.slane %v904, 6
    %v2634 = vrot.slane %v907, 6
    %v2635 = vrot.slane %v910, 6
    %v2636 = vrot.slane %v913, 6
    %v2637 = vrot.slane %v916, 6
    %v2638 = vrot.slane %v919, 6
    %v2639 = vrot.slane %v922, 6
    %v2640 = vrot.slane %v925, 6
    %v2641 = vrot.slane %v928, 6
    %v2642 = vrot.slane %v931, 6
    %v2643 = vrot.slane %v934, 6
    %v2644 = vrot.slane %v937, 6
    %v2645 = vrot.slane %v940, 6
    %v2646 = vrot.slane %v943, 6
    %v2647 = vrot.slane %v946, 6
    %v2648 = vrot.slane %v949, 6
    %v2649 = vrot.slane %v952, 6
    %v2650 = vrot.slane %v955, 6
    %v2651 = vrot.slane %v958, 6
    %v2652 = vrot.slane %v961, 6
    %v2653 = vrot.slane %v964, 6
    %v2654 = vrot.slane %v967, 6
    %v2655 = vrot.slane %v970, 6
    %vm2656 = vcmp.lt.s32.totalorder %v973, 2
    %v2657 = vsel %vm2656, %v2654, %v2655
    %v2658 = vsel %vm2656, %v2653, %v2654
    %v2659 = vsel %vm2656, %v2652, %v2653
    %v2660 = vsel %vm2656, %v2651, %v2652
    %v2661 = vsel %vm2656, %v2650, %v2651
    %v2662 = vsel %vm2656, %v2649, %v2650
    %v2663 = vsel %vm2656, %v2648, %v2649
    %v2664 = vsel %vm2656, %v2647, %v2648
    %v2665 = vsel %vm2656, %v2646, %v2647
    %v2666 = vsel %vm2656, %v2645, %v2646
    %v2667 = vsel %vm2656, %v2644, %v2645
    %v2668 = vsel %vm2656, %v2643, %v2644
    %v2669 = vsel %vm2656, %v2642, %v2643
    %v2670 = vsel %vm2656, %v2641, %v2642
    %v2671 = vsel %vm2656, %v2640, %v2641
    %v2672 = vsel %vm2656, %v2639, %v2640
    %v2673 = vsel %vm2656, %v2638, %v2639
    %v2674 = vsel %vm2656, %v2637, %v2638
    %v2675 = vsel %vm2656, %v2636, %v2637
    %v2676 = vsel %vm2656, %v2635, %v2636
    %v2677 = vsel %vm2656, %v2634, %v2635
    %v2678 = vsel %vm2656, %v2633, %v2634
    %v2679 = vsel %vm2656, %v2632, %v2633
    %v2680 = vsel %vm2656, %v2631, %v2632
    %v2681 = vsel %vm2656, %v2630, %v2631
    %v2682 = vsel %vm2656, %v2629, %v2630
    %v2683 = vsel %vm2656, %v2628, %v2629
    %v2684 = vsel %vm2656, %v2627, %v2628
    %v2685 = vsel %vm2656, %v2626, %v2627
    %v2686 = vsel %vm2656, %v2625, %v2626
    %v2687 = vsel %vm2656, %v2624, %v2625
    %v2688 = vsel %vm2656, %v2623, %v2624
    %v2689 = vsel %vm2656, %v2622, %v2623
    %v2690 = vsel %vm2656, %v2621, %v2622
    %v2691 = vsel %vm2656, %v2620, %v2621
    %v2692 = vsel %vm2656, %v2619, %v2620
    %v2693 = vsel %vm2656, %v2618, %v2619
    %v2694 = vsel %vm2656, %v2617, %v2618
    %v2695 = vsel %vm2656, %v2616, %v2617
    %v2696 = vsel %vm2656, %v2615, %v2616
    %v2697 = vsel %vm2656, %v2614, %v2615
    %v2698 = vsel %vm2656, %v2613, %v2614
    %v2699 = vsel %vm2656, %v2612, %v2613
    %v2700 = vsel %vm2656, %v2611, %v2612
    %v2701 = vsel %vm2656, %v2610, %v2611
    %v2702 = vsel %vm2656, %v2609, %v2610
    %v2703 = vsel %vm2656, %v2608, %v2609
    %v2704 = vsel %vm2656, %v2607, %v2608
    %v2705 = vsel %vm2656, %v2606, %v2607
    %v2706 = vsel %vm2656, %v2605, %v2606
    %v2707 = vsel %vm2656, %v2604, %v2605
    %v2708 = vsel %vm2656, %v2603, %v2604
    %v2709 = vsel %vm2656, %v2602, %v2603
    %v2710 = vsel %vm2656, %v2601, %v2602
    %v2711 = vsel %vm2656, %v2600, %v2601
    %v2712 = vsel %vm2656, %v2599, %v2600
    %v2713 = vsel %vm2656, %v2598, %v2599
    %v2714 = vsel %vm2656, %v2597, %v2598
    %v2715 = vsel %vm2656, %v2596, %v2597
    %v2716 = vsel %vm2656, %v2595, %v2596
    %v2717 = vsel %vm2656, %v2594, %v2595
    %v2718 = vsel %vm2656, %v2593, %v2594
    %v2719 = vsel %vm2656, %v2592, %v2593
    %v2720 = vsel %vm2656, %v2591, %v2592
    %v2721 = vsel %vm2656, %v2590, %v2591
    %v2722 = vsel %vm2656, %v2589, %v2590
    %v2723 = vsel %vm2656, %v2588, %v2589
    %v2724 = vsel %vm2656, %v2587, %v2588
    %v2725 = vsel %vm2656, %v2586, %v2587
    %v2726 = vsel %vm2656, %v2585, %v2586
    %v2727 = vsel %vm2656, %v2584, %v2585
    %v2728 = vsel %vm2656, %v2583, %v2584
    %v2729 = vsel %vm2656, %v2582, %v2583
    %v2730 = vsel %vm2656, %v2581, %v2582
    %v2731 = vsel %vm2656, %v2580, %v2581
    %v2732 = vsel %vm2656, %v2579, %v2580
    %v2733 = vsel %vm2656, %v2578, %v2579
    %v2734 = vsel %vm2656, %v2577, %v2578
    %v2735 = vsel %vm2656, %v2576, %v2577
    %v2736 = vsel %vm2656, %v2655, %v2576
    %vm2737 = vcmp.ge.s32.totalorder %v1053, 2
    %vm2738 = vcmp.ge.s32.totalorder %v1054, 2
    %vm2739 = vcmp.ge.s32.totalorder %v1055, 2
    %vm2740 = vcmp.ge.s32.totalorder %v1056, 2
    %vm2741 = vcmp.ge.s32.totalorder %v1057, 2
    %vm2742 = vcmp.ge.s32.totalorder %v1058, 2
    %vm2743 = vcmp.ge.s32.totalorder %v1059, 2
    %vm2744 = vcmp.ge.s32.totalorder %v1060, 2
    %vm2745 = vcmp.ge.s32.totalorder %v1061, 2
    %vm2746 = vcmp.ge.s32.totalorder %v1062, 2
    %vm2747 = vcmp.ge.s32.totalorder %v1063, 2
    %vm2748 = vcmp.ge.s32.totalorder %v1064, 2
    %vm2749 = vcmp.ge.s32.totalorder %v1065, 2
    %vm2750 = vcmp.ge.s32.totalorder %v1066, 2
    %vm2751 = vcmp.ge.s32.totalorder %v1067, 2
    %vm2752 = vcmp.ge.s32.totalorder %v1068, 2
    %vm2753 = vcmp.ge.s32.totalorder %v1069, 2
    %vm2754 = vcmp.ge.s32.totalorder %v1070, 2
    %vm2755 = vcmp.ge.s32.totalorder %v1071, 2
    %vm2756 = vcmp.ge.s32.totalorder %v1072, 2
    %vm2757 = vcmp.ge.s32.totalorder %v1073, 2
    %vm2758 = vcmp.ge.s32.totalorder %v1074, 2
    %vm2759 = vcmp.ge.s32.totalorder %v1075, 2
    %vm2760 = vcmp.ge.s32.totalorder %v1076, 2
    %vm2761 = vcmp.ge.s32.totalorder %v1077, 2
    %vm2762 = vcmp.ge.s32.totalorder %v1078, 2
    %vm2763 = vcmp.ge.s32.totalorder %v1079, 2
    %vm2764 = vcmp.ge.s32.totalorder %v1080, 2
    %vm2765 = vcmp.ge.s32.totalorder %v1081, 2
    %vm2766 = vcmp.ge.s32.totalorder %v1082, 2
    %vm2767 = vcmp.ge.s32.totalorder %v1083, 2
    %vm2768 = vcmp.ge.s32.totalorder %v1084, 2
    %vm2769 = vcmp.ge.s32.totalorder %v1085, 2
    %vm2770 = vcmp.ge.s32.totalorder %v1086, 2
    %vm2771 = vcmp.ge.s32.totalorder %v1087, 2
    %vm2772 = vcmp.ge.s32.totalorder %v1088, 2
    %vm2773 = vcmp.ge.s32.totalorder %v1089, 2
    %vm2774 = vcmp.ge.s32.totalorder %v1090, 2
    %vm2775 = vcmp.ge.s32.totalorder %v1091, 2
    %vm2776 = vcmp.ge.s32.totalorder %v1092, 2
    %vm2777 = vcmp.ge.s32.totalorder %v1093, 2
    %vm2778 = vcmp.ge.s32.totalorder %v1094, 2
    %vm2779 = vcmp.ge.s32.totalorder %v1095, 2
    %vm2780 = vcmp.ge.s32.totalorder %v1096, 2
    %vm2781 = vcmp.ge.s32.totalorder %v1097, 2
    %vm2782 = vcmp.ge.s32.totalorder %v1098, 2
    %vm2783 = vcmp.ge.s32.totalorder %v1099, 2
    %vm2784 = vcmp.ge.s32.totalorder %v1100, 2
    %vm2785 = vcmp.ge.s32.totalorder %v1101, 2
    %vm2786 = vcmp.ge.s32.totalorder %v1102, 2
    %vm2787 = vcmp.ge.s32.totalorder %v1103, 2
    %vm2788 = vcmp.ge.s32.totalorder %v1104, 2
    %vm2789 = vcmp.ge.s32.totalorder %v1105, 2
    %vm2790 = vcmp.ge.s32.totalorder %v1106, 2
    %vm2791 = vcmp.ge.s32.totalorder %v1107, 2
    %vm2792 = vcmp.ge.s32.totalorder %v1108, 2
    %vm2793 = vcmp.ge.s32.totalorder %v1109, 2
    %vm2794 = vcmp.ge.s32.totalorder %v1110, 2
    %vm2795 = vcmp.ge.s32.totalorder %v1111, 2
    %vm2796 = vcmp.ge.s32.totalorder %v1112, 2
    %vm2797 = vcmp.ge.s32.totalorder %v1113, 2
    %vm2798 = vcmp.ge.s32.totalorder %v1114, 2
    %vm2799 = vcmp.ge.s32.totalorder %v1115, 2
    %vm2800 = vcmp.ge.s32.totalorder %v1116, 2
    %vm2801 = vcmp.ge.s32.totalorder %v1117, 2
    %vm2802 = vcmp.ge.s32.totalorder %v1118, 2
    %vm2803 = vcmp.ge.s32.totalorder %v1119, 2
    %vm2804 = vcmp.ge.s32.totalorder %v1120, 2
    %vm2805 = vcmp.ge.s32.totalorder %v1121, 2
    %vm2806 = vcmp.ge.s32.totalorder %v1122, 2
    %vm2807 = vcmp.ge.s32.totalorder %v1123, 2
    %vm2808 = vcmp.ge.s32.totalorder %v1124, 2
    %vm2809 = vcmp.ge.s32.totalorder %v1125, 2
    %vm2810 = vcmp.ge.s32.totalorder %v1126, 2
    %vm2811 = vcmp.ge.s32.totalorder %v1127, 2
    %vm2812 = vcmp.ge.s32.totalorder %v1128, 2
    %vm2813 = vcmp.ge.s32.totalorder %v1129, 2
    %vm2814 = vcmp.ge.s32.totalorder %v1130, 2
    %vm2815 = vcmp.ge.s32.totalorder %v1131, 2
    %vm2816 = vcmp.ge.s32.totalorder %v1132, 2
    %v2817 = vsel %vm2737, %v2736, 0.0
    %v2818 = vsel %vm2738, %v2735, 0.0
    %v2819 = vsel %vm2739, %v2734, 0.0
    %v2820 = vsel %vm2740, %v2733, 0.0
    %v2821 = vsel %vm2741, %v2732, 0.0
    %v2822 = vsel %vm2742, %v2731, 0.0
    %v2823 = vsel %vm2743, %v2730, 0.0
    %v2824 = vsel %vm2744, %v2729, 0.0
    %v2825 = vsel %vm2745, %v2728, 0.0
    %v2826 = vsel %vm2746, %v2727, 0.0
    %v2827 = vsel %vm2747, %v2726, 0.0
    %v2828 = vsel %vm2748, %v2725, 0.0
    %v2829 = vsel %vm2749, %v2724, 0.0
    %v2830 = vsel %vm2750, %v2723, 0.0
    %v2831 = vsel %vm2751, %v2722, 0.0
    %v2832 = vsel %vm2752, %v2721, 0.0
    %v2833 = vsel %vm2753, %v2720, 0.0
    %v2834 = vsel %vm2754, %v2719, 0.0
    %v2835 = vsel %vm2755, %v2718, 0.0
    %v2836 = vsel %vm2756, %v2717, 0.0
    %v2837 = vsel %vm2757, %v2716, 0.0
    %v2838 = vsel %vm2758, %v2715, 0.0
    %v2839 = vsel %vm2759, %v2714, 0.0
    %v2840 = vsel %vm2760, %v2713, 0.0
    %v2841 = vsel %vm2761, %v2712, 0.0
    %v2842 = vsel %vm2762, %v2711, 0.0
    %v2843 = vsel %vm2763, %v2710, 0.0
    %v2844 = vsel %vm2764, %v2709, 0.0
    %v2845 = vsel %vm2765, %v2708, 0.0
    %v2846 = vsel %vm2766, %v2707, 0.0
    %v2847 = vsel %vm2767, %v2706, 0.0
    %v2848 = vsel %vm2768, %v2705, 0.0
    %v2849 = vsel %vm2769, %v2704, 0.0
    %v2850 = vsel %vm2770, %v2703, 0.0
    %v2851 = vsel %vm2771, %v2702, 0.0
    %v2852 = vsel %vm2772, %v2701, 0.0
    %v2853 = vsel %vm2773, %v2700, 0.0
    %v2854 = vsel %vm2774, %v2699, 0.0
    %v2855 = vsel %vm2775, %v2698, 0.0
    %v2856 = vsel %vm2776, %v2697, 0.0
    %v2857 = vsel %vm2777, %v2696, 0.0
    %v2858 = vsel %vm2778, %v2695, 0.0
    %v2859 = vsel %vm2779, %v2694, 0.0
    %v2860 = vsel %vm2780, %v2693, 0.0
    %v2861 = vsel %vm2781, %v2692, 0.0
    %v2862 = vsel %vm2782, %v2691, 0.0
    %v2863 = vsel %vm2783, %v2690, 0.0
    %v2864 = vsel %vm2784, %v2689, 0.0
    %v2865 = vsel %vm2785, %v2688, 0.0
    %v2866 = vsel %vm2786, %v2687, 0.0
    %v2867 = vsel %vm2787, %v2686, 0.0
    %v2868 = vsel %vm2788, %v2685, 0.0
    %v2869 = vsel %vm2789, %v2684, 0.0
    %v2870 = vsel %vm2790, %v2683, 0.0
    %v2871 = vsel %vm2791, %v2682, 0.0
    %v2872 = vsel %vm2792, %v2681, 0.0
    %v2873 = vsel %vm2793, %v2680, 0.0
    %v2874 = vsel %vm2794, %v2679, 0.0
    %v2875 = vsel %vm2795, %v2678, 0.0
    %v2876 = vsel %vm2796, %v2677, 0.0
    %v2877 = vsel %vm2797, %v2676, 0.0
    %v2878 = vsel %vm2798, %v2675, 0.0
    %v2879 = vsel %vm2799, %v2674, 0.0
    %v2880 = vsel %vm2800, %v2673, 0.0
    %v2881 = vsel %vm2801, %v2672, 0.0
    %v2882 = vsel %vm2802, %v2671, 0.0
    %v2883 = vsel %vm2803, %v2670, 0.0
    %v2884 = vsel %vm2804, %v2669, 0.0
    %v2885 = vsel %vm2805, %v2668, 0.0
    %v2886 = vsel %vm2806, %v2667, 0.0
    %v2887 = vsel %vm2807, %v2666, 0.0
    %v2888 = vsel %vm2808, %v2665, 0.0
    %v2889 = vsel %vm2809, %v2664, 0.0
    %v2890 = vsel %vm2810, %v2663, 0.0
    %v2891 = vsel %vm2811, %v2662, 0.0
    %v2892 = vsel %vm2812, %v2661, 0.0
    %v2893 = vsel %vm2813, %v2660, 0.0
    %v2894 = vsel %vm2814, %v2659, 0.0
    %v2895 = vsel %vm2815, %v2658, 0.0
    %v2896 = vsel %vm2816, %v2657, 0.0
    %v2897 = vmul.f32 %v2817, 0.10936069
    %v2898 = vmul.f32 %v2818, 0.10936069
    %v2899 = vmul.f32 %v2819, 0.10936069
    %v2900 = vmul.f32 %v2820, 0.10936069
    %v2901 = vmul.f32 %v2821, 0.10936069
    %v2902 = vmul.f32 %v2822, 0.10936069
    %v2903 = vmul.f32 %v2823, 0.10936069
    %v2904 = vmul.f32 %v2824, 0.10936069
    %v2905 = vmul.f32 %v2825, 0.10936069
    %v2906 = vmul.f32 %v2826, 0.10936069
    %v2907 = vmul.f32 %v2827, 0.10936069
    %v2908 = vmul.f32 %v2828, 0.10936069
    %v2909 = vmul.f32 %v2829, 0.10936069
    %v2910 = vmul.f32 %v2830, 0.10936069
    %v2911 = vmul.f32 %v2831, 0.10936069
    %v2912 = vmul.f32 %v2832, 0.10936069
    %v2913 = vmul.f32 %v2833, 0.10936069
    %v2914 = vmul.f32 %v2834, 0.10936069
    %v2915 = vmul.f32 %v2835, 0.10936069
    %v2916 = vmul.f32 %v2836, 0.10936069
    %v2917 = vmul.f32 %v2837, 0.10936069
    %v2918 = vmul.f32 %v2838, 0.10936069
    %v2919 = vmul.f32 %v2839, 0.10936069
    %v2920 = vmul.f32 %v2840, 0.10936069
    %v2921 = vmul.f32 %v2841, 0.10936069
    %v2922 = vmul.f32 %v2842, 0.10936069
    %v2923 = vmul.f32 %v2843, 0.10936069
    %v2924 = vmul.f32 %v2844, 0.10936069
    %v2925 = vmul.f32 %v2845, 0.10936069
    %v2926 = vmul.f32 %v2846, 0.10936069
    %v2927 = vmul.f32 %v2847, 0.10936069
    %v2928 = vmul.f32 %v2848, 0.10936069
    %v2929 = vmul.f32 %v2849, 0.10936069
    %v2930 = vmul.f32 %v2850, 0.10936069
    %v2931 = vmul.f32 %v2851, 0.10936069
    %v2932 = vmul.f32 %v2852, 0.10936069
    %v2933 = vmul.f32 %v2853, 0.10936069
    %v2934 = vmul.f32 %v2854, 0.10936069
    %v2935 = vmul.f32 %v2855, 0.10936069
    %v2936 = vmul.f32 %v2856, 0.10936069
    %v2937 = vmul.f32 %v2857, 0.10936069
    %v2938 = vmul.f32 %v2858, 0.10936069
    %v2939 = vmul.f32 %v2859, 0.10936069
    %v2940 = vmul.f32 %v2860, 0.10936069
    %v2941 = vmul.f32 %v2861, 0.10936069
    %v2942 = vmul.f32 %v2862, 0.10936069
    %v2943 = vmul.f32 %v2863, 0.10936069
    %v2944 = vmul.f32 %v2864, 0.10936069
    %v2945 = vmul.f32 %v2865, 0.10936069
    %v2946 = vmul.f32 %v2866, 0.10936069
    %v2947 = vmul.f32 %v2867, 0.10936069
    %v2948 = vmul.f32 %v2868, 0.10936069
    %v2949 = vmul.f32 %v2869, 0.10936069
    %v2950 = vmul.f32 %v2870, 0.10936069
    %v2951 = vmul.f32 %v2871, 0.10936069
    %v2952 = vmul.f32 %v2872, 0.10936069
    %v2953 = vmul.f32 %v2873, 0.10936069
    %v2954 = vmul.f32 %v2874, 0.10936069
    %v2955 = vmul.f32 %v2875, 0.10936069
    %v2956 = vmul.f32 %v2876, 0.10936069
    %v2957 = vmul.f32 %v2877, 0.10936069
    %v2958 = vmul.f32 %v2878, 0.10936069
    %v2959 = vmul.f32 %v2879, 0.10936069
    %v2960 = vmul.f32 %v2880, 0.10936069
    %v2961 = vmul.f32 %v2881, 0.10936069
    %v2962 = vmul.f32 %v2882, 0.10936069
    %v2963 = vmul.f32 %v2883, 0.10936069
    %v2964 = vmul.f32 %v2884, 0.10936069
    %v2965 = vmul.f32 %v2885, 0.10936069
    %v2966 = vmul.f32 %v2886, 0.10936069
    %v2967 = vmul.f32 %v2887, 0.10936069
    %v2968 = vmul.f32 %v2888, 0.10936069
    %v2969 = vmul.f32 %v2889, 0.10936069
    %v2970 = vmul.f32 %v2890, 0.10936069
    %v2971 = vmul.f32 %v2891, 0.10936069
    %v2972 = vmul.f32 %v2892, 0.10936069
    %v2973 = vmul.f32 %v2893, 0.10936069
    %v2974 = vmul.f32 %v2894, 0.10936069
    %v2975 = vmul.f32 %v2895, 0.10936069
    %v2976 = vmul.f32 %v2896, 0.10936069
    %v2977 = vadd.f32 %v2496, %v2897
    %v2978 = vadd.f32 %v2497, %v2898
    %v2979 = vadd.f32 %v2498, %v2899
    %v2980 = vadd.f32 %v2499, %v2900
    %v2981 = vadd.f32 %v2500, %v2901
    %v2982 = vadd.f32 %v2501, %v2902
    %v2983 = vadd.f32 %v2502, %v2903
    %v2984 = vadd.f32 %v2503, %v2904
    %v2985 = vadd.f32 %v2504, %v2905
    %v2986 = vadd.f32 %v2505, %v2906
    %v2987 = vadd.f32 %v2506, %v2907
    %v2988 = vadd.f32 %v2507, %v2908
    %v2989 = vadd.f32 %v2508, %v2909
    %v2990 = vadd.f32 %v2509, %v2910
    %v2991 = vadd.f32 %v2510, %v2911
    %v2992 = vadd.f32 %v2511, %v2912
    %v2993 = vadd.f32 %v2512, %v2913
    %v2994 = vadd.f32 %v2513, %v2914
    %v2995 = vadd.f32 %v2514, %v2915
    %v2996 = vadd.f32 %v2515, %v2916
    %v2997 = vadd.f32 %v2516, %v2917
    %v2998 = vadd.f32 %v2517, %v2918
    %v2999 = vadd.f32 %v2518, %v2919
    %v3000 = vadd.f32 %v2519, %v2920
    %v3001 = vadd.f32 %v2520, %v2921
    %v3002 = vadd.f32 %v2521, %v2922
    %v3003 = vadd.f32 %v2522, %v2923
    %v3004 = vadd.f32 %v2523, %v2924
    %v3005 = vadd.f32 %v2524, %v2925
    %v3006 = vadd.f32 %v2525, %v2926
    %v3007 = vadd.f32 %v2526, %v2927
    %v3008 = vadd.f32 %v2527, %v2928
    %v3009 = vadd.f32 %v2528, %v2929
    %v3010 = vadd.f32 %v2529, %v2930
    %v3011 = vadd.f32 %v2530, %v2931
    %v3012 = vadd.f32 %v2531, %v2932
    %v3013 = vadd.f32 %v2532, %v2933
    %v3014 = vadd.f32 %v2533, %v2934
    %v3015 = vadd.f32 %v2534, %v2935
    %v3016 = vadd.f32 %v2535, %v2936
    %v3017 = vadd.f32 %v2536, %v2937
    %v3018 = vadd.f32 %v2537, %v2938
    %v3019 = vadd.f32 %v2538, %v2939
    %v3020 = vadd.f32 %v2539, %v2940
    %v3021 = vadd.f32 %v2540, %v2941
    %v3022 = vadd.f32 %v2541, %v2942
    %v3023 = vadd.f32 %v2542, %v2943
    %v3024 = vadd.f32 %v2543, %v2944
    %v3025 = vadd.f32 %v2544, %v2945
    %v3026 = vadd.f32 %v2545, %v2946
    %v3027 = vadd.f32 %v2546, %v2947
    %v3028 = vadd.f32 %v2547, %v2948
    %v3029 = vadd.f32 %v2548, %v2949
    %v3030 = vadd.f32 %v2549, %v2950
    %v3031 = vadd.f32 %v2550, %v2951
    %v3032 = vadd.f32 %v2551, %v2952
    %v3033 = vadd.f32 %v2552, %v2953
    %v3034 = vadd.f32 %v2553, %v2954
    %v3035 = vadd.f32 %v2554, %v2955
    %v3036 = vadd.f32 %v2555, %v2956
    %v3037 = vadd.f32 %v2556, %v2957
    %v3038 = vadd.f32 %v2557, %v2958
    %v3039 = vadd.f32 %v2558, %v2959
    %v3040 = vadd.f32 %v2559, %v2960
    %v3041 = vadd.f32 %v2560, %v2961
    %v3042 = vadd.f32 %v2561, %v2962
    %v3043 = vadd.f32 %v2562, %v2963
    %v3044 = vadd.f32 %v2563, %v2964
    %v3045 = vadd.f32 %v2564, %v2965
    %v3046 = vadd.f32 %v2565, %v2966
    %v3047 = vadd.f32 %v2566, %v2967
    %v3048 = vadd.f32 %v2567, %v2968
    %v3049 = vadd.f32 %v2568, %v2969
    %v3050 = vadd.f32 %v2569, %v2970
    %v3051 = vadd.f32 %v2570, %v2971
    %v3052 = vadd.f32 %v2571, %v2972
    %v3053 = vadd.f32 %v2572, %v2973
    %v3054 = vadd.f32 %v2573, %v2974
    %v3055 = vadd.f32 %v2574, %v2975
    %v3056 = vadd.f32 %v2575, %v2976
    %v3057 = vrot.slane %v733, 7
    %v3058 = vrot.slane %v736, 7
    %v3059 = vrot.slane %v739, 7
    %v3060 = vrot.slane %v742, 7
    %v3061 = vrot.slane %v745, 7
    %v3062 = vrot.slane %v748, 7
    %v3063 = vrot.slane %v751, 7
    %v3064 = vrot.slane %v754, 7
    %v3065 = vrot.slane %v757, 7
    %v3066 = vrot.slane %v760, 7
    %v3067 = vrot.slane %v763, 7
    %v3068 = vrot.slane %v766, 7
    %v3069 = vrot.slane %v769, 7
    %v3070 = vrot.slane %v772, 7
    %v3071 = vrot.slane %v775, 7
    %v3072 = vrot.slane %v778, 7
    %v3073 = vrot.slane %v781, 7
    %v3074 = vrot.slane %v784, 7
    %v3075 = vrot.slane %v787, 7
    %v3076 = vrot.slane %v790, 7
    %v3077 = vrot.slane %v793, 7
    %v3078 = vrot.slane %v796, 7
    %v3079 = vrot.slane %v799, 7
    %v3080 = vrot.slane %v802, 7
    %v3081 = vrot.slane %v805, 7
    %v3082 = vrot.slane %v808, 7
    %v3083 = vrot.slane %v811, 7
    %v3084 = vrot.slane %v814, 7
    %v3085 = vrot.slane %v817, 7
    %v3086 = vrot.slane %v820, 7
    %v3087 = vrot.slane %v823, 7
    %v3088 = vrot.slane %v826, 7
    %v3089 = vrot.slane %v829, 7
    %v3090 = vrot.slane %v832, 7
    %v3091 = vrot.slane %v835, 7
    %v3092 = vrot.slane %v838, 7
    %v3093 = vrot.slane %v841, 7
    %v3094 = vrot.slane %v844, 7
    %v3095 = vrot.slane %v847, 7
    %v3096 = vrot.slane %v850, 7
    %v3097 = vrot.slane %v853, 7
    %v3098 = vrot.slane %v856, 7
    %v3099 = vrot.slane %v859, 7
    %v3100 = vrot.slane %v862, 7
    %v3101 = vrot.slane %v865, 7
    %v3102 = vrot.slane %v868, 7
    %v3103 = vrot.slane %v871, 7
    %v3104 = vrot.slane %v874, 7
    %v3105 = vrot.slane %v877, 7
    %v3106 = vrot.slane %v880, 7
    %v3107 = vrot.slane %v883, 7
    %v3108 = vrot.slane %v886, 7
    %v3109 = vrot.slane %v889, 7
    %v3110 = vrot.slane %v892, 7
    %v3111 = vrot.slane %v895, 7
    %v3112 = vrot.slane %v898, 7
    %v3113 = vrot.slane %v901, 7
    %v3114 = vrot.slane %v904, 7
    %v3115 = vrot.slane %v907, 7
    %v3116 = vrot.slane %v910, 7
    %v3117 = vrot.slane %v913, 7
    %v3118 = vrot.slane %v916, 7
    %v3119 = vrot.slane %v919, 7
    %v3120 = vrot.slane %v922, 7
    %v3121 = vrot.slane %v925, 7
    %v3122 = vrot.slane %v928, 7
    %v3123 = vrot.slane %v931, 7
    %v3124 = vrot.slane %v934, 7
    %v3125 = vrot.slane %v937, 7
    %v3126 = vrot.slane %v940, 7
    %v3127 = vrot.slane %v943, 7
    %v3128 = vrot.slane %v946, 7
    %v3129 = vrot.slane %v949, 7
    %v3130 = vrot.slane %v952, 7
    %v3131 = vrot.slane %v955, 7
    %v3132 = vrot.slane %v958, 7
    %v3133 = vrot.slane %v961, 7
    %v3134 = vrot.slane %v964, 7
    %v3135 = vrot.slane %v967, 7
    %v3136 = vrot.slane %v970, 7
    %vm3137 = vcmp.lt.s32.totalorder %v973, 1
    %v3138 = vsel %vm3137, %v3135, %v3136
    %v3139 = vsel %vm3137, %v3134, %v3135
    %v3140 = vsel %vm3137, %v3133, %v3134
    %v3141 = vsel %vm3137, %v3132, %v3133
    %v3142 = vsel %vm3137, %v3131, %v3132
    %v3143 = vsel %vm3137, %v3130, %v3131
    %v3144 = vsel %vm3137, %v3129, %v3130
    %v3145 = vsel %vm3137, %v3128, %v3129
    %v3146 = vsel %vm3137, %v3127, %v3128
    %v3147 = vsel %vm3137, %v3126, %v3127
    %v3148 = vsel %vm3137, %v3125, %v3126
    %v3149 = vsel %vm3137, %v3124, %v3125
    %v3150 = vsel %vm3137, %v3123, %v3124
    %v3151 = vsel %vm3137, %v3122, %v3123
    %v3152 = vsel %vm3137, %v3121, %v3122
    %v3153 = vsel %vm3137, %v3120, %v3121
    %v3154 = vsel %vm3137, %v3119, %v3120
    %v3155 = vsel %vm3137, %v3118, %v3119
    %v3156 = vsel %vm3137, %v3117, %v3118
    %v3157 = vsel %vm3137, %v3116, %v3117
    %v3158 = vsel %vm3137, %v3115, %v3116
    %v3159 = vsel %vm3137, %v3114, %v3115
    %v3160 = vsel %vm3137, %v3113, %v3114
    %v3161 = vsel %vm3137, %v3112, %v3113
    %v3162 = vsel %vm3137, %v3111, %v3112
    %v3163 = vsel %vm3137, %v3110, %v3111
    %v3164 = vsel %vm3137, %v3109, %v3110
    %v3165 = vsel %vm3137, %v3108, %v3109
    %v3166 = vsel %vm3137, %v3107, %v3108
    %v3167 = vsel %vm3137, %v3106, %v3107
    %v3168 = vsel %vm3137, %v3105, %v3106
    %v3169 = vsel %vm3137, %v3104, %v3105
    %v3170 = vsel %vm3137, %v3103, %v3104
    %v3171 = vsel %vm3137, %v3102, %v3103
    %v3172 = vsel %vm3137, %v3101, %v3102
    %v3173 = vsel %vm3137, %v3100, %v3101
    %v3174 = vsel %vm3137, %v3099, %v3100
    %v3175 = vsel %vm3137, %v3098, %v3099
    %v3176 = vsel %vm3137, %v3097, %v3098
    %v3177 = vsel %vm3137, %v3096, %v3097
    %v3178 = vsel %vm3137, %v3095, %v3096
    %v3179 = vsel %vm3137, %v3094, %v3095
    %v3180 = vsel %vm3137, %v3093, %v3094
    %v3181 = vsel %vm3137, %v3092, %v3093
    %v3182 = vsel %vm3137, %v3091, %v3092
    %v3183 = vsel %vm3137, %v3090, %v3091
    %v3184 = vsel %vm3137, %v3089, %v3090
    %v3185 = vsel %vm3137, %v3088, %v3089
    %v3186 = vsel %vm3137, %v3087, %v3088
    %v3187 = vsel %vm3137, %v3086, %v3087
    %v3188 = vsel %vm3137, %v3085, %v3086
    %v3189 = vsel %vm3137, %v3084, %v3085
    %v3190 = vsel %vm3137, %v3083, %v3084
    %v3191 = vsel %vm3137, %v3082, %v3083
    %v3192 = vsel %vm3137, %v3081, %v3082
    %v3193 = vsel %vm3137, %v3080, %v3081
    %v3194 = vsel %vm3137, %v3079, %v3080
    %v3195 = vsel %vm3137, %v3078, %v3079
    %v3196 = vsel %vm3137, %v3077, %v3078
    %v3197 = vsel %vm3137, %v3076, %v3077
    %v3198 = vsel %vm3137, %v3075, %v3076
    %v3199 = vsel %vm3137, %v3074, %v3075
    %v3200 = vsel %vm3137, %v3073, %v3074
    %v3201 = vsel %vm3137, %v3072, %v3073
    %v3202 = vsel %vm3137, %v3071, %v3072
    %v3203 = vsel %vm3137, %v3070, %v3071
    %v3204 = vsel %vm3137, %v3069, %v3070
    %v3205 = vsel %vm3137, %v3068, %v3069
    %v3206 = vsel %vm3137, %v3067, %v3068
    %v3207 = vsel %vm3137, %v3066, %v3067
    %v3208 = vsel %vm3137, %v3065, %v3066
    %v3209 = vsel %vm3137, %v3064, %v3065
    %v3210 = vsel %vm3137, %v3063, %v3064
    %v3211 = vsel %vm3137, %v3062, %v3063
    %v3212 = vsel %vm3137, %v3061, %v3062
    %v3213 = vsel %vm3137, %v3060, %v3061
    %v3214 = vsel %vm3137, %v3059, %v3060
    %v3215 = vsel %vm3137, %v3058, %v3059
    %v3216 = vsel %vm3137, %v3057, %v3058
    %v3217 = vsel %vm3137, %v3136, %v3057
    %vm3218 = vcmp.ge.s32.totalorder %v1053, 1
    %vm3219 = vcmp.ge.s32.totalorder %v1054, 1
    %vm3220 = vcmp.ge.s32.totalorder %v1055, 1
    %vm3221 = vcmp.ge.s32.totalorder %v1056, 1
    %vm3222 = vcmp.ge.s32.totalorder %v1057, 1
    %vm3223 = vcmp.ge.s32.totalorder %v1058, 1
    %vm3224 = vcmp.ge.s32.totalorder %v1059, 1
    %vm3225 = vcmp.ge.s32.totalorder %v1060, 1
    %vm3226 = vcmp.ge.s32.totalorder %v1061, 1
    %vm3227 = vcmp.ge.s32.totalorder %v1062, 1
    %vm3228 = vcmp.ge.s32.totalorder %v1063, 1
    %vm3229 = vcmp.ge.s32.totalorder %v1064, 1
    %vm3230 = vcmp.ge.s32.totalorder %v1065, 1
    %vm3231 = vcmp.ge.s32.totalorder %v1066, 1
    %vm3232 = vcmp.ge.s32.totalorder %v1067, 1
    %vm3233 = vcmp.ge.s32.totalorder %v1068, 1
    %vm3234 = vcmp.ge.s32.totalorder %v1069, 1
    %vm3235 = vcmp.ge.s32.totalorder %v1070, 1
    %vm3236 = vcmp.ge.s32.totalorder %v1071, 1
    %vm3237 = vcmp.ge.s32.totalorder %v1072, 1
    %vm3238 = vcmp.ge.s32.totalorder %v1073, 1
    %vm3239 = vcmp.ge.s32.totalorder %v1074, 1
    %vm3240 = vcmp.ge.s32.totalorder %v1075, 1
    %vm3241 = vcmp.ge.s32.totalorder %v1076, 1
    %vm3242 = vcmp.ge.s32.totalorder %v1077, 1
    %vm3243 = vcmp.ge.s32.totalorder %v1078, 1
    %vm3244 = vcmp.ge.s32.totalorder %v1079, 1
    %vm3245 = vcmp.ge.s32.totalorder %v1080, 1
    %vm3246 = vcmp.ge.s32.totalorder %v1081, 1
    %vm3247 = vcmp.ge.s32.totalorder %v1082, 1
    %vm3248 = vcmp.ge.s32.totalorder %v1083, 1
    %vm3249 = vcmp.ge.s32.totalorder %v1084, 1
    %vm3250 = vcmp.ge.s32.totalorder %v1085, 1
    %vm3251 = vcmp.ge.s32.totalorder %v1086, 1
    %vm3252 = vcmp.ge.s32.totalorder %v1087, 1
    %vm3253 = vcmp.ge.s32.totalorder %v1088, 1
    %vm3254 = vcmp.ge.s32.totalorder %v1089, 1
    %vm3255 = vcmp.ge.s32.totalorder %v1090, 1
    %vm3256 = vcmp.ge.s32.totalorder %v1091, 1
    %vm3257 = vcmp.ge.s32.totalorder %v1092, 1
    %vm3258 = vcmp.ge.s32.totalorder %v1093, 1
    %vm3259 = vcmp.ge.s32.totalorder %v1094, 1
    %vm3260 = vcmp.ge.s32.totalorder %v1095, 1
    %vm3261 = vcmp.ge.s32.totalorder %v1096, 1
    %vm3262 = vcmp.ge.s32.totalorder %v1097, 1
    %vm3263 = vcmp.ge.s32.totalorder %v1098, 1
    %vm3264 = vcmp.ge.s32.totalorder %v1099, 1
    %vm3265 = vcmp.ge.s32.totalorder %v1100, 1
    %vm3266 = vcmp.ge.s32.totalorder %v1101, 1
    %vm3267 = vcmp.ge.s32.totalorder %v1102, 1
    %vm3268 = vcmp.ge.s32.totalorder %v1103, 1
    %vm3269 = vcmp.ge.s32.totalorder %v1104, 1
    %vm3270 = vcmp.ge.s32.totalorder %v1105, 1
    %vm3271 = vcmp.ge.s32.totalorder %v1106, 1
    %vm3272 = vcmp.ge.s32.totalorder %v1107, 1
    %vm3273 = vcmp.ge.s32.totalorder %v1108, 1
    %vm3274 = vcmp.ge.s32.totalorder %v1109, 1
    %vm3275 = vcmp.ge.s32.totalorder %v1110, 1
    %vm3276 = vcmp.ge.s32.totalorder %v1111, 1
    %vm3277 = vcmp.ge.s32.totalorder %v1112, 1
    %vm3278 = vcmp.ge.s32.totalorder %v1113, 1
    %vm3279 = vcmp.ge.s32.totalorder %v1114, 1
    %vm3280 = vcmp.ge.s32.totalorder %v1115, 1
    %vm3281 = vcmp.ge.s32.totalorder %v1116, 1
    %vm3282 = vcmp.ge.s32.totalorder %v1117, 1
    %vm3283 = vcmp.ge.s32.totalorder %v1118, 1
    %vm3284 = vcmp.ge.s32.totalorder %v1119, 1
    %vm3285 = vcmp.ge.s32.totalorder %v1120, 1
    %vm3286 = vcmp.ge.s32.totalorder %v1121, 1
    %vm3287 = vcmp.ge.s32.totalorder %v1122, 1
    %vm3288 = vcmp.ge.s32.totalorder %v1123, 1
    %vm3289 = vcmp.ge.s32.totalorder %v1124, 1
    %vm3290 = vcmp.ge.s32.totalorder %v1125, 1
    %vm3291 = vcmp.ge.s32.totalorder %v1126, 1
    %vm3292 = vcmp.ge.s32.totalorder %v1127, 1
    %vm3293 = vcmp.ge.s32.totalorder %v1128, 1
    %vm3294 = vcmp.ge.s32.totalorder %v1129, 1
    %vm3295 = vcmp.ge.s32.totalorder %v1130, 1
    %vm3296 = vcmp.ge.s32.totalorder %v1131, 1
    %vm3297 = vcmp.ge.s32.totalorder %v1132, 1
    %v3298 = vsel %vm3218, %v3217, 0.0
    %v3299 = vsel %vm3219, %v3216, 0.0
    %v3300 = vsel %vm3220, %v3215, 0.0
    %v3301 = vsel %vm3221, %v3214, 0.0
    %v3302 = vsel %vm3222, %v3213, 0.0
    %v3303 = vsel %vm3223, %v3212, 0.0
    %v3304 = vsel %vm3224, %v3211, 0.0
    %v3305 = vsel %vm3225, %v3210, 0.0
    %v3306 = vsel %vm3226, %v3209, 0.0
    %v3307 = vsel %vm3227, %v3208, 0.0
    %v3308 = vsel %vm3228, %v3207, 0.0
    %v3309 = vsel %vm3229, %v3206, 0.0
    %v3310 = vsel %vm3230, %v3205, 0.0
    %v3311 = vsel %vm3231, %v3204, 0.0
    %v3312 = vsel %vm3232, %v3203, 0.0
    %v3313 = vsel %vm3233, %v3202, 0.0
    %v3314 = vsel %vm3234, %v3201, 0.0
    %v3315 = vsel %vm3235, %v3200, 0.0
    %v3316 = vsel %vm3236, %v3199, 0.0
    %v3317 = vsel %vm3237, %v3198, 0.0
    %v3318 = vsel %vm3238, %v3197, 0.0
    %v3319 = vsel %vm3239, %v3196, 0.0
    %v3320 = vsel %vm3240, %v3195, 0.0
    %v3321 = vsel %vm3241, %v3194, 0.0
    %v3322 = vsel %vm3242, %v3193, 0.0
    %v3323 = vsel %vm3243, %v3192, 0.0
    %v3324 = vsel %vm3244, %v3191, 0.0
    %v3325 = vsel %vm3245, %v3190, 0.0
    %v3326 = vsel %vm3246, %v3189, 0.0
    %v3327 = vsel %vm3247, %v3188, 0.0
    %v3328 = vsel %vm3248, %v3187, 0.0
    %v3329 = vsel %vm3249, %v3186, 0.0
    %v3330 = vsel %vm3250, %v3185, 0.0
    %v3331 = vsel %vm3251, %v3184, 0.0
    %v3332 = vsel %vm3252, %v3183, 0.0
    %v3333 = vsel %vm3253, %v3182, 0.0
    %v3334 = vsel %vm3254, %v3181, 0.0
    %v3335 = vsel %vm3255, %v3180, 0.0
    %v3336 = vsel %vm3256, %v3179, 0.0
    %v3337 = vsel %vm3257, %v3178, 0.0
    %v3338 = vsel %vm3258, %v3177, 0.0
    %v3339 = vsel %vm3259, %v3176, 0.0
    %v3340 = vsel %vm3260, %v3175, 0.0
    %v3341 = vsel %vm3261, %v3174, 0.0
    %v3342 = vsel %vm3262, %v3173, 0.0
    %v3343 = vsel %vm3263, %v3172, 0.0
    %v3344 = vsel %vm3264, %v3171, 0.0
    %v3345 = vsel %vm3265, %v3170, 0.0
    %v3346 = vsel %vm3266, %v3169, 0.0
    %v3347 = vsel %vm3267, %v3168, 0.0
    %v3348 = vsel %vm3268, %v3167, 0.0
    %v3349 = vsel %vm3269, %v3166, 0.0
    %v3350 = vsel %vm3270, %v3165, 0.0
    %v3351 = vsel %vm3271, %v3164, 0.0
    %v3352 = vsel %vm3272, %v3163, 0.0
    %v3353 = vsel %vm3273, %v3162, 0.0
    %v3354 = vsel %vm3274, %v3161, 0.0
    %v3355 = vsel %vm3275, %v3160, 0.0
    %v3356 = vsel %vm3276, %v3159, 0.0
    %v3357 = vsel %vm3277, %v3158, 0.0
    %v3358 = vsel %vm3278, %v3157, 0.0
    %v3359 = vsel %vm3279, %v3156, 0.0
    %v3360 = vsel %vm3280, %v3155, 0.0
    %v3361 = vsel %vm3281, %v3154, 0.0
    %v3362 = vsel %vm3282, %v3153, 0.0
    %v3363 = vsel %vm3283, %v3152, 0.0
    %v3364 = vsel %vm3284, %v3151, 0.0
    %v3365 = vsel %vm3285, %v3150, 0.0
    %v3366 = vsel %vm3286, %v3149, 0.0
    %v3367 = vsel %vm3287, %v3148, 0.0
    %v3368 = vsel %vm3288, %v3147, 0.0
    %v3369 = vsel %vm3289, %v3146, 0.0
    %v3370 = vsel %vm3290, %v3145, 0.0
    %v3371 = vsel %vm3291, %v3144, 0.0
    %v3372 = vsel %vm3292, %v3143, 0.0
    %v3373 = vsel %vm3293, %v3142, 0.0
    %v3374 = vsel %vm3294, %v3141, 0.0
    %v3375 = vsel %vm3295, %v3140, 0.0
    %v3376 = vsel %vm3296, %v3139, 0.0
    %v3377 = vsel %vm3297, %v3138, 0.0
    %v3378 = vmul.f32 %v3298, 0.21300554
    %v3379 = vmul.f32 %v3299, 0.21300554
    %v3380 = vmul.f32 %v3300, 0.21300554
    %v3381 = vmul.f32 %v3301, 0.21300554
    %v3382 = vmul.f32 %v3302, 0.21300554
    %v3383 = vmul.f32 %v3303, 0.21300554
    %v3384 = vmul.f32 %v3304, 0.21300554
    %v3385 = vmul.f32 %v3305, 0.21300554
    %v3386 = vmul.f32 %v3306, 0.21300554
    %v3387 = vmul.f32 %v3307, 0.21300554
    %v3388 = vmul.f32 %v3308, 0.21300554
    %v3389 = vmul.f32 %v3309, 0.21300554
    %v3390 = vmul.f32 %v3310, 0.21300554
    %v3391 = vmul.f32 %v3311, 0.21300554
    %v3392 = vmul.f32 %v3312, 0.21300554
    %v3393 = vmul.f32 %v3313, 0.21300554
    %v3394 = vmul.f32 %v3314, 0.21300554
    %v3395 = vmul.f32 %v3315, 0.21300554
    %v3396 = vmul.f32 %v3316, 0.21300554
    %v3397 = vmul.f32 %v3317, 0.21300554
    %v3398 = vmul.f32 %v3318, 0.21300554
    %v3399 = vmul.f32 %v3319, 0.21300554
    %v3400 = vmul.f32 %v3320, 0.21300554
    %v3401 = vmul.f32 %v3321, 0.21300554
    %v3402 = vmul.f32 %v3322, 0.21300554
    %v3403 = vmul.f32 %v3323, 0.21300554
    %v3404 = vmul.f32 %v3324, 0.21300554
    %v3405 = vmul.f32 %v3325, 0.21300554
    %v3406 = vmul.f32 %v3326, 0.21300554
    %v3407 = vmul.f32 %v3327, 0.21300554
    %v3408 = vmul.f32 %v3328, 0.21300554
    %v3409 = vmul.f32 %v3329, 0.21300554
    %v3410 = vmul.f32 %v3330, 0.21300554
    %v3411 = vmul.f32 %v3331, 0.21300554
    %v3412 = vmul.f32 %v3332, 0.21300554
    %v3413 = vmul.f32 %v3333, 0.21300554
    %v3414 = vmul.f32 %v3334, 0.21300554
    %v3415 = vmul.f32 %v3335, 0.21300554
    %v3416 = vmul.f32 %v3336, 0.21300554
    %v3417 = vmul.f32 %v3337, 0.21300554
    %v3418 = vmul.f32 %v3338, 0.21300554
    %v3419 = vmul.f32 %v3339, 0.21300554
    %v3420 = vmul.f32 %v3340, 0.21300554
    %v3421 = vmul.f32 %v3341, 0.21300554
    %v3422 = vmul.f32 %v3342, 0.21300554
    %v3423 = vmul.f32 %v3343, 0.21300554
    %v3424 = vmul.f32 %v3344, 0.21300554
    %v3425 = vmul.f32 %v3345, 0.21300554
    %v3426 = vmul.f32 %v3346, 0.21300554
    %v3427 = vmul.f32 %v3347, 0.21300554
    %v3428 = vmul.f32 %v3348, 0.21300554
    %v3429 = vmul.f32 %v3349, 0.21300554
    %v3430 = vmul.f32 %v3350, 0.21300554
    %v3431 = vmul.f32 %v3351, 0.21300554
    %v3432 = vmul.f32 %v3352, 0.21300554
    %v3433 = vmul.f32 %v3353, 0.21300554
    %v3434 = vmul.f32 %v3354, 0.21300554
    %v3435 = vmul.f32 %v3355, 0.21300554
    %v3436 = vmul.f32 %v3356, 0.21300554
    %v3437 = vmul.f32 %v3357, 0.21300554
    %v3438 = vmul.f32 %v3358, 0.21300554
    %v3439 = vmul.f32 %v3359, 0.21300554
    %v3440 = vmul.f32 %v3360, 0.21300554
    %v3441 = vmul.f32 %v3361, 0.21300554
    %v3442 = vmul.f32 %v3362, 0.21300554
    %v3443 = vmul.f32 %v3363, 0.21300554
    %v3444 = vmul.f32 %v3364, 0.21300554
    %v3445 = vmul.f32 %v3365, 0.21300554
    %v3446 = vmul.f32 %v3366, 0.21300554
    %v3447 = vmul.f32 %v3367, 0.21300554
    %v3448 = vmul.f32 %v3368, 0.21300554
    %v3449 = vmul.f32 %v3369, 0.21300554
    %v3450 = vmul.f32 %v3370, 0.21300554
    %v3451 = vmul.f32 %v3371, 0.21300554
    %v3452 = vmul.f32 %v3372, 0.21300554
    %v3453 = vmul.f32 %v3373, 0.21300554
    %v3454 = vmul.f32 %v3374, 0.21300554
    %v3455 = vmul.f32 %v3375, 0.21300554
    %v3456 = vmul.f32 %v3376, 0.21300554
    %v3457 = vmul.f32 %v3377, 0.21300554
    %v3458 = vadd.f32 %v2977, %v3378
    %v3459 = vadd.f32 %v2978, %v3379
    %v3460 = vadd.f32 %v2979, %v3380
    %v3461 = vadd.f32 %v2980, %v3381
    %v3462 = vadd.f32 %v2981, %v3382
    %v3463 = vadd.f32 %v2982, %v3383
    %v3464 = vadd.f32 %v2983, %v3384
    %v3465 = vadd.f32 %v2984, %v3385
    %v3466 = vadd.f32 %v2985, %v3386
    %v3467 = vadd.f32 %v2986, %v3387
    %v3468 = vadd.f32 %v2987, %v3388
    %v3469 = vadd.f32 %v2988, %v3389
    %v3470 = vadd.f32 %v2989, %v3390
    %v3471 = vadd.f32 %v2990, %v3391
    %v3472 = vadd.f32 %v2991, %v3392
    %v3473 = vadd.f32 %v2992, %v3393
    %v3474 = vadd.f32 %v2993, %v3394
    %v3475 = vadd.f32 %v2994, %v3395
    %v3476 = vadd.f32 %v2995, %v3396
    %v3477 = vadd.f32 %v2996, %v3397
    %v3478 = vadd.f32 %v2997, %v3398
    %v3479 = vadd.f32 %v2998, %v3399
    %v3480 = vadd.f32 %v2999, %v3400
    %v3481 = vadd.f32 %v3000, %v3401
    %v3482 = vadd.f32 %v3001, %v3402
    %v3483 = vadd.f32 %v3002, %v3403
    %v3484 = vadd.f32 %v3003, %v3404
    %v3485 = vadd.f32 %v3004, %v3405
    %v3486 = vadd.f32 %v3005, %v3406
    %v3487 = vadd.f32 %v3006, %v3407
    %v3488 = vadd.f32 %v3007, %v3408
    %v3489 = vadd.f32 %v3008, %v3409
    %v3490 = vadd.f32 %v3009, %v3410
    %v3491 = vadd.f32 %v3010, %v3411
    %v3492 = vadd.f32 %v3011, %v3412
    %v3493 = vadd.f32 %v3012, %v3413
    %v3494 = vadd.f32 %v3013, %v3414
    %v3495 = vadd.f32 %v3014, %v3415
    %v3496 = vadd.f32 %v3015, %v3416
    %v3497 = vadd.f32 %v3016, %v3417
    %v3498 = vadd.f32 %v3017, %v3418
    %v3499 = vadd.f32 %v3018, %v3419
    %v3500 = vadd.f32 %v3019, %v3420
    %v3501 = vadd.f32 %v3020, %v3421
    %v3502 = vadd.f32 %v3021, %v3422
    %v3503 = vadd.f32 %v3022, %v3423
    %v3504 = vadd.f32 %v3023, %v3424
    %v3505 = vadd.f32 %v3024, %v3425
    %v3506 = vadd.f32 %v3025, %v3426
    %v3507 = vadd.f32 %v3026, %v3427
    %v3508 = vadd.f32 %v3027, %v3428
    %v3509 = vadd.f32 %v3028, %v3429
    %v3510 = vadd.f32 %v3029, %v3430
    %v3511 = vadd.f32 %v3030, %v3431
    %v3512 = vadd.f32 %v3031, %v3432
    %v3513 = vadd.f32 %v3032, %v3433
    %v3514 = vadd.f32 %v3033, %v3434
    %v3515 = vadd.f32 %v3034, %v3435
    %v3516 = vadd.f32 %v3035, %v3436
    %v3517 = vadd.f32 %v3036, %v3437
    %v3518 = vadd.f32 %v3037, %v3438
    %v3519 = vadd.f32 %v3038, %v3439
    %v3520 = vadd.f32 %v3039, %v3440
    %v3521 = vadd.f32 %v3040, %v3441
    %v3522 = vadd.f32 %v3041, %v3442
    %v3523 = vadd.f32 %v3042, %v3443
    %v3524 = vadd.f32 %v3043, %v3444
    %v3525 = vadd.f32 %v3044, %v3445
    %v3526 = vadd.f32 %v3045, %v3446
    %v3527 = vadd.f32 %v3046, %v3447
    %v3528 = vadd.f32 %v3047, %v3448
    %v3529 = vadd.f32 %v3048, %v3449
    %v3530 = vadd.f32 %v3049, %v3450
    %v3531 = vadd.f32 %v3050, %v3451
    %v3532 = vadd.f32 %v3051, %v3452
    %v3533 = vadd.f32 %v3052, %v3453
    %v3534 = vadd.f32 %v3053, %v3454
    %v3535 = vadd.f32 %v3054, %v3455
    %v3536 = vadd.f32 %v3055, %v3456
    %v3537 = vadd.f32 %v3056, %v3457
    %v3538 = vmul.f32 %v733, 0.26601171
    %v3539 = vmul.f32 %v736, 0.26601171
    %v3540 = vmul.f32 %v739, 0.26601171
    %v3541 = vmul.f32 %v742, 0.26601171
    %v3542 = vmul.f32 %v745, 0.26601171
    %v3543 = vmul.f32 %v748, 0.26601171
    %v3544 = vmul.f32 %v751, 0.26601171
    %v3545 = vmul.f32 %v754, 0.26601171
    %v3546 = vmul.f32 %v757, 0.26601171
    %v3547 = vmul.f32 %v760, 0.26601171
    %v3548 = vmul.f32 %v763, 0.26601171
    %v3549 = vmul.f32 %v766, 0.26601171
    %v3550 = vmul.f32 %v769, 0.26601171
    %v3551 = vmul.f32 %v772, 0.26601171
    %v3552 = vmul.f32 %v775, 0.26601171
    %v3553 = vmul.f32 %v778, 0.26601171
    %v3554 = vmul.f32 %v781, 0.26601171
    %v3555 = vmul.f32 %v784, 0.26601171
    %v3556 = vmul.f32 %v787, 0.26601171
    %v3557 = vmul.f32 %v790, 0.26601171
    %v3558 = vmul.f32 %v793, 0.26601171
    %v3559 = vmul.f32 %v796, 0.26601171
    %v3560 = vmul.f32 %v799, 0.26601171
    %v3561 = vmul.f32 %v802, 0.26601171
    %v3562 = vmul.f32 %v805, 0.26601171
    %v3563 = vmul.f32 %v808, 0.26601171
    %v3564 = vmul.f32 %v811, 0.26601171
    %v3565 = vmul.f32 %v814, 0.26601171
    %v3566 = vmul.f32 %v817, 0.26601171
    %v3567 = vmul.f32 %v820, 0.26601171
    %v3568 = vmul.f32 %v823, 0.26601171
    %v3569 = vmul.f32 %v826, 0.26601171
    %v3570 = vmul.f32 %v829, 0.26601171
    %v3571 = vmul.f32 %v832, 0.26601171
    %v3572 = vmul.f32 %v835, 0.26601171
    %v3573 = vmul.f32 %v838, 0.26601171
    %v3574 = vmul.f32 %v841, 0.26601171
    %v3575 = vmul.f32 %v844, 0.26601171
    %v3576 = vmul.f32 %v847, 0.26601171
    %v3577 = vmul.f32 %v850, 0.26601171
    %v3578 = vmul.f32 %v853, 0.26601171
    %v3579 = vmul.f32 %v856, 0.26601171
    %v3580 = vmul.f32 %v859, 0.26601171
    %v3581 = vmul.f32 %v862, 0.26601171
    %v3582 = vmul.f32 %v865, 0.26601171
    %v3583 = vmul.f32 %v868, 0.26601171
    %v3584 = vmul.f32 %v871, 0.26601171
    %v3585 = vmul.f32 %v874, 0.26601171
    %v3586 = vmul.f32 %v877, 0.26601171
    %v3587 = vmul.f32 %v880, 0.26601171
    %v3588 = vmul.f32 %v883, 0.26601171
    %v3589 = vmul.f32 %v886, 0.26601171
    %v3590 = vmul.f32 %v889, 0.26601171
    %v3591 = vmul.f32 %v892, 0.26601171
    %v3592 = vmul.f32 %v895, 0.26601171
    %v3593 = vmul.f32 %v898, 0.26601171
    %v3594 = vmul.f32 %v901, 0.26601171
    %v3595 = vmul.f32 %v904, 0.26601171
    %v3596 = vmul.f32 %v907, 0.26601171
    %v3597 = vmul.f32 %v910, 0.26601171
    %v3598 = vmul.f32 %v913, 0.26601171
    %v3599 = vmul.f32 %v916, 0.26601171
    %v3600 = vmul.f32 %v919, 0.26601171
    %v3601 = vmul.f32 %v922, 0.26601171
    %v3602 = vmul.f32 %v925, 0.26601171
    %v3603 = vmul.f32 %v928, 0.26601171
    %v3604 = vmul.f32 %v931, 0.26601171
    %v3605 = vmul.f32 %v934, 0.26601171
    %v3606 = vmul.f32 %v937, 0.26601171
    %v3607 = vmul.f32 %v940, 0.26601171
    %v3608 = vmul.f32 %v943, 0.26601171
    %v3609 = vmul.f32 %v946, 0.26601171
    %v3610 = vmul.f32 %v949, 0.26601171
    %v3611 = vmul.f32 %v952, 0.26601171
    %v3612 = vmul.f32 %v955, 0.26601171
    %v3613 = vmul.f32 %v958, 0.26601171
    %v3614 = vmul.f32 %v961, 0.26601171
    %v3615 = vmul.f32 %v964, 0.26601171
    %v3616 = vmul.f32 %v967, 0.26601171
    %v3617 = vmul.f32 %v970, 0.26601171
    %v3618 = vadd.f32 %v3458, %v3538
    %v3619 = vadd.f32 %v3459, %v3539
    %v3620 = vadd.f32 %v3460, %v3540
    %v3621 = vadd.f32 %v3461, %v3541
    %v3622 = vadd.f32 %v3462, %v3542
    %v3623 = vadd.f32 %v3463, %v3543
    %v3624 = vadd.f32 %v3464, %v3544
    %v3625 = vadd.f32 %v3465, %v3545
    %v3626 = vadd.f32 %v3466, %v3546
    %v3627 = vadd.f32 %v3467, %v3547
    %v3628 = vadd.f32 %v3468, %v3548
    %v3629 = vadd.f32 %v3469, %v3549
    %v3630 = vadd.f32 %v3470, %v3550
    %v3631 = vadd.f32 %v3471, %v3551
    %v3632 = vadd.f32 %v3472, %v3552
    %v3633 = vadd.f32 %v3473, %v3553
    %v3634 = vadd.f32 %v3474, %v3554
    %v3635 = vadd.f32 %v3475, %v3555
    %v3636 = vadd.f32 %v3476, %v3556
    %v3637 = vadd.f32 %v3477, %v3557
    %v3638 = vadd.f32 %v3478, %v3558
    %v3639 = vadd.f32 %v3479, %v3559
    %v3640 = vadd.f32 %v3480, %v3560
    %v3641 = vadd.f32 %v3481, %v3561
    %v3642 = vadd.f32 %v3482, %v3562
    %v3643 = vadd.f32 %v3483, %v3563
    %v3644 = vadd.f32 %v3484, %v3564
    %v3645 = vadd.f32 %v3485, %v3565
    %v3646 = vadd.f32 %v3486, %v3566
    %v3647 = vadd.f32 %v3487, %v3567
    %v3648 = vadd.f32 %v3488, %v3568
    %v3649 = vadd.f32 %v3489, %v3569
    %v3650 = vadd.f32 %v3490, %v3570
    %v3651 = vadd.f32 %v3491, %v3571
    %v3652 = vadd.f32 %v3492, %v3572
    %v3653 = vadd.f32 %v3493, %v3573
    %v3654 = vadd.f32 %v3494, %v3574
    %v3655 = vadd.f32 %v3495, %v3575
    %v3656 = vadd.f32 %v3496, %v3576
    %v3657 = vadd.f32 %v3497, %v3577
    %v3658 = vadd.f32 %v3498, %v3578
    %v3659 = vadd.f32 %v3499, %v3579
    %v3660 = vadd.f32 %v3500, %v3580
    %v3661 = vadd.f32 %v3501, %v3581
    %v3662 = vadd.f32 %v3502, %v3582
    %v3663 = vadd.f32 %v3503, %v3583
    %v3664 = vadd.f32 %v3504, %v3584
    %v3665 = vadd.f32 %v3505, %v3585
    %v3666 = vadd.f32 %v3506, %v3586
    %v3667 = vadd.f32 %v3507, %v3587
    %v3668 = vadd.f32 %v3508, %v3588
    %v3669 = vadd.f32 %v3509, %v3589
    %v3670 = vadd.f32 %v3510, %v3590
    %v3671 = vadd.f32 %v3511, %v3591
    %v3672 = vadd.f32 %v3512, %v3592
    %v3673 = vadd.f32 %v3513, %v3593
    %v3674 = vadd.f32 %v3514, %v3594
    %v3675 = vadd.f32 %v3515, %v3595
    %v3676 = vadd.f32 %v3516, %v3596
    %v3677 = vadd.f32 %v3517, %v3597
    %v3678 = vadd.f32 %v3518, %v3598
    %v3679 = vadd.f32 %v3519, %v3599
    %v3680 = vadd.f32 %v3520, %v3600
    %v3681 = vadd.f32 %v3521, %v3601
    %v3682 = vadd.f32 %v3522, %v3602
    %v3683 = vadd.f32 %v3523, %v3603
    %v3684 = vadd.f32 %v3524, %v3604
    %v3685 = vadd.f32 %v3525, %v3605
    %v3686 = vadd.f32 %v3526, %v3606
    %v3687 = vadd.f32 %v3527, %v3607
    %v3688 = vadd.f32 %v3528, %v3608
    %v3689 = vadd.f32 %v3529, %v3609
    %v3690 = vadd.f32 %v3530, %v3610
    %v3691 = vadd.f32 %v3531, %v3611
    %v3692 = vadd.f32 %v3532, %v3612
    %v3693 = vadd.f32 %v3533, %v3613
    %v3694 = vadd.f32 %v3534, %v3614
    %v3695 = vadd.f32 %v3535, %v3615
    %v3696 = vadd.f32 %v3536, %v3616
    %v3697 = vadd.f32 %v3537, %v3617
    %v3698 = vrot.slane %v733, 1
    %v3699 = vrot.slane %v736, 1
    %v3700 = vrot.slane %v739, 1
    %v3701 = vrot.slane %v742, 1
    %v3702 = vrot.slane %v745, 1
    %v3703 = vrot.slane %v748, 1
    %v3704 = vrot.slane %v751, 1
    %v3705 = vrot.slane %v754, 1
    %v3706 = vrot.slane %v757, 1
    %v3707 = vrot.slane %v760, 1
    %v3708 = vrot.slane %v763, 1
    %v3709 = vrot.slane %v766, 1
    %v3710 = vrot.slane %v769, 1
    %v3711 = vrot.slane %v772, 1
    %v3712 = vrot.slane %v775, 1
    %v3713 = vrot.slane %v778, 1
    %v3714 = vrot.slane %v781, 1
    %v3715 = vrot.slane %v784, 1
    %v3716 = vrot.slane %v787, 1
    %v3717 = vrot.slane %v790, 1
    %v3718 = vrot.slane %v793, 1
    %v3719 = vrot.slane %v796, 1
    %v3720 = vrot.slane %v799, 1
    %v3721 = vrot.slane %v802, 1
    %v3722 = vrot.slane %v805, 1
    %v3723 = vrot.slane %v808, 1
    %v3724 = vrot.slane %v811, 1
    %v3725 = vrot.slane %v814, 1
    %v3726 = vrot.slane %v817, 1
    %v3727 = vrot.slane %v820, 1
    %v3728 = vrot.slane %v823, 1
    %v3729 = vrot.slane %v826, 1
    %v3730 = vrot.slane %v829, 1
    %v3731 = vrot.slane %v832, 1
    %v3732 = vrot.slane %v835, 1
    %v3733 = vrot.slane %v838, 1
    %v3734 = vrot.slane %v841, 1
    %v3735 = vrot.slane %v844, 1
    %v3736 = vrot.slane %v847, 1
    %v3737 = vrot.slane %v850, 1
    %v3738 = vrot.slane %v853, 1
    %v3739 = vrot.slane %v856, 1
    %v3740 = vrot.slane %v859, 1
    %v3741 = vrot.slane %v862, 1
    %v3742 = vrot.slane %v865, 1
    %v3743 = vrot.slane %v868, 1
    %v3744 = vrot.slane %v871, 1
    %v3745 = vrot.slane %v874, 1
    %v3746 = vrot.slane %v877, 1
    %v3747 = vrot.slane %v880, 1
    %v3748 = vrot.slane %v883, 1
    %v3749 = vrot.slane %v886, 1
    %v3750 = vrot.slane %v889, 1
    %v3751 = vrot.slane %v892, 1
    %v3752 = vrot.slane %v895, 1
    %v3753 = vrot.slane %v898, 1
    %v3754 = vrot.slane %v901, 1
    %v3755 = vrot.slane %v904, 1
    %v3756 = vrot.slane %v907, 1
    %v3757 = vrot.slane %v910, 1
    %v3758 = vrot.slane %v913, 1
    %v3759 = vrot.slane %v916, 1
    %v3760 = vrot.slane %v919, 1
    %v3761 = vrot.slane %v922, 1
    %v3762 = vrot.slane %v925, 1
    %v3763 = vrot.slane %v928, 1
    %v3764 = vrot.slane %v931, 1
    %v3765 = vrot.slane %v934, 1
    %v3766 = vrot.slane %v937, 1
    %v3767 = vrot.slane %v940, 1
    %v3768 = vrot.slane %v943, 1
    %v3769 = vrot.slane %v946, 1
    %v3770 = vrot.slane %v949, 1
    %v3771 = vrot.slane %v952, 1
    %v3772 = vrot.slane %v955, 1
    %v3773 = vrot.slane %v958, 1
    %v3774 = vrot.slane %v961, 1
    %v3775 = vrot.slane %v964, 1
    %v3776 = vrot.slane %v967, 1
    %v3777 = vrot.slane %v970, 1
    %vm3778 = vcmp.lt.s32.totalorder %v973, 7
    %v3779 = vsel %vm3778, %v3776, %v3777
    %v3780 = vsel %vm3778, %v3775, %v3776
    %v3781 = vsel %vm3778, %v3774, %v3775
    %v3782 = vsel %vm3778, %v3773, %v3774
    %v3783 = vsel %vm3778, %v3772, %v3773
    %v3784 = vsel %vm3778, %v3771, %v3772
    %v3785 = vsel %vm3778, %v3770, %v3771
    %v3786 = vsel %vm3778, %v3769, %v3770
    %v3787 = vsel %vm3778, %v3768, %v3769
    %v3788 = vsel %vm3778, %v3767, %v3768
    %v3789 = vsel %vm3778, %v3766, %v3767
    %v3790 = vsel %vm3778, %v3765, %v3766
    %v3791 = vsel %vm3778, %v3764, %v3765
    %v3792 = vsel %vm3778, %v3763, %v3764
    %v3793 = vsel %vm3778, %v3762, %v3763
    %v3794 = vsel %vm3778, %v3761, %v3762
    %v3795 = vsel %vm3778, %v3760, %v3761
    %v3796 = vsel %vm3778, %v3759, %v3760
    %v3797 = vsel %vm3778, %v3758, %v3759
    %v3798 = vsel %vm3778, %v3757, %v3758
    %v3799 = vsel %vm3778, %v3756, %v3757
    %v3800 = vsel %vm3778, %v3755, %v3756
    %v3801 = vsel %vm3778, %v3754, %v3755
    %v3802 = vsel %vm3778, %v3753, %v3754
    %v3803 = vsel %vm3778, %v3752, %v3753
    %v3804 = vsel %vm3778, %v3751, %v3752
    %v3805 = vsel %vm3778, %v3750, %v3751
    %v3806 = vsel %vm3778, %v3749, %v3750
    %v3807 = vsel %vm3778, %v3748, %v3749
    %v3808 = vsel %vm3778, %v3747, %v3748
    %v3809 = vsel %vm3778, %v3746, %v3747
    %v3810 = vsel %vm3778, %v3745, %v3746
    %v3811 = vsel %vm3778, %v3744, %v3745
    %v3812 = vsel %vm3778, %v3743, %v3744
    %v3813 = vsel %vm3778, %v3742, %v3743
    %v3814 = vsel %vm3778, %v3741, %v3742
    %v3815 = vsel %vm3778, %v3740, %v3741
    %v3816 = vsel %vm3778, %v3739, %v3740
    %v3817 = vsel %vm3778, %v3738, %v3739
    %v3818 = vsel %vm3778, %v3737, %v3738
    %v3819 = vsel %vm3778, %v3736, %v3737
    %v3820 = vsel %vm3778, %v3735, %v3736
    %v3821 = vsel %vm3778, %v3734, %v3735
    %v3822 = vsel %vm3778, %v3733, %v3734
    %v3823 = vsel %vm3778, %v3732, %v3733
    %v3824 = vsel %vm3778, %v3731, %v3732
    %v3825 = vsel %vm3778, %v3730, %v3731
    %v3826 = vsel %vm3778, %v3729, %v3730
    %v3827 = vsel %vm3778, %v3728, %v3729
    %v3828 = vsel %vm3778, %v3727, %v3728
    %v3829 = vsel %vm3778, %v3726, %v3727
    %v3830 = vsel %vm3778, %v3725, %v3726
    %v3831 = vsel %vm3778, %v3724, %v3725
    %v3832 = vsel %vm3778, %v3723, %v3724
    %v3833 = vsel %vm3778, %v3722, %v3723
    %v3834 = vsel %vm3778, %v3721, %v3722
    %v3835 = vsel %vm3778, %v3720, %v3721
    %v3836 = vsel %vm3778, %v3719, %v3720
    %v3837 = vsel %vm3778, %v3718, %v3719
    %v3838 = vsel %vm3778, %v3717, %v3718
    %v3839 = vsel %vm3778, %v3716, %v3717
    %v3840 = vsel %vm3778, %v3715, %v3716
    %v3841 = vsel %vm3778, %v3714, %v3715
    %v3842 = vsel %vm3778, %v3713, %v3714
    %v3843 = vsel %vm3778, %v3712, %v3713
    %v3844 = vsel %vm3778, %v3711, %v3712
    %v3845 = vsel %vm3778, %v3710, %v3711
    %v3846 = vsel %vm3778, %v3709, %v3710
    %v3847 = vsel %vm3778, %v3708, %v3709
    %v3848 = vsel %vm3778, %v3707, %v3708
    %v3849 = vsel %vm3778, %v3706, %v3707
    %v3850 = vsel %vm3778, %v3705, %v3706
    %v3851 = vsel %vm3778, %v3704, %v3705
    %v3852 = vsel %vm3778, %v3703, %v3704
    %v3853 = vsel %vm3778, %v3702, %v3703
    %v3854 = vsel %vm3778, %v3701, %v3702
    %v3855 = vsel %vm3778, %v3700, %v3701
    %v3856 = vsel %vm3778, %v3699, %v3700
    %v3857 = vsel %vm3778, %v3698, %v3699
    %v3858 = vsel %vm3778, %v3777, %v3698
    %vm3859 = vcmp.lt.s32.totalorder %v1053, 15
    %vm3860 = vcmp.lt.s32.totalorder %v1054, 15
    %vm3861 = vcmp.lt.s32.totalorder %v1055, 15
    %vm3862 = vcmp.lt.s32.totalorder %v1056, 15
    %vm3863 = vcmp.lt.s32.totalorder %v1057, 15
    %vm3864 = vcmp.lt.s32.totalorder %v1058, 15
    %vm3865 = vcmp.lt.s32.totalorder %v1059, 15
    %vm3866 = vcmp.lt.s32.totalorder %v1060, 15
    %vm3867 = vcmp.lt.s32.totalorder %v1061, 15
    %vm3868 = vcmp.lt.s32.totalorder %v1062, 15
    %vm3869 = vcmp.lt.s32.totalorder %v1063, 15
    %vm3870 = vcmp.lt.s32.totalorder %v1064, 15
    %vm3871 = vcmp.lt.s32.totalorder %v1065, 15
    %vm3872 = vcmp.lt.s32.totalorder %v1066, 15
    %vm3873 = vcmp.lt.s32.totalorder %v1067, 15
    %vm3874 = vcmp.lt.s32.totalorder %v1068, 15
    %vm3875 = vcmp.lt.s32.totalorder %v1069, 15
    %vm3876 = vcmp.lt.s32.totalorder %v1070, 15
    %vm3877 = vcmp.lt.s32.totalorder %v1071, 15
    %vm3878 = vcmp.lt.s32.totalorder %v1072, 15
    %vm3879 = vcmp.lt.s32.totalorder %v1073, 15
    %vm3880 = vcmp.lt.s32.totalorder %v1074, 15
    %vm3881 = vcmp.lt.s32.totalorder %v1075, 15
    %vm3882 = vcmp.lt.s32.totalorder %v1076, 15
    %vm3883 = vcmp.lt.s32.totalorder %v1077, 15
    %vm3884 = vcmp.lt.s32.totalorder %v1078, 15
    %vm3885 = vcmp.lt.s32.totalorder %v1079, 15
    %vm3886 = vcmp.lt.s32.totalorder %v1080, 15
    %vm3887 = vcmp.lt.s32.totalorder %v1081, 15
    %vm3888 = vcmp.lt.s32.totalorder %v1082, 15
    %vm3889 = vcmp.lt.s32.totalorder %v1083, 15
    %vm3890 = vcmp.lt.s32.totalorder %v1084, 15
    %vm3891 = vcmp.lt.s32.totalorder %v1085, 15
    %vm3892 = vcmp.lt.s32.totalorder %v1086, 15
    %vm3893 = vcmp.lt.s32.totalorder %v1087, 15
    %vm3894 = vcmp.lt.s32.totalorder %v1088, 15
    %vm3895 = vcmp.lt.s32.totalorder %v1089, 15
    %vm3896 = vcmp.lt.s32.totalorder %v1090, 15
    %vm3897 = vcmp.lt.s32.totalorder %v1091, 15
    %vm3898 = vcmp.lt.s32.totalorder %v1092, 15
    %vm3899 = vcmp.lt.s32.totalorder %v1093, 15
    %vm3900 = vcmp.lt.s32.totalorder %v1094, 15
    %vm3901 = vcmp.lt.s32.totalorder %v1095, 15
    %vm3902 = vcmp.lt.s32.totalorder %v1096, 15
    %vm3903 = vcmp.lt.s32.totalorder %v1097, 15
    %vm3904 = vcmp.lt.s32.totalorder %v1098, 15
    %vm3905 = vcmp.lt.s32.totalorder %v1099, 15
    %vm3906 = vcmp.lt.s32.totalorder %v1100, 15
    %vm3907 = vcmp.lt.s32.totalorder %v1101, 15
    %vm3908 = vcmp.lt.s32.totalorder %v1102, 15
    %vm3909 = vcmp.lt.s32.totalorder %v1103, 15
    %vm3910 = vcmp.lt.s32.totalorder %v1104, 15
    %vm3911 = vcmp.lt.s32.totalorder %v1105, 15
    %vm3912 = vcmp.lt.s32.totalorder %v1106, 15
    %vm3913 = vcmp.lt.s32.totalorder %v1107, 15
    %vm3914 = vcmp.lt.s32.totalorder %v1108, 15
    %vm3915 = vcmp.lt.s32.totalorder %v1109, 15
    %vm3916 = vcmp.lt.s32.totalorder %v1110, 15
    %vm3917 = vcmp.lt.s32.totalorder %v1111, 15
    %vm3918 = vcmp.lt.s32.totalorder %v1112, 15
    %vm3919 = vcmp.lt.s32.totalorder %v1113, 15
    %vm3920 = vcmp.lt.s32.totalorder %v1114, 15
    %vm3921 = vcmp.lt.s32.totalorder %v1115, 15
    %vm3922 = vcmp.lt.s32.totalorder %v1116, 15
    %vm3923 = vcmp.lt.s32.totalorder %v1117, 15
    %vm3924 = vcmp.lt.s32.totalorder %v1118, 15
    %vm3925 = vcmp.lt.s32.totalorder %v1119, 15
    %vm3926 = vcmp.lt.s32.totalorder %v1120, 15
    %vm3927 = vcmp.lt.s32.totalorder %v1121, 15
    %vm3928 = vcmp.lt.s32.totalorder %v1122, 15
    %vm3929 = vcmp.lt.s32.totalorder %v1123, 15
    %vm3930 = vcmp.lt.s32.totalorder %v1124, 15
    %vm3931 = vcmp.lt.s32.totalorder %v1125, 15
    %vm3932 = vcmp.lt.s32.totalorder %v1126, 15
    %vm3933 = vcmp.lt.s32.totalorder %v1127, 15
    %vm3934 = vcmp.lt.s32.totalorder %v1128, 15
    %vm3935 = vcmp.lt.s32.totalorder %v1129, 15
    %vm3936 = vcmp.lt.s32.totalorder %v1130, 15
    %vm3937 = vcmp.lt.s32.totalorder %v1131, 15
    %vm3938 = vcmp.lt.s32.totalorder %v1132, 15
    %v3939 = vsel %vm3859, %v3857, 0.0
    %v3940 = vsel %vm3860, %v3856, 0.0
    %v3941 = vsel %vm3861, %v3855, 0.0
    %v3942 = vsel %vm3862, %v3854, 0.0
    %v3943 = vsel %vm3863, %v3853, 0.0
    %v3944 = vsel %vm3864, %v3852, 0.0
    %v3945 = vsel %vm3865, %v3851, 0.0
    %v3946 = vsel %vm3866, %v3850, 0.0
    %v3947 = vsel %vm3867, %v3849, 0.0
    %v3948 = vsel %vm3868, %v3848, 0.0
    %v3949 = vsel %vm3869, %v3847, 0.0
    %v3950 = vsel %vm3870, %v3846, 0.0
    %v3951 = vsel %vm3871, %v3845, 0.0
    %v3952 = vsel %vm3872, %v3844, 0.0
    %v3953 = vsel %vm3873, %v3843, 0.0
    %v3954 = vsel %vm3874, %v3842, 0.0
    %v3955 = vsel %vm3875, %v3841, 0.0
    %v3956 = vsel %vm3876, %v3840, 0.0
    %v3957 = vsel %vm3877, %v3839, 0.0
    %v3958 = vsel %vm3878, %v3838, 0.0
    %v3959 = vsel %vm3879, %v3837, 0.0
    %v3960 = vsel %vm3880, %v3836, 0.0
    %v3961 = vsel %vm3881, %v3835, 0.0
    %v3962 = vsel %vm3882, %v3834, 0.0
    %v3963 = vsel %vm3883, %v3833, 0.0
    %v3964 = vsel %vm3884, %v3832, 0.0
    %v3965 = vsel %vm3885, %v3831, 0.0
    %v3966 = vsel %vm3886, %v3830, 0.0
    %v3967 = vsel %vm3887, %v3829, 0.0
    %v3968 = vsel %vm3888, %v3828, 0.0
    %v3969 = vsel %vm3889, %v3827, 0.0
    %v3970 = vsel %vm3890, %v3826, 0.0
    %v3971 = vsel %vm3891, %v3825, 0.0
    %v3972 = vsel %vm3892, %v3824, 0.0
    %v3973 = vsel %vm3893, %v3823, 0.0
    %v3974 = vsel %vm3894, %v3822, 0.0
    %v3975 = vsel %vm3895, %v3821, 0.0
    %v3976 = vsel %vm3896, %v3820, 0.0
    %v3977 = vsel %vm3897, %v3819, 0.0
    %v3978 = vsel %vm3898, %v3818, 0.0
    %v3979 = vsel %vm3899, %v3817, 0.0
    %v3980 = vsel %vm3900, %v3816, 0.0
    %v3981 = vsel %vm3901, %v3815, 0.0
    %v3982 = vsel %vm3902, %v3814, 0.0
    %v3983 = vsel %vm3903, %v3813, 0.0
    %v3984 = vsel %vm3904, %v3812, 0.0
    %v3985 = vsel %vm3905, %v3811, 0.0
    %v3986 = vsel %vm3906, %v3810, 0.0
    %v3987 = vsel %vm3907, %v3809, 0.0
    %v3988 = vsel %vm3908, %v3808, 0.0
    %v3989 = vsel %vm3909, %v3807, 0.0
    %v3990 = vsel %vm3910, %v3806, 0.0
    %v3991 = vsel %vm3911, %v3805, 0.0
    %v3992 = vsel %vm3912, %v3804, 0.0
    %v3993 = vsel %vm3913, %v3803, 0.0
    %v3994 = vsel %vm3914, %v3802, 0.0
    %v3995 = vsel %vm3915, %v3801, 0.0
    %v3996 = vsel %vm3916, %v3800, 0.0
    %v3997 = vsel %vm3917, %v3799, 0.0
    %v3998 = vsel %vm3918, %v3798, 0.0
    %v3999 = vsel %vm3919, %v3797, 0.0
    %v4000 = vsel %vm3920, %v3796, 0.0
    %v4001 = vsel %vm3921, %v3795, 0.0
    %v4002 = vsel %vm3922, %v3794, 0.0
    %v4003 = vsel %vm3923, %v3793, 0.0
    %v4004 = vsel %vm3924, %v3792, 0.0
    %v4005 = vsel %vm3925, %v3791, 0.0
    %v4006 = vsel %vm3926, %v3790, 0.0
    %v4007 = vsel %vm3927, %v3789, 0.0
    %v4008 = vsel %vm3928, %v3788, 0.0
    %v4009 = vsel %vm3929, %v3787, 0.0
    %v4010 = vsel %vm3930, %v3786, 0.0
    %v4011 = vsel %vm3931, %v3785, 0.0
    %v4012 = vsel %vm3932, %v3784, 0.0
    %v4013 = vsel %vm3933, %v3783, 0.0
    %v4014 = vsel %vm3934, %v3782, 0.0
    %v4015 = vsel %vm3935, %v3781, 0.0
    %v4016 = vsel %vm3936, %v3780, 0.0
    %v4017 = vsel %vm3937, %v3779, 0.0
    %v4018 = vsel %vm3938, %v3858, 0.0
    %v4019 = vmul.f32 %v3939, 0.21300554
    %v4020 = vmul.f32 %v3940, 0.21300554
    %v4021 = vmul.f32 %v3941, 0.21300554
    %v4022 = vmul.f32 %v3942, 0.21300554
    %v4023 = vmul.f32 %v3943, 0.21300554
    %v4024 = vmul.f32 %v3944, 0.21300554
    %v4025 = vmul.f32 %v3945, 0.21300554
    %v4026 = vmul.f32 %v3946, 0.21300554
    %v4027 = vmul.f32 %v3947, 0.21300554
    %v4028 = vmul.f32 %v3948, 0.21300554
    %v4029 = vmul.f32 %v3949, 0.21300554
    %v4030 = vmul.f32 %v3950, 0.21300554
    %v4031 = vmul.f32 %v3951, 0.21300554
    %v4032 = vmul.f32 %v3952, 0.21300554
    %v4033 = vmul.f32 %v3953, 0.21300554
    %v4034 = vmul.f32 %v3954, 0.21300554
    %v4035 = vmul.f32 %v3955, 0.21300554
    %v4036 = vmul.f32 %v3956, 0.21300554
    %v4037 = vmul.f32 %v3957, 0.21300554
    %v4038 = vmul.f32 %v3958, 0.21300554
    %v4039 = vmul.f32 %v3959, 0.21300554
    %v4040 = vmul.f32 %v3960, 0.21300554
    %v4041 = vmul.f32 %v3961, 0.21300554
    %v4042 = vmul.f32 %v3962, 0.21300554
    %v4043 = vmul.f32 %v3963, 0.21300554
    %v4044 = vmul.f32 %v3964, 0.21300554
    %v4045 = vmul.f32 %v3965, 0.21300554
    %v4046 = vmul.f32 %v3966, 0.21300554
    %v4047 = vmul.f32 %v3967, 0.21300554
    %v4048 = vmul.f32 %v3968, 0.21300554
    %v4049 = vmul.f32 %v3969, 0.21300554
    %v4050 = vmul.f32 %v3970, 0.21300554
    %v4051 = vmul.f32 %v3971, 0.21300554
    %v4052 = vmul.f32 %v3972, 0.21300554
    %v4053 = vmul.f32 %v3973, 0.21300554
    %v4054 = vmul.f32 %v3974, 0.21300554
    %v4055 = vmul.f32 %v3975, 0.21300554
    %v4056 = vmul.f32 %v3976, 0.21300554
    %v4057 = vmul.f32 %v3977, 0.21300554
    %v4058 = vmul.f32 %v3978, 0.21300554
    %v4059 = vmul.f32 %v3979, 0.21300554
    %v4060 = vmul.f32 %v3980, 0.21300554
    %v4061 = vmul.f32 %v3981, 0.21300554
    %v4062 = vmul.f32 %v3982, 0.21300554
    %v4063 = vmul.f32 %v3983, 0.21300554
    %v4064 = vmul.f32 %v3984, 0.21300554
    %v4065 = vmul.f32 %v3985, 0.21300554
    %v4066 = vmul.f32 %v3986, 0.21300554
    %v4067 = vmul.f32 %v3987, 0.21300554
    %v4068 = vmul.f32 %v3988, 0.21300554
    %v4069 = vmul.f32 %v3989, 0.21300554
    %v4070 = vmul.f32 %v3990, 0.21300554
    %v4071 = vmul.f32 %v3991, 0.21300554
    %v4072 = vmul.f32 %v3992, 0.21300554
    %v4073 = vmul.f32 %v3993, 0.21300554
    %v4074 = vmul.f32 %v3994, 0.21300554
    %v4075 = vmul.f32 %v3995, 0.21300554
    %v4076 = vmul.f32 %v3996, 0.21300554
    %v4077 = vmul.f32 %v3997, 0.21300554
    %v4078 = vmul.f32 %v3998, 0.21300554
    %v4079 = vmul.f32 %v3999, 0.21300554
    %v4080 = vmul.f32 %v4000, 0.21300554
    %v4081 = vmul.f32 %v4001, 0.21300554
    %v4082 = vmul.f32 %v4002, 0.21300554
    %v4083 = vmul.f32 %v4003, 0.21300554
    %v4084 = vmul.f32 %v4004, 0.21300554
    %v4085 = vmul.f32 %v4005, 0.21300554
    %v4086 = vmul.f32 %v4006, 0.21300554
    %v4087 = vmul.f32 %v4007, 0.21300554
    %v4088 = vmul.f32 %v4008, 0.21300554
    %v4089 = vmul.f32 %v4009, 0.21300554
    %v4090 = vmul.f32 %v4010, 0.21300554
    %v4091 = vmul.f32 %v4011, 0.21300554
    %v4092 = vmul.f32 %v4012, 0.21300554
    %v4093 = vmul.f32 %v4013, 0.21300554
    %v4094 = vmul.f32 %v4014, 0.21300554
    %v4095 = vmul.f32 %v4015, 0.21300554
    %v4096 = vmul.f32 %v4016, 0.21300554
    %v4097 = vmul.f32 %v4017, 0.21300554
    %v4098 = vmul.f32 %v4018, 0.21300554
    %v4099 = vadd.f32 %v3618, %v4019
    %v4100 = vadd.f32 %v3619, %v4020
    %v4101 = vadd.f32 %v3620, %v4021
    %v4102 = vadd.f32 %v3621, %v4022
    %v4103 = vadd.f32 %v3622, %v4023
    %v4104 = vadd.f32 %v3623, %v4024
    %v4105 = vadd.f32 %v3624, %v4025
    %v4106 = vadd.f32 %v3625, %v4026
    %v4107 = vadd.f32 %v3626, %v4027
    %v4108 = vadd.f32 %v3627, %v4028
    %v4109 = vadd.f32 %v3628, %v4029
    %v4110 = vadd.f32 %v3629, %v4030
    %v4111 = vadd.f32 %v3630, %v4031
    %v4112 = vadd.f32 %v3631, %v4032
    %v4113 = vadd.f32 %v3632, %v4033
    %v4114 = vadd.f32 %v3633, %v4034
    %v4115 = vadd.f32 %v3634, %v4035
    %v4116 = vadd.f32 %v3635, %v4036
    %v4117 = vadd.f32 %v3636, %v4037
    %v4118 = vadd.f32 %v3637, %v4038
    %v4119 = vadd.f32 %v3638, %v4039
    %v4120 = vadd.f32 %v3639, %v4040
    %v4121 = vadd.f32 %v3640, %v4041
    %v4122 = vadd.f32 %v3641, %v4042
    %v4123 = vadd.f32 %v3642, %v4043
    %v4124 = vadd.f32 %v3643, %v4044
    %v4125 = vadd.f32 %v3644, %v4045
    %v4126 = vadd.f32 %v3645, %v4046
    %v4127 = vadd.f32 %v3646, %v4047
    %v4128 = vadd.f32 %v3647, %v4048
    %v4129 = vadd.f32 %v3648, %v4049
    %v4130 = vadd.f32 %v3649, %v4050
    %v4131 = vadd.f32 %v3650, %v4051
    %v4132 = vadd.f32 %v3651, %v4052
    %v4133 = vadd.f32 %v3652, %v4053
    %v4134 = vadd.f32 %v3653, %v4054
    %v4135 = vadd.f32 %v3654, %v4055
    %v4136 = vadd.f32 %v3655, %v4056
    %v4137 = vadd.f32 %v3656, %v4057
    %v4138 = vadd.f32 %v3657, %v4058
    %v4139 = vadd.f32 %v3658, %v4059
    %v4140 = vadd.f32 %v3659, %v4060
    %v4141 = vadd.f32 %v3660, %v4061
    %v4142 = vadd.f32 %v3661, %v4062
    %v4143 = vadd.f32 %v3662, %v4063
    %v4144 = vadd.f32 %v3663, %v4064
    %v4145 = vadd.f32 %v3664, %v4065
    %v4146 = vadd.f32 %v3665, %v4066
    %v4147 = vadd.f32 %v3666, %v4067
    %v4148 = vadd.f32 %v3667, %v4068
    %v4149 = vadd.f32 %v3668, %v4069
    %v4150 = vadd.f32 %v3669, %v4070
    %v4151 = vadd.f32 %v3670, %v4071
    %v4152 = vadd.f32 %v3671, %v4072
    %v4153 = vadd.f32 %v3672, %v4073
    %v4154 = vadd.f32 %v3673, %v4074
    %v4155 = vadd.f32 %v3674, %v4075
    %v4156 = vadd.f32 %v3675, %v4076
    %v4157 = vadd.f32 %v3676, %v4077
    %v4158 = vadd.f32 %v3677, %v4078
    %v4159 = vadd.f32 %v3678, %v4079
    %v4160 = vadd.f32 %v3679, %v4080
    %v4161 = vadd.f32 %v3680, %v4081
    %v4162 = vadd.f32 %v3681, %v4082
    %v4163 = vadd.f32 %v3682, %v4083
    %v4164 = vadd.f32 %v3683, %v4084
    %v4165 = vadd.f32 %v3684, %v4085
    %v4166 = vadd.f32 %v3685, %v4086
    %v4167 = vadd.f32 %v3686, %v4087
    %v4168 = vadd.f32 %v3687, %v4088
    %v4169 = vadd.f32 %v3688, %v4089
    %v4170 = vadd.f32 %v3689, %v4090
    %v4171 = vadd.f32 %v3690, %v4091
    %v4172 = vadd.f32 %v3691, %v4092
    %v4173 = vadd.f32 %v3692, %v4093
    %v4174 = vadd.f32 %v3693, %v4094
    %v4175 = vadd.f32 %v3694, %v4095
    %v4176 = vadd.f32 %v3695, %v4096
    %v4177 = vadd.f32 %v3696, %v4097
    %v4178 = vadd.f32 %v3697, %v4098
    %v4179 = vrot.slane %v733, 2
    %v4180 = vrot.slane %v736, 2
    %v4181 = vrot.slane %v739, 2
    %v4182 = vrot.slane %v742, 2
    %v4183 = vrot.slane %v745, 2
    %v4184 = vrot.slane %v748, 2
    %v4185 = vrot.slane %v751, 2
    %v4186 = vrot.slane %v754, 2
    %v4187 = vrot.slane %v757, 2
    %v4188 = vrot.slane %v760, 2
    %v4189 = vrot.slane %v763, 2
    %v4190 = vrot.slane %v766, 2
    %v4191 = vrot.slane %v769, 2
    %v4192 = vrot.slane %v772, 2
    %v4193 = vrot.slane %v775, 2
    %v4194 = vrot.slane %v778, 2
    %v4195 = vrot.slane %v781, 2
    %v4196 = vrot.slane %v784, 2
    %v4197 = vrot.slane %v787, 2
    %v4198 = vrot.slane %v790, 2
    %v4199 = vrot.slane %v793, 2
    %v4200 = vrot.slane %v796, 2
    %v4201 = vrot.slane %v799, 2
    %v4202 = vrot.slane %v802, 2
    %v4203 = vrot.slane %v805, 2
    %v4204 = vrot.slane %v808, 2
    %v4205 = vrot.slane %v811, 2
    %v4206 = vrot.slane %v814, 2
    %v4207 = vrot.slane %v817, 2
    %v4208 = vrot.slane %v820, 2
    %v4209 = vrot.slane %v823, 2
    %v4210 = vrot.slane %v826, 2
    %v4211 = vrot.slane %v829, 2
    %v4212 = vrot.slane %v832, 2
    %v4213 = vrot.slane %v835, 2
    %v4214 = vrot.slane %v838, 2
    %v4215 = vrot.slane %v841, 2
    %v4216 = vrot.slane %v844, 2
    %v4217 = vrot.slane %v847, 2
    %v4218 = vrot.slane %v850, 2
    %v4219 = vrot.slane %v853, 2
    %v4220 = vrot.slane %v856, 2
    %v4221 = vrot.slane %v859, 2
    %v4222 = vrot.slane %v862, 2
    %v4223 = vrot.slane %v865, 2
    %v4224 = vrot.slane %v868, 2
    %v4225 = vrot.slane %v871, 2
    %v4226 = vrot.slane %v874, 2
    %v4227 = vrot.slane %v877, 2
    %v4228 = vrot.slane %v880, 2
    %v4229 = vrot.slane %v883, 2
    %v4230 = vrot.slane %v886, 2
    %v4231 = vrot.slane %v889, 2
    %v4232 = vrot.slane %v892, 2
    %v4233 = vrot.slane %v895, 2
    %v4234 = vrot.slane %v898, 2
    %v4235 = vrot.slane %v901, 2
    %v4236 = vrot.slane %v904, 2
    %v4237 = vrot.slane %v907, 2
    %v4238 = vrot.slane %v910, 2
    %v4239 = vrot.slane %v913, 2
    %v4240 = vrot.slane %v916, 2
    %v4241 = vrot.slane %v919, 2
    %v4242 = vrot.slane %v922, 2
    %v4243 = vrot.slane %v925, 2
    %v4244 = vrot.slane %v928, 2
    %v4245 = vrot.slane %v931, 2
    %v4246 = vrot.slane %v934, 2
    %v4247 = vrot.slane %v937, 2
    %v4248 = vrot.slane %v940, 2
    %v4249 = vrot.slane %v943, 2
    %v4250 = vrot.slane %v946, 2
    %v4251 = vrot.slane %v949, 2
    %v4252 = vrot.slane %v952, 2
    %v4253 = vrot.slane %v955, 2
    %v4254 = vrot.slane %v958, 2
    %v4255 = vrot.slane %v961, 2
    %v4256 = vrot.slane %v964, 2
    %v4257 = vrot.slane %v967, 2
    %v4258 = vrot.slane %v970, 2
    %vm4259 = vcmp.lt.s32.totalorder %v973, 6
    %v4260 = vsel %vm4259, %v4257, %v4258
    %v4261 = vsel %vm4259, %v4256, %v4257
    %v4262 = vsel %vm4259, %v4255, %v4256
    %v4263 = vsel %vm4259, %v4254, %v4255
    %v4264 = vsel %vm4259, %v4253, %v4254
    %v4265 = vsel %vm4259, %v4252, %v4253
    %v4266 = vsel %vm4259, %v4251, %v4252
    %v4267 = vsel %vm4259, %v4250, %v4251
    %v4268 = vsel %vm4259, %v4249, %v4250
    %v4269 = vsel %vm4259, %v4248, %v4249
    %v4270 = vsel %vm4259, %v4247, %v4248
    %v4271 = vsel %vm4259, %v4246, %v4247
    %v4272 = vsel %vm4259, %v4245, %v4246
    %v4273 = vsel %vm4259, %v4244, %v4245
    %v4274 = vsel %vm4259, %v4243, %v4244
    %v4275 = vsel %vm4259, %v4242, %v4243
    %v4276 = vsel %vm4259, %v4241, %v4242
    %v4277 = vsel %vm4259, %v4240, %v4241
    %v4278 = vsel %vm4259, %v4239, %v4240
    %v4279 = vsel %vm4259, %v4238, %v4239
    %v4280 = vsel %vm4259, %v4237, %v4238
    %v4281 = vsel %vm4259, %v4236, %v4237
    %v4282 = vsel %vm4259, %v4235, %v4236
    %v4283 = vsel %vm4259, %v4234, %v4235
    %v4284 = vsel %vm4259, %v4233, %v4234
    %v4285 = vsel %vm4259, %v4232, %v4233
    %v4286 = vsel %vm4259, %v4231, %v4232
    %v4287 = vsel %vm4259, %v4230, %v4231
    %v4288 = vsel %vm4259, %v4229, %v4230
    %v4289 = vsel %vm4259, %v4228, %v4229
    %v4290 = vsel %vm4259, %v4227, %v4228
    %v4291 = vsel %vm4259, %v4226, %v4227
    %v4292 = vsel %vm4259, %v4225, %v4226
    %v4293 = vsel %vm4259, %v4224, %v4225
    %v4294 = vsel %vm4259, %v4223, %v4224
    %v4295 = vsel %vm4259, %v4222, %v4223
    %v4296 = vsel %vm4259, %v4221, %v4222
    %v4297 = vsel %vm4259, %v4220, %v4221
    %v4298 = vsel %vm4259, %v4219, %v4220
    %v4299 = vsel %vm4259, %v4218, %v4219
    %v4300 = vsel %vm4259, %v4217, %v4218
    %v4301 = vsel %vm4259, %v4216, %v4217
    %v4302 = vsel %vm4259, %v4215, %v4216
    %v4303 = vsel %vm4259, %v4214, %v4215
    %v4304 = vsel %vm4259, %v4213, %v4214
    %v4305 = vsel %vm4259, %v4212, %v4213
    %v4306 = vsel %vm4259, %v4211, %v4212
    %v4307 = vsel %vm4259, %v4210, %v4211
    %v4308 = vsel %vm4259, %v4209, %v4210
    %v4309 = vsel %vm4259, %v4208, %v4209
    %v4310 = vsel %vm4259, %v4207, %v4208
    %v4311 = vsel %vm4259, %v4206, %v4207
    %v4312 = vsel %vm4259, %v4205, %v4206
    %v4313 = vsel %vm4259, %v4204, %v4205
    %v4314 = vsel %vm4259, %v4203, %v4204
    %v4315 = vsel %vm4259, %v4202, %v4203
    %v4316 = vsel %vm4259, %v4201, %v4202
    %v4317 = vsel %vm4259, %v4200, %v4201
    %v4318 = vsel %vm4259, %v4199, %v4200
    %v4319 = vsel %vm4259, %v4198, %v4199
    %v4320 = vsel %vm4259, %v4197, %v4198
    %v4321 = vsel %vm4259, %v4196, %v4197
    %v4322 = vsel %vm4259, %v4195, %v4196
    %v4323 = vsel %vm4259, %v4194, %v4195
    %v4324 = vsel %vm4259, %v4193, %v4194
    %v4325 = vsel %vm4259, %v4192, %v4193
    %v4326 = vsel %vm4259, %v4191, %v4192
    %v4327 = vsel %vm4259, %v4190, %v4191
    %v4328 = vsel %vm4259, %v4189, %v4190
    %v4329 = vsel %vm4259, %v4188, %v4189
    %v4330 = vsel %vm4259, %v4187, %v4188
    %v4331 = vsel %vm4259, %v4186, %v4187
    %v4332 = vsel %vm4259, %v4185, %v4186
    %v4333 = vsel %vm4259, %v4184, %v4185
    %v4334 = vsel %vm4259, %v4183, %v4184
    %v4335 = vsel %vm4259, %v4182, %v4183
    %v4336 = vsel %vm4259, %v4181, %v4182
    %v4337 = vsel %vm4259, %v4180, %v4181
    %v4338 = vsel %vm4259, %v4179, %v4180
    %v4339 = vsel %vm4259, %v4258, %v4179
    %vm4340 = vcmp.lt.s32.totalorder %v1053, 14
    %vm4341 = vcmp.lt.s32.totalorder %v1054, 14
    %vm4342 = vcmp.lt.s32.totalorder %v1055, 14
    %vm4343 = vcmp.lt.s32.totalorder %v1056, 14
    %vm4344 = vcmp.lt.s32.totalorder %v1057, 14
    %vm4345 = vcmp.lt.s32.totalorder %v1058, 14
    %vm4346 = vcmp.lt.s32.totalorder %v1059, 14
    %vm4347 = vcmp.lt.s32.totalorder %v1060, 14
    %vm4348 = vcmp.lt.s32.totalorder %v1061, 14
    %vm4349 = vcmp.lt.s32.totalorder %v1062, 14
    %vm4350 = vcmp.lt.s32.totalorder %v1063, 14
    %vm4351 = vcmp.lt.s32.totalorder %v1064, 14
    %vm4352 = vcmp.lt.s32.totalorder %v1065, 14
    %vm4353 = vcmp.lt.s32.totalorder %v1066, 14
    %vm4354 = vcmp.lt.s32.totalorder %v1067, 14
    %vm4355 = vcmp.lt.s32.totalorder %v1068, 14
    %vm4356 = vcmp.lt.s32.totalorder %v1069, 14
    %vm4357 = vcmp.lt.s32.totalorder %v1070, 14
    %vm4358 = vcmp.lt.s32.totalorder %v1071, 14
    %vm4359 = vcmp.lt.s32.totalorder %v1072, 14
    %vm4360 = vcmp.lt.s32.totalorder %v1073, 14
    %vm4361 = vcmp.lt.s32.totalorder %v1074, 14
    %vm4362 = vcmp.lt.s32.totalorder %v1075, 14
    %vm4363 = vcmp.lt.s32.totalorder %v1076, 14
    %vm4364 = vcmp.lt.s32.totalorder %v1077, 14
    %vm4365 = vcmp.lt.s32.totalorder %v1078, 14
    %vm4366 = vcmp.lt.s32.totalorder %v1079, 14
    %vm4367 = vcmp.lt.s32.totalorder %v1080, 14
    %vm4368 = vcmp.lt.s32.totalorder %v1081, 14
    %vm4369 = vcmp.lt.s32.totalorder %v1082, 14
    %vm4370 = vcmp.lt.s32.totalorder %v1083, 14
    %vm4371 = vcmp.lt.s32.totalorder %v1084, 14
    %vm4372 = vcmp.lt.s32.totalorder %v1085, 14
    %vm4373 = vcmp.lt.s32.totalorder %v1086, 14
    %vm4374 = vcmp.lt.s32.totalorder %v1087, 14
    %vm4375 = vcmp.lt.s32.totalorder %v1088, 14
    %vm4376 = vcmp.lt.s32.totalorder %v1089, 14
    %vm4377 = vcmp.lt.s32.totalorder %v1090, 14
    %vm4378 = vcmp.lt.s32.totalorder %v1091, 14
    %vm4379 = vcmp.lt.s32.totalorder %v1092, 14
    %vm4380 = vcmp.lt.s32.totalorder %v1093, 14
    %vm4381 = vcmp.lt.s32.totalorder %v1094, 14
    %vm4382 = vcmp.lt.s32.totalorder %v1095, 14
    %vm4383 = vcmp.lt.s32.totalorder %v1096, 14
    %vm4384 = vcmp.lt.s32.totalorder %v1097, 14
    %vm4385 = vcmp.lt.s32.totalorder %v1098, 14
    %vm4386 = vcmp.lt.s32.totalorder %v1099, 14
    %vm4387 = vcmp.lt.s32.totalorder %v1100, 14
    %vm4388 = vcmp.lt.s32.totalorder %v1101, 14
    %vm4389 = vcmp.lt.s32.totalorder %v1102, 14
    %vm4390 = vcmp.lt.s32.totalorder %v1103, 14
    %vm4391 = vcmp.lt.s32.totalorder %v1104, 14
    %vm4392 = vcmp.lt.s32.totalorder %v1105, 14
    %vm4393 = vcmp.lt.s32.totalorder %v1106, 14
    %vm4394 = vcmp.lt.s32.totalorder %v1107, 14
    %vm4395 = vcmp.lt.s32.totalorder %v1108, 14
    %vm4396 = vcmp.lt.s32.totalorder %v1109, 14
    %vm4397 = vcmp.lt.s32.totalorder %v1110, 14
    %vm4398 = vcmp.lt.s32.totalorder %v1111, 14
    %vm4399 = vcmp.lt.s32.totalorder %v1112, 14
    %vm4400 = vcmp.lt.s32.totalorder %v1113, 14
    %vm4401 = vcmp.lt.s32.totalorder %v1114, 14
    %vm4402 = vcmp.lt.s32.totalorder %v1115, 14
    %vm4403 = vcmp.lt.s32.totalorder %v1116, 14
    %vm4404 = vcmp.lt.s32.totalorder %v1117, 14
    %vm4405 = vcmp.lt.s32.totalorder %v1118, 14
    %vm4406 = vcmp.lt.s32.totalorder %v1119, 14
    %vm4407 = vcmp.lt.s32.totalorder %v1120, 14
    %vm4408 = vcmp.lt.s32.totalorder %v1121, 14
    %vm4409 = vcmp.lt.s32.totalorder %v1122, 14
    %vm4410 = vcmp.lt.s32.totalorder %v1123, 14
    %vm4411 = vcmp.lt.s32.totalorder %v1124, 14
    %vm4412 = vcmp.lt.s32.totalorder %v1125, 14
    %vm4413 = vcmp.lt.s32.totalorder %v1126, 14
    %vm4414 = vcmp.lt.s32.totalorder %v1127, 14
    %vm4415 = vcmp.lt.s32.totalorder %v1128, 14
    %vm4416 = vcmp.lt.s32.totalorder %v1129, 14
    %vm4417 = vcmp.lt.s32.totalorder %v1130, 14
    %vm4418 = vcmp.lt.s32.totalorder %v1131, 14
    %vm4419 = vcmp.lt.s32.totalorder %v1132, 14
    %v4420 = vsel %vm4340, %v4338, 0.0
    %v4421 = vsel %vm4341, %v4337, 0.0
    %v4422 = vsel %vm4342, %v4336, 0.0
    %v4423 = vsel %vm4343, %v4335, 0.0
    %v4424 = vsel %vm4344, %v4334, 0.0
    %v4425 = vsel %vm4345, %v4333, 0.0
    %v4426 = vsel %vm4346, %v4332, 0.0
    %v4427 = vsel %vm4347, %v4331, 0.0
    %v4428 = vsel %vm4348, %v4330, 0.0
    %v4429 = vsel %vm4349, %v4329, 0.0
    %v4430 = vsel %vm4350, %v4328, 0.0
    %v4431 = vsel %vm4351, %v4327, 0.0
    %v4432 = vsel %vm4352, %v4326, 0.0
    %v4433 = vsel %vm4353, %v4325, 0.0
    %v4434 = vsel %vm4354, %v4324, 0.0
    %v4435 = vsel %vm4355, %v4323, 0.0
    %v4436 = vsel %vm4356, %v4322, 0.0
    %v4437 = vsel %vm4357, %v4321, 0.0
    %v4438 = vsel %vm4358, %v4320, 0.0
    %v4439 = vsel %vm4359, %v4319, 0.0
    %v4440 = vsel %vm4360, %v4318, 0.0
    %v4441 = vsel %vm4361, %v4317, 0.0
    %v4442 = vsel %vm4362, %v4316, 0.0
    %v4443 = vsel %vm4363, %v4315, 0.0
    %v4444 = vsel %vm4364, %v4314, 0.0
    %v4445 = vsel %vm4365, %v4313, 0.0
    %v4446 = vsel %vm4366, %v4312, 0.0
    %v4447 = vsel %vm4367, %v4311, 0.0
    %v4448 = vsel %vm4368, %v4310, 0.0
    %v4449 = vsel %vm4369, %v4309, 0.0
    %v4450 = vsel %vm4370, %v4308, 0.0
    %v4451 = vsel %vm4371, %v4307, 0.0
    %v4452 = vsel %vm4372, %v4306, 0.0
    %v4453 = vsel %vm4373, %v4305, 0.0
    %v4454 = vsel %vm4374, %v4304, 0.0
    %v4455 = vsel %vm4375, %v4303, 0.0
    %v4456 = vsel %vm4376, %v4302, 0.0
    %v4457 = vsel %vm4377, %v4301, 0.0
    %v4458 = vsel %vm4378, %v4300, 0.0
    %v4459 = vsel %vm4379, %v4299, 0.0
    %v4460 = vsel %vm4380, %v4298, 0.0
    %v4461 = vsel %vm4381, %v4297, 0.0
    %v4462 = vsel %vm4382, %v4296, 0.0
    %v4463 = vsel %vm4383, %v4295, 0.0
    %v4464 = vsel %vm4384, %v4294, 0.0
    %v4465 = vsel %vm4385, %v4293, 0.0
    %v4466 = vsel %vm4386, %v4292, 0.0
    %v4467 = vsel %vm4387, %v4291, 0.0
    %v4468 = vsel %vm4388, %v4290, 0.0
    %v4469 = vsel %vm4389, %v4289, 0.0
    %v4470 = vsel %vm4390, %v4288, 0.0
    %v4471 = vsel %vm4391, %v4287, 0.0
    %v4472 = vsel %vm4392, %v4286, 0.0
    %v4473 = vsel %vm4393, %v4285, 0.0
    %v4474 = vsel %vm4394, %v4284, 0.0
    %v4475 = vsel %vm4395, %v4283, 0.0
    %v4476 = vsel %vm4396, %v4282, 0.0
    %v4477 = vsel %vm4397, %v4281, 0.0
    %v4478 = vsel %vm4398, %v4280, 0.0
    %v4479 = vsel %vm4399, %v4279, 0.0
    %v4480 = vsel %vm4400, %v4278, 0.0
    %v4481 = vsel %vm4401, %v4277, 0.0
    %v4482 = vsel %vm4402, %v4276, 0.0
    %v4483 = vsel %vm4403, %v4275, 0.0
    %v4484 = vsel %vm4404, %v4274, 0.0
    %v4485 = vsel %vm4405, %v4273, 0.0
    %v4486 = vsel %vm4406, %v4272, 0.0
    %v4487 = vsel %vm4407, %v4271, 0.0
    %v4488 = vsel %vm4408, %v4270, 0.0
    %v4489 = vsel %vm4409, %v4269, 0.0
    %v4490 = vsel %vm4410, %v4268, 0.0
    %v4491 = vsel %vm4411, %v4267, 0.0
    %v4492 = vsel %vm4412, %v4266, 0.0
    %v4493 = vsel %vm4413, %v4265, 0.0
    %v4494 = vsel %vm4414, %v4264, 0.0
    %v4495 = vsel %vm4415, %v4263, 0.0
    %v4496 = vsel %vm4416, %v4262, 0.0
    %v4497 = vsel %vm4417, %v4261, 0.0
    %v4498 = vsel %vm4418, %v4260, 0.0
    %v4499 = vsel %vm4419, %v4339, 0.0
    %v4500 = vmul.f32 %v4420, 0.10936069
    %v4501 = vmul.f32 %v4421, 0.10936069
    %v4502 = vmul.f32 %v4422, 0.10936069
    %v4503 = vmul.f32 %v4423, 0.10936069
    %v4504 = vmul.f32 %v4424, 0.10936069
    %v4505 = vmul.f32 %v4425, 0.10936069
    %v4506 = vmul.f32 %v4426, 0.10936069
    %v4507 = vmul.f32 %v4427, 0.10936069
    %v4508 = vmul.f32 %v4428, 0.10936069
    %v4509 = vmul.f32 %v4429, 0.10936069
    %v4510 = vmul.f32 %v4430, 0.10936069
    %v4511 = vmul.f32 %v4431, 0.10936069
    %v4512 = vmul.f32 %v4432, 0.10936069
    %v4513 = vmul.f32 %v4433, 0.10936069
    %v4514 = vmul.f32 %v4434, 0.10936069
    %v4515 = vmul.f32 %v4435, 0.10936069
    %v4516 = vmul.f32 %v4436, 0.10936069
    %v4517 = vmul.f32 %v4437, 0.10936069
    %v4518 = vmul.f32 %v4438, 0.10936069
    %v4519 = vmul.f32 %v4439, 0.10936069
    %v4520 = vmul.f32 %v4440, 0.10936069
    %v4521 = vmul.f32 %v4441, 0.10936069
    %v4522 = vmul.f32 %v4442, 0.10936069
    %v4523 = vmul.f32 %v4443, 0.10936069
    %v4524 = vmul.f32 %v4444, 0.10936069
    %v4525 = vmul.f32 %v4445, 0.10936069
    %v4526 = vmul.f32 %v4446, 0.10936069
    %v4527 = vmul.f32 %v4447, 0.10936069
    %v4528 = vmul.f32 %v4448, 0.10936069
    %v4529 = vmul.f32 %v4449, 0.10936069
    %v4530 = vmul.f32 %v4450, 0.10936069
    %v4531 = vmul.f32 %v4451, 0.10936069
    %v4532 = vmul.f32 %v4452, 0.10936069
    %v4533 = vmul.f32 %v4453, 0.10936069
    %v4534 = vmul.f32 %v4454, 0.10936069
    %v4535 = vmul.f32 %v4455, 0.10936069
    %v4536 = vmul.f32 %v4456, 0.10936069
    %v4537 = vmul.f32 %v4457, 0.10936069
    %v4538 = vmul.f32 %v4458, 0.10936069
    %v4539 = vmul.f32 %v4459, 0.10936069
    %v4540 = vmul.f32 %v4460, 0.10936069
    %v4541 = vmul.f32 %v4461, 0.10936069
    %v4542 = vmul.f32 %v4462, 0.10936069
    %v4543 = vmul.f32 %v4463, 0.10936069
    %v4544 = vmul.f32 %v4464, 0.10936069
    %v4545 = vmul.f32 %v4465, 0.10936069
    %v4546 = vmul.f32 %v4466, 0.10936069
    %v4547 = vmul.f32 %v4467, 0.10936069
    %v4548 = vmul.f32 %v4468, 0.10936069
    %v4549 = vmul.f32 %v4469, 0.10936069
    %v4550 = vmul.f32 %v4470, 0.10936069
    %v4551 = vmul.f32 %v4471, 0.10936069
    %v4552 = vmul.f32 %v4472, 0.10936069
    %v4553 = vmul.f32 %v4473, 0.10936069
    %v4554 = vmul.f32 %v4474, 0.10936069
    %v4555 = vmul.f32 %v4475, 0.10936069
    %v4556 = vmul.f32 %v4476, 0.10936069
    %v4557 = vmul.f32 %v4477, 0.10936069
    %v4558 = vmul.f32 %v4478, 0.10936069
    %v4559 = vmul.f32 %v4479, 0.10936069
    %v4560 = vmul.f32 %v4480, 0.10936069
    %v4561 = vmul.f32 %v4481, 0.10936069
    %v4562 = vmul.f32 %v4482, 0.10936069
    %v4563 = vmul.f32 %v4483, 0.10936069
    %v4564 = vmul.f32 %v4484, 0.10936069
    %v4565 = vmul.f32 %v4485, 0.10936069
    %v4566 = vmul.f32 %v4486, 0.10936069
    %v4567 = vmul.f32 %v4487, 0.10936069
    %v4568 = vmul.f32 %v4488, 0.10936069
    %v4569 = vmul.f32 %v4489, 0.10936069
    %v4570 = vmul.f32 %v4490, 0.10936069
    %v4571 = vmul.f32 %v4491, 0.10936069
    %v4572 = vmul.f32 %v4492, 0.10936069
    %v4573 = vmul.f32 %v4493, 0.10936069
    %v4574 = vmul.f32 %v4494, 0.10936069
    %v4575 = vmul.f32 %v4495, 0.10936069
    %v4576 = vmul.f32 %v4496, 0.10936069
    %v4577 = vmul.f32 %v4497, 0.10936069
    %v4578 = vmul.f32 %v4498, 0.10936069
    %v4579 = vmul.f32 %v4499, 0.10936069
    %v4580 = vadd.f32 %v4099, %v4500
    %v4581 = vadd.f32 %v4100, %v4501
    %v4582 = vadd.f32 %v4101, %v4502
    %v4583 = vadd.f32 %v4102, %v4503
    %v4584 = vadd.f32 %v4103, %v4504
    %v4585 = vadd.f32 %v4104, %v4505
    %v4586 = vadd.f32 %v4105, %v4506
    %v4587 = vadd.f32 %v4106, %v4507
    %v4588 = vadd.f32 %v4107, %v4508
    %v4589 = vadd.f32 %v4108, %v4509
    %v4590 = vadd.f32 %v4109, %v4510
    %v4591 = vadd.f32 %v4110, %v4511
    %v4592 = vadd.f32 %v4111, %v4512
    %v4593 = vadd.f32 %v4112, %v4513
    %v4594 = vadd.f32 %v4113, %v4514
    %v4595 = vadd.f32 %v4114, %v4515
    %v4596 = vadd.f32 %v4115, %v4516
    %v4597 = vadd.f32 %v4116, %v4517
    %v4598 = vadd.f32 %v4117, %v4518
    %v4599 = vadd.f32 %v4118, %v4519
    %v4600 = vadd.f32 %v4119, %v4520
    %v4601 = vadd.f32 %v4120, %v4521
    %v4602 = vadd.f32 %v4121, %v4522
    %v4603 = vadd.f32 %v4122, %v4523
    %v4604 = vadd.f32 %v4123, %v4524
    %v4605 = vadd.f32 %v4124, %v4525
    %v4606 = vadd.f32 %v4125, %v4526
    %v4607 = vadd.f32 %v4126, %v4527
    %v4608 = vadd.f32 %v4127, %v4528
    %v4609 = vadd.f32 %v4128, %v4529
    %v4610 = vadd.f32 %v4129, %v4530
    %v4611 = vadd.f32 %v4130, %v4531
    %v4612 = vadd.f32 %v4131, %v4532
    %v4613 = vadd.f32 %v4132, %v4533
    %v4614 = vadd.f32 %v4133, %v4534
    %v4615 = vadd.f32 %v4134, %v4535
    %v4616 = vadd.f32 %v4135, %v4536
    %v4617 = vadd.f32 %v4136, %v4537
    %v4618 = vadd.f32 %v4137, %v4538
    %v4619 = vadd.f32 %v4138, %v4539
    %v4620 = vadd.f32 %v4139, %v4540
    %v4621 = vadd.f32 %v4140, %v4541
    %v4622 = vadd.f32 %v4141, %v4542
    %v4623 = vadd.f32 %v4142, %v4543
    %v4624 = vadd.f32 %v4143, %v4544
    %v4625 = vadd.f32 %v4144, %v4545
    %v4626 = vadd.f32 %v4145, %v4546
    %v4627 = vadd.f32 %v4146, %v4547
    %v4628 = vadd.f32 %v4147, %v4548
    %v4629 = vadd.f32 %v4148, %v4549
    %v4630 = vadd.f32 %v4149, %v4550
    %v4631 = vadd.f32 %v4150, %v4551
    %v4632 = vadd.f32 %v4151, %v4552
    %v4633 = vadd.f32 %v4152, %v4553
    %v4634 = vadd.f32 %v4153, %v4554
    %v4635 = vadd.f32 %v4154, %v4555
    %v4636 = vadd.f32 %v4155, %v4556
    %v4637 = vadd.f32 %v4156, %v4557
    %v4638 = vadd.f32 %v4157, %v4558
    %v4639 = vadd.f32 %v4158, %v4559
    %v4640 = vadd.f32 %v4159, %v4560
    %v4641 = vadd.f32 %v4160, %v4561
    %v4642 = vadd.f32 %v4161, %v4562
    %v4643 = vadd.f32 %v4162, %v4563
    %v4644 = vadd.f32 %v4163, %v4564
    %v4645 = vadd.f32 %v4164, %v4565
    %v4646 = vadd.f32 %v4165, %v4566
    %v4647 = vadd.f32 %v4166, %v4567
    %v4648 = vadd.f32 %v4167, %v4568
    %v4649 = vadd.f32 %v4168, %v4569
    %v4650 = vadd.f32 %v4169, %v4570
    %v4651 = vadd.f32 %v4170, %v4571
    %v4652 = vadd.f32 %v4171, %v4572
    %v4653 = vadd.f32 %v4172, %v4573
    %v4654 = vadd.f32 %v4173, %v4574
    %v4655 = vadd.f32 %v4174, %v4575
    %v4656 = vadd.f32 %v4175, %v4576
    %v4657 = vadd.f32 %v4176, %v4577
    %v4658 = vadd.f32 %v4177, %v4578
    %v4659 = vadd.f32 %v4178, %v4579
    %vm4660 = vcmp.lt.s32.totalorder %v1053, 13
    %vm4661 = vcmp.lt.s32.totalorder %v1054, 13
    %vm4662 = vcmp.lt.s32.totalorder %v1055, 13
    %vm4663 = vcmp.lt.s32.totalorder %v1056, 13
    %vm4664 = vcmp.lt.s32.totalorder %v1057, 13
    %vm4665 = vcmp.lt.s32.totalorder %v1058, 13
    %vm4666 = vcmp.lt.s32.totalorder %v1059, 13
    %vm4667 = vcmp.lt.s32.totalorder %v1060, 13
    %vm4668 = vcmp.lt.s32.totalorder %v1061, 13
    %vm4669 = vcmp.lt.s32.totalorder %v1062, 13
    %vm4670 = vcmp.lt.s32.totalorder %v1063, 13
    %vm4671 = vcmp.lt.s32.totalorder %v1064, 13
    %vm4672 = vcmp.lt.s32.totalorder %v1065, 13
    %vm4673 = vcmp.lt.s32.totalorder %v1066, 13
    %vm4674 = vcmp.lt.s32.totalorder %v1067, 13
    %vm4675 = vcmp.lt.s32.totalorder %v1068, 13
    %vm4676 = vcmp.lt.s32.totalorder %v1069, 13
    %vm4677 = vcmp.lt.s32.totalorder %v1070, 13
    %vm4678 = vcmp.lt.s32.totalorder %v1071, 13
    %vm4679 = vcmp.lt.s32.totalorder %v1072, 13
    %vm4680 = vcmp.lt.s32.totalorder %v1073, 13
    %vm4681 = vcmp.lt.s32.totalorder %v1074, 13
    %vm4682 = vcmp.lt.s32.totalorder %v1075, 13
    %vm4683 = vcmp.lt.s32.totalorder %v1076, 13
    %vm4684 = vcmp.lt.s32.totalorder %v1077, 13
    %vm4685 = vcmp.lt.s32.totalorder %v1078, 13
    %vm4686 = vcmp.lt.s32.totalorder %v1079, 13
    %vm4687 = vcmp.lt.s32.totalorder %v1080, 13
    %vm4688 = vcmp.lt.s32.totalorder %v1081, 13
    %vm4689 = vcmp.lt.s32.totalorder %v1082, 13
    %vm4690 = vcmp.lt.s32.totalorder %v1083, 13
    %vm4691 = vcmp.lt.s32.totalorder %v1084, 13
    %vm4692 = vcmp.lt.s32.totalorder %v1085, 13
    %vm4693 = vcmp.lt.s32.totalorder %v1086, 13
    %vm4694 = vcmp.lt.s32.totalorder %v1087, 13
    %vm4695 = vcmp.lt.s32.totalorder %v1088, 13
    %vm4696 = vcmp.lt.s32.totalorder %v1089, 13
    %vm4697 = vcmp.lt.s32.totalorder %v1090, 13
    %vm4698 = vcmp.lt.s32.totalorder %v1091, 13
    %vm4699 = vcmp.lt.s32.totalorder %v1092, 13
    %vm4700 = vcmp.lt.s32.totalorder %v1093, 13
    %vm4701 = vcmp.lt.s32.totalorder %v1094, 13
    %vm4702 = vcmp.lt.s32.totalorder %v1095, 13
    %vm4703 = vcmp.lt.s32.totalorder %v1096, 13
    %vm4704 = vcmp.lt.s32.totalorder %v1097, 13
    %vm4705 = vcmp.lt.s32.totalorder %v1098, 13
    %vm4706 = vcmp.lt.s32.totalorder %v1099, 13
    %vm4707 = vcmp.lt.s32.totalorder %v1100, 13
    %vm4708 = vcmp.lt.s32.totalorder %v1101, 13
    %vm4709 = vcmp.lt.s32.totalorder %v1102, 13
    %vm4710 = vcmp.lt.s32.totalorder %v1103, 13
    %vm4711 = vcmp.lt.s32.totalorder %v1104, 13
    %vm4712 = vcmp.lt.s32.totalorder %v1105, 13
    %vm4713 = vcmp.lt.s32.totalorder %v1106, 13
    %vm4714 = vcmp.lt.s32.totalorder %v1107, 13
    %vm4715 = vcmp.lt.s32.totalorder %v1108, 13
    %vm4716 = vcmp.lt.s32.totalorder %v1109, 13
    %vm4717 = vcmp.lt.s32.totalorder %v1110, 13
    %vm4718 = vcmp.lt.s32.totalorder %v1111, 13
    %vm4719 = vcmp.lt.s32.totalorder %v1112, 13
    %vm4720 = vcmp.lt.s32.totalorder %v1113, 13
    %vm4721 = vcmp.lt.s32.totalorder %v1114, 13
    %vm4722 = vcmp.lt.s32.totalorder %v1115, 13
    %vm4723 = vcmp.lt.s32.totalorder %v1116, 13
    %vm4724 = vcmp.lt.s32.totalorder %v1117, 13
    %vm4725 = vcmp.lt.s32.totalorder %v1118, 13
    %vm4726 = vcmp.lt.s32.totalorder %v1119, 13
    %vm4727 = vcmp.lt.s32.totalorder %v1120, 13
    %vm4728 = vcmp.lt.s32.totalorder %v1121, 13
    %vm4729 = vcmp.lt.s32.totalorder %v1122, 13
    %vm4730 = vcmp.lt.s32.totalorder %v1123, 13
    %vm4731 = vcmp.lt.s32.totalorder %v1124, 13
    %vm4732 = vcmp.lt.s32.totalorder %v1125, 13
    %vm4733 = vcmp.lt.s32.totalorder %v1126, 13
    %vm4734 = vcmp.lt.s32.totalorder %v1127, 13
    %vm4735 = vcmp.lt.s32.totalorder %v1128, 13
    %vm4736 = vcmp.lt.s32.totalorder %v1129, 13
    %vm4737 = vcmp.lt.s32.totalorder %v1130, 13
    %vm4738 = vcmp.lt.s32.totalorder %v1131, 13
    %vm4739 = vcmp.lt.s32.totalorder %v1132, 13
    %v4740 = vsel %vm4660, %v1292, 0.0
    %v4741 = vsel %vm4661, %v1291, 0.0
    %v4742 = vsel %vm4662, %v1290, 0.0
    %v4743 = vsel %vm4663, %v1289, 0.0
    %v4744 = vsel %vm4664, %v1288, 0.0
    %v4745 = vsel %vm4665, %v1287, 0.0
    %v4746 = vsel %vm4666, %v1286, 0.0
    %v4747 = vsel %vm4667, %v1285, 0.0
    %v4748 = vsel %vm4668, %v1284, 0.0
    %v4749 = vsel %vm4669, %v1283, 0.0
    %v4750 = vsel %vm4670, %v1282, 0.0
    %v4751 = vsel %vm4671, %v1281, 0.0
    %v4752 = vsel %vm4672, %v1280, 0.0
    %v4753 = vsel %vm4673, %v1279, 0.0
    %v4754 = vsel %vm4674, %v1278, 0.0
    %v4755 = vsel %vm4675, %v1277, 0.0
    %v4756 = vsel %vm4676, %v1276, 0.0
    %v4757 = vsel %vm4677, %v1275, 0.0
    %v4758 = vsel %vm4678, %v1274, 0.0
    %v4759 = vsel %vm4679, %v1273, 0.0
    %v4760 = vsel %vm4680, %v1272, 0.0
    %v4761 = vsel %vm4681, %v1271, 0.0
    %v4762 = vsel %vm4682, %v1270, 0.0
    %v4763 = vsel %vm4683, %v1269, 0.0
    %v4764 = vsel %vm4684, %v1268, 0.0
    %v4765 = vsel %vm4685, %v1267, 0.0
    %v4766 = vsel %vm4686, %v1266, 0.0
    %v4767 = vsel %vm4687, %v1265, 0.0
    %v4768 = vsel %vm4688, %v1264, 0.0
    %v4769 = vsel %vm4689, %v1263, 0.0
    %v4770 = vsel %vm4690, %v1262, 0.0
    %v4771 = vsel %vm4691, %v1261, 0.0
    %v4772 = vsel %vm4692, %v1260, 0.0
    %v4773 = vsel %vm4693, %v1259, 0.0
    %v4774 = vsel %vm4694, %v1258, 0.0
    %v4775 = vsel %vm4695, %v1257, 0.0
    %v4776 = vsel %vm4696, %v1256, 0.0
    %v4777 = vsel %vm4697, %v1255, 0.0
    %v4778 = vsel %vm4698, %v1254, 0.0
    %v4779 = vsel %vm4699, %v1253, 0.0
    %v4780 = vsel %vm4700, %v1252, 0.0
    %v4781 = vsel %vm4701, %v1251, 0.0
    %v4782 = vsel %vm4702, %v1250, 0.0
    %v4783 = vsel %vm4703, %v1249, 0.0
    %v4784 = vsel %vm4704, %v1248, 0.0
    %v4785 = vsel %vm4705, %v1247, 0.0
    %v4786 = vsel %vm4706, %v1246, 0.0
    %v4787 = vsel %vm4707, %v1245, 0.0
    %v4788 = vsel %vm4708, %v1244, 0.0
    %v4789 = vsel %vm4709, %v1243, 0.0
    %v4790 = vsel %vm4710, %v1242, 0.0
    %v4791 = vsel %vm4711, %v1241, 0.0
    %v4792 = vsel %vm4712, %v1240, 0.0
    %v4793 = vsel %vm4713, %v1239, 0.0
    %v4794 = vsel %vm4714, %v1238, 0.0
    %v4795 = vsel %vm4715, %v1237, 0.0
    %v4796 = vsel %vm4716, %v1236, 0.0
    %v4797 = vsel %vm4717, %v1235, 0.0
    %v4798 = vsel %vm4718, %v1234, 0.0
    %v4799 = vsel %vm4719, %v1233, 0.0
    %v4800 = vsel %vm4720, %v1232, 0.0
    %v4801 = vsel %vm4721, %v1231, 0.0
    %v4802 = vsel %vm4722, %v1230, 0.0
    %v4803 = vsel %vm4723, %v1229, 0.0
    %v4804 = vsel %vm4724, %v1228, 0.0
    %v4805 = vsel %vm4725, %v1227, 0.0
    %v4806 = vsel %vm4726, %v1226, 0.0
    %v4807 = vsel %vm4727, %v1225, 0.0
    %v4808 = vsel %vm4728, %v1224, 0.0
    %v4809 = vsel %vm4729, %v1223, 0.0
    %v4810 = vsel %vm4730, %v1222, 0.0
    %v4811 = vsel %vm4731, %v1221, 0.0
    %v4812 = vsel %vm4732, %v1220, 0.0
    %v4813 = vsel %vm4733, %v1219, 0.0
    %v4814 = vsel %vm4734, %v1218, 0.0
    %v4815 = vsel %vm4735, %v1217, 0.0
    %v4816 = vsel %vm4736, %v1216, 0.0
    %v4817 = vsel %vm4737, %v1215, 0.0
    %v4818 = vsel %vm4738, %v1214, 0.0
    %v4819 = vsel %vm4739, %v1293, 0.0
    %v4820 = vmul.f32 %v4740, 0.036000773
    %v4821 = vmul.f32 %v4741, 0.036000773
    %v4822 = vmul.f32 %v4742, 0.036000773
    %v4823 = vmul.f32 %v4743, 0.036000773
    %v4824 = vmul.f32 %v4744, 0.036000773
    %v4825 = vmul.f32 %v4745, 0.036000773
    %v4826 = vmul.f32 %v4746, 0.036000773
    %v4827 = vmul.f32 %v4747, 0.036000773
    %v4828 = vmul.f32 %v4748, 0.036000773
    %v4829 = vmul.f32 %v4749, 0.036000773
    %v4830 = vmul.f32 %v4750, 0.036000773
    %v4831 = vmul.f32 %v4751, 0.036000773
    %v4832 = vmul.f32 %v4752, 0.036000773
    %v4833 = vmul.f32 %v4753, 0.036000773
    %v4834 = vmul.f32 %v4754, 0.036000773
    %v4835 = vmul.f32 %v4755, 0.036000773
    %v4836 = vmul.f32 %v4756, 0.036000773
    %v4837 = vmul.f32 %v4757, 0.036000773
    %v4838 = vmul.f32 %v4758, 0.036000773
    %v4839 = vmul.f32 %v4759, 0.036000773
    %v4840 = vmul.f32 %v4760, 0.036000773
    %v4841 = vmul.f32 %v4761, 0.036000773
    %v4842 = vmul.f32 %v4762, 0.036000773
    %v4843 = vmul.f32 %v4763, 0.036000773
    %v4844 = vmul.f32 %v4764, 0.036000773
    %v4845 = vmul.f32 %v4765, 0.036000773
    %v4846 = vmul.f32 %v4766, 0.036000773
    %v4847 = vmul.f32 %v4767, 0.036000773
    %v4848 = vmul.f32 %v4768, 0.036000773
    %v4849 = vmul.f32 %v4769, 0.036000773
    %v4850 = vmul.f32 %v4770, 0.036000773
    %v4851 = vmul.f32 %v4771, 0.036000773
    %v4852 = vmul.f32 %v4772, 0.036000773
    %v4853 = vmul.f32 %v4773, 0.036000773
    %v4854 = vmul.f32 %v4774, 0.036000773
    %v4855 = vmul.f32 %v4775, 0.036000773
    %v4856 = vmul.f32 %v4776, 0.036000773
    %v4857 = vmul.f32 %v4777, 0.036000773
    %v4858 = vmul.f32 %v4778, 0.036000773
    %v4859 = vmul.f32 %v4779, 0.036000773
    %v4860 = vmul.f32 %v4780, 0.036000773
    %v4861 = vmul.f32 %v4781, 0.036000773
    %v4862 = vmul.f32 %v4782, 0.036000773
    %v4863 = vmul.f32 %v4783, 0.036000773
    %v4864 = vmul.f32 %v4784, 0.036000773
    %v4865 = vmul.f32 %v4785, 0.036000773
    %v4866 = vmul.f32 %v4786, 0.036000773
    %v4867 = vmul.f32 %v4787, 0.036000773
    %v4868 = vmul.f32 %v4788, 0.036000773
    %v4869 = vmul.f32 %v4789, 0.036000773
    %v4870 = vmul.f32 %v4790, 0.036000773
    %v4871 = vmul.f32 %v4791, 0.036000773
    %v4872 = vmul.f32 %v4792, 0.036000773
    %v4873 = vmul.f32 %v4793, 0.036000773
    %v4874 = vmul.f32 %v4794, 0.036000773
    %v4875 = vmul.f32 %v4795, 0.036000773
    %v4876 = vmul.f32 %v4796, 0.036000773
    %v4877 = vmul.f32 %v4797, 0.036000773
    %v4878 = vmul.f32 %v4798, 0.036000773
    %v4879 = vmul.f32 %v4799, 0.036000773
    %v4880 = vmul.f32 %v4800, 0.036000773
    %v4881 = vmul.f32 %v4801, 0.036000773
    %v4882 = vmul.f32 %v4802, 0.036000773
    %v4883 = vmul.f32 %v4803, 0.036000773
    %v4884 = vmul.f32 %v4804, 0.036000773
    %v4885 = vmul.f32 %v4805, 0.036000773
    %v4886 = vmul.f32 %v4806, 0.036000773
    %v4887 = vmul.f32 %v4807, 0.036000773
    %v4888 = vmul.f32 %v4808, 0.036000773
    %v4889 = vmul.f32 %v4809, 0.036000773
    %v4890 = vmul.f32 %v4810, 0.036000773
    %v4891 = vmul.f32 %v4811, 0.036000773
    %v4892 = vmul.f32 %v4812, 0.036000773
    %v4893 = vmul.f32 %v4813, 0.036000773
    %v4894 = vmul.f32 %v4814, 0.036000773
    %v4895 = vmul.f32 %v4815, 0.036000773
    %v4896 = vmul.f32 %v4816, 0.036000773
    %v4897 = vmul.f32 %v4817, 0.036000773
    %v4898 = vmul.f32 %v4818, 0.036000773
    %v4899 = vmul.f32 %v4819, 0.036000773
    %v4900 = vadd.f32 %v4580, %v4820
    %v4901 = vadd.f32 %v4581, %v4821
    %v4902 = vadd.f32 %v4582, %v4822
    %v4903 = vadd.f32 %v4583, %v4823
    %v4904 = vadd.f32 %v4584, %v4824
    %v4905 = vadd.f32 %v4585, %v4825
    %v4906 = vadd.f32 %v4586, %v4826
    %v4907 = vadd.f32 %v4587, %v4827
    %v4908 = vadd.f32 %v4588, %v4828
    %v4909 = vadd.f32 %v4589, %v4829
    %v4910 = vadd.f32 %v4590, %v4830
    %v4911 = vadd.f32 %v4591, %v4831
    %v4912 = vadd.f32 %v4592, %v4832
    %v4913 = vadd.f32 %v4593, %v4833
    %v4914 = vadd.f32 %v4594, %v4834
    %v4915 = vadd.f32 %v4595, %v4835
    %v4916 = vadd.f32 %v4596, %v4836
    %v4917 = vadd.f32 %v4597, %v4837
    %v4918 = vadd.f32 %v4598, %v4838
    %v4919 = vadd.f32 %v4599, %v4839
    %v4920 = vadd.f32 %v4600, %v4840
    %v4921 = vadd.f32 %v4601, %v4841
    %v4922 = vadd.f32 %v4602, %v4842
    %v4923 = vadd.f32 %v4603, %v4843
    %v4924 = vadd.f32 %v4604, %v4844
    %v4925 = vadd.f32 %v4605, %v4845
    %v4926 = vadd.f32 %v4606, %v4846
    %v4927 = vadd.f32 %v4607, %v4847
    %v4928 = vadd.f32 %v4608, %v4848
    %v4929 = vadd.f32 %v4609, %v4849
    %v4930 = vadd.f32 %v4610, %v4850
    %v4931 = vadd.f32 %v4611, %v4851
    %v4932 = vadd.f32 %v4612, %v4852
    %v4933 = vadd.f32 %v4613, %v4853
    %v4934 = vadd.f32 %v4614, %v4854
    %v4935 = vadd.f32 %v4615, %v4855
    %v4936 = vadd.f32 %v4616, %v4856
    %v4937 = vadd.f32 %v4617, %v4857
    %v4938 = vadd.f32 %v4618, %v4858
    %v4939 = vadd.f32 %v4619, %v4859
    %v4940 = vadd.f32 %v4620, %v4860
    %v4941 = vadd.f32 %v4621, %v4861
    %v4942 = vadd.f32 %v4622, %v4862
    %v4943 = vadd.f32 %v4623, %v4863
    %v4944 = vadd.f32 %v4624, %v4864
    %v4945 = vadd.f32 %v4625, %v4865
    %v4946 = vadd.f32 %v4626, %v4866
    %v4947 = vadd.f32 %v4627, %v4867
    %v4948 = vadd.f32 %v4628, %v4868
    %v4949 = vadd.f32 %v4629, %v4869
    %v4950 = vadd.f32 %v4630, %v4870
    %v4951 = vadd.f32 %v4631, %v4871
    %v4952 = vadd.f32 %v4632, %v4872
    %v4953 = vadd.f32 %v4633, %v4873
    %v4954 = vadd.f32 %v4634, %v4874
    %v4955 = vadd.f32 %v4635, %v4875
    %v4956 = vadd.f32 %v4636, %v4876
    %v4957 = vadd.f32 %v4637, %v4877
    %v4958 = vadd.f32 %v4638, %v4878
    %v4959 = vadd.f32 %v4639, %v4879
    %v4960 = vadd.f32 %v4640, %v4880
    %v4961 = vadd.f32 %v4641, %v4881
    %v4962 = vadd.f32 %v4642, %v4882
    %v4963 = vadd.f32 %v4643, %v4883
    %v4964 = vadd.f32 %v4644, %v4884
    %v4965 = vadd.f32 %v4645, %v4885
    %v4966 = vadd.f32 %v4646, %v4886
    %v4967 = vadd.f32 %v4647, %v4887
    %v4968 = vadd.f32 %v4648, %v4888
    %v4969 = vadd.f32 %v4649, %v4889
    %v4970 = vadd.f32 %v4650, %v4890
    %v4971 = vadd.f32 %v4651, %v4891
    %v4972 = vadd.f32 %v4652, %v4892
    %v4973 = vadd.f32 %v4653, %v4893
    %v4974 = vadd.f32 %v4654, %v4894
    %v4975 = vadd.f32 %v4655, %v4895
    %v4976 = vadd.f32 %v4656, %v4896
    %v4977 = vadd.f32 %v4657, %v4897
    %v4978 = vadd.f32 %v4658, %v4898
    %v4979 = vadd.f32 %v4659, %v4899
    %vm4980 = vcmp.lt.s32.totalorder %v1053, 12
    %vm4981 = vcmp.lt.s32.totalorder %v1054, 12
    %vm4982 = vcmp.lt.s32.totalorder %v1055, 12
    %vm4983 = vcmp.lt.s32.totalorder %v1056, 12
    %vm4984 = vcmp.lt.s32.totalorder %v1057, 12
    %vm4985 = vcmp.lt.s32.totalorder %v1058, 12
    %vm4986 = vcmp.lt.s32.totalorder %v1059, 12
    %vm4987 = vcmp.lt.s32.totalorder %v1060, 12
    %vm4988 = vcmp.lt.s32.totalorder %v1061, 12
    %vm4989 = vcmp.lt.s32.totalorder %v1062, 12
    %vm4990 = vcmp.lt.s32.totalorder %v1063, 12
    %vm4991 = vcmp.lt.s32.totalorder %v1064, 12
    %vm4992 = vcmp.lt.s32.totalorder %v1065, 12
    %vm4993 = vcmp.lt.s32.totalorder %v1066, 12
    %vm4994 = vcmp.lt.s32.totalorder %v1067, 12
    %vm4995 = vcmp.lt.s32.totalorder %v1068, 12
    %vm4996 = vcmp.lt.s32.totalorder %v1069, 12
    %vm4997 = vcmp.lt.s32.totalorder %v1070, 12
    %vm4998 = vcmp.lt.s32.totalorder %v1071, 12
    %vm4999 = vcmp.lt.s32.totalorder %v1072, 12
    %vm5000 = vcmp.lt.s32.totalorder %v1073, 12
    %vm5001 = vcmp.lt.s32.totalorder %v1074, 12
    %vm5002 = vcmp.lt.s32.totalorder %v1075, 12
    %vm5003 = vcmp.lt.s32.totalorder %v1076, 12
    %vm5004 = vcmp.lt.s32.totalorder %v1077, 12
    %vm5005 = vcmp.lt.s32.totalorder %v1078, 12
    %vm5006 = vcmp.lt.s32.totalorder %v1079, 12
    %vm5007 = vcmp.lt.s32.totalorder %v1080, 12
    %vm5008 = vcmp.lt.s32.totalorder %v1081, 12
    %vm5009 = vcmp.lt.s32.totalorder %v1082, 12
    %vm5010 = vcmp.lt.s32.totalorder %v1083, 12
    %vm5011 = vcmp.lt.s32.totalorder %v1084, 12
    %vm5012 = vcmp.lt.s32.totalorder %v1085, 12
    %vm5013 = vcmp.lt.s32.totalorder %v1086, 12
    %vm5014 = vcmp.lt.s32.totalorder %v1087, 12
    %vm5015 = vcmp.lt.s32.totalorder %v1088, 12
    %vm5016 = vcmp.lt.s32.totalorder %v1089, 12
    %vm5017 = vcmp.lt.s32.totalorder %v1090, 12
    %vm5018 = vcmp.lt.s32.totalorder %v1091, 12
    %vm5019 = vcmp.lt.s32.totalorder %v1092, 12
    %vm5020 = vcmp.lt.s32.totalorder %v1093, 12
    %vm5021 = vcmp.lt.s32.totalorder %v1094, 12
    %vm5022 = vcmp.lt.s32.totalorder %v1095, 12
    %vm5023 = vcmp.lt.s32.totalorder %v1096, 12
    %vm5024 = vcmp.lt.s32.totalorder %v1097, 12
    %vm5025 = vcmp.lt.s32.totalorder %v1098, 12
    %vm5026 = vcmp.lt.s32.totalorder %v1099, 12
    %vm5027 = vcmp.lt.s32.totalorder %v1100, 12
    %vm5028 = vcmp.lt.s32.totalorder %v1101, 12
    %vm5029 = vcmp.lt.s32.totalorder %v1102, 12
    %vm5030 = vcmp.lt.s32.totalorder %v1103, 12
    %vm5031 = vcmp.lt.s32.totalorder %v1104, 12
    %vm5032 = vcmp.lt.s32.totalorder %v1105, 12
    %vm5033 = vcmp.lt.s32.totalorder %v1106, 12
    %vm5034 = vcmp.lt.s32.totalorder %v1107, 12
    %vm5035 = vcmp.lt.s32.totalorder %v1108, 12
    %vm5036 = vcmp.lt.s32.totalorder %v1109, 12
    %vm5037 = vcmp.lt.s32.totalorder %v1110, 12
    %vm5038 = vcmp.lt.s32.totalorder %v1111, 12
    %vm5039 = vcmp.lt.s32.totalorder %v1112, 12
    %vm5040 = vcmp.lt.s32.totalorder %v1113, 12
    %vm5041 = vcmp.lt.s32.totalorder %v1114, 12
    %vm5042 = vcmp.lt.s32.totalorder %v1115, 12
    %vm5043 = vcmp.lt.s32.totalorder %v1116, 12
    %vm5044 = vcmp.lt.s32.totalorder %v1117, 12
    %vm5045 = vcmp.lt.s32.totalorder %v1118, 12
    %vm5046 = vcmp.lt.s32.totalorder %v1119, 12
    %vm5047 = vcmp.lt.s32.totalorder %v1120, 12
    %vm5048 = vcmp.lt.s32.totalorder %v1121, 12
    %vm5049 = vcmp.lt.s32.totalorder %v1122, 12
    %vm5050 = vcmp.lt.s32.totalorder %v1123, 12
    %vm5051 = vcmp.lt.s32.totalorder %v1124, 12
    %vm5052 = vcmp.lt.s32.totalorder %v1125, 12
    %vm5053 = vcmp.lt.s32.totalorder %v1126, 12
    %vm5054 = vcmp.lt.s32.totalorder %v1127, 12
    %vm5055 = vcmp.lt.s32.totalorder %v1128, 12
    %vm5056 = vcmp.lt.s32.totalorder %v1129, 12
    %vm5057 = vcmp.lt.s32.totalorder %v1130, 12
    %vm5058 = vcmp.lt.s32.totalorder %v1131, 12
    %vm5059 = vcmp.lt.s32.totalorder %v1132, 12
    %v5060 = vsel %vm4980, %v1773, 0.0
    %v5061 = vsel %vm4981, %v1772, 0.0
    %v5062 = vsel %vm4982, %v1771, 0.0
    %v5063 = vsel %vm4983, %v1770, 0.0
    %v5064 = vsel %vm4984, %v1769, 0.0
    %v5065 = vsel %vm4985, %v1768, 0.0
    %v5066 = vsel %vm4986, %v1767, 0.0
    %v5067 = vsel %vm4987, %v1766, 0.0
    %v5068 = vsel %vm4988, %v1765, 0.0
    %v5069 = vsel %vm4989, %v1764, 0.0
    %v5070 = vsel %vm4990, %v1763, 0.0
    %v5071 = vsel %vm4991, %v1762, 0.0
    %v5072 = vsel %vm4992, %v1761, 0.0
    %v5073 = vsel %vm4993, %v1760, 0.0
    %v5074 = vsel %vm4994, %v1759, 0.0
    %v5075 = vsel %vm4995, %v1758, 0.0
    %v5076 = vsel %vm4996, %v1757, 0.0
    %v5077 = vsel %vm4997, %v1756, 0.0
    %v5078 = vsel %vm4998, %v1755, 0.0
    %v5079 = vsel %vm4999, %v1754, 0.0
    %v5080 = vsel %vm5000, %v1753, 0.0
    %v5081 = vsel %vm5001, %v1752, 0.0
    %v5082 = vsel %vm5002, %v1751, 0.0
    %v5083 = vsel %vm5003, %v1750, 0.0
    %v5084 = vsel %vm5004, %v1749, 0.0
    %v5085 = vsel %vm5005, %v1748, 0.0
    %v5086 = vsel %vm5006, %v1747, 0.0
    %v5087 = vsel %vm5007, %v1746, 0.0
    %v5088 = vsel %vm5008, %v1745, 0.0
    %v5089 = vsel %vm5009, %v1744, 0.0
    %v5090 = vsel %vm5010, %v1743, 0.0
    %v5091 = vsel %vm5011, %v1742, 0.0
    %v5092 = vsel %vm5012, %v1741, 0.0
    %v5093 = vsel %vm5013, %v1740, 0.0
    %v5094 = vsel %vm5014, %v1739, 0.0
    %v5095 = vsel %vm5015, %v1738, 0.0
    %v5096 = vsel %vm5016, %v1737, 0.0
    %v5097 = vsel %vm5017, %v1736, 0.0
    %v5098 = vsel %vm5018, %v1735, 0.0
    %v5099 = vsel %vm5019, %v1734, 0.0
    %v5100 = vsel %vm5020, %v1733, 0.0
    %v5101 = vsel %vm5021, %v1732, 0.0
    %v5102 = vsel %vm5022, %v1731, 0.0
    %v5103 = vsel %vm5023, %v1730, 0.0
    %v5104 = vsel %vm5024, %v1729, 0.0
    %v5105 = vsel %vm5025, %v1728, 0.0
    %v5106 = vsel %vm5026, %v1727, 0.0
    %v5107 = vsel %vm5027, %v1726, 0.0
    %v5108 = vsel %vm5028, %v1725, 0.0
    %v5109 = vsel %vm5029, %v1724, 0.0
    %v5110 = vsel %vm5030, %v1723, 0.0
    %v5111 = vsel %vm5031, %v1722, 0.0
    %v5112 = vsel %vm5032, %v1721, 0.0
    %v5113 = vsel %vm5033, %v1720, 0.0
    %v5114 = vsel %vm5034, %v1719, 0.0
    %v5115 = vsel %vm5035, %v1718, 0.0
    %v5116 = vsel %vm5036, %v1717, 0.0
    %v5117 = vsel %vm5037, %v1716, 0.0
    %v5118 = vsel %vm5038, %v1715, 0.0
    %v5119 = vsel %vm5039, %v1714, 0.0
    %v5120 = vsel %vm5040, %v1713, 0.0
    %v5121 = vsel %vm5041, %v1712, 0.0
    %v5122 = vsel %vm5042, %v1711, 0.0
    %v5123 = vsel %vm5043, %v1710, 0.0
    %v5124 = vsel %vm5044, %v1709, 0.0
    %v5125 = vsel %vm5045, %v1708, 0.0
    %v5126 = vsel %vm5046, %v1707, 0.0
    %v5127 = vsel %vm5047, %v1706, 0.0
    %v5128 = vsel %vm5048, %v1705, 0.0
    %v5129 = vsel %vm5049, %v1704, 0.0
    %v5130 = vsel %vm5050, %v1703, 0.0
    %v5131 = vsel %vm5051, %v1702, 0.0
    %v5132 = vsel %vm5052, %v1701, 0.0
    %v5133 = vsel %vm5053, %v1700, 0.0
    %v5134 = vsel %vm5054, %v1699, 0.0
    %v5135 = vsel %vm5055, %v1698, 0.0
    %v5136 = vsel %vm5056, %v1697, 0.0
    %v5137 = vsel %vm5057, %v1696, 0.0
    %v5138 = vsel %vm5058, %v1695, 0.0
    %v5139 = vsel %vm5059, %v1774, 0.0
    %v5140 = vmul.f32 %v5060, 0.007598758
    %v5141 = vmul.f32 %v5061, 0.007598758
    %v5142 = vmul.f32 %v5062, 0.007598758
    %v5143 = vmul.f32 %v5063, 0.007598758
    %v5144 = vmul.f32 %v5064, 0.007598758
    %v5145 = vmul.f32 %v5065, 0.007598758
    %v5146 = vmul.f32 %v5066, 0.007598758
    %v5147 = vmul.f32 %v5067, 0.007598758
    %v5148 = vmul.f32 %v5068, 0.007598758
    %v5149 = vmul.f32 %v5069, 0.007598758
    %v5150 = vmul.f32 %v5070, 0.007598758
    %v5151 = vmul.f32 %v5071, 0.007598758
    %v5152 = vmul.f32 %v5072, 0.007598758
    %v5153 = vmul.f32 %v5073, 0.007598758
    %v5154 = vmul.f32 %v5074, 0.007598758
    %v5155 = vmul.f32 %v5075, 0.007598758
    %v5156 = vmul.f32 %v5076, 0.007598758
    %v5157 = vmul.f32 %v5077, 0.007598758
    %v5158 = vmul.f32 %v5078, 0.007598758
    %v5159 = vmul.f32 %v5079, 0.007598758
    %v5160 = vmul.f32 %v5080, 0.007598758
    %v5161 = vmul.f32 %v5081, 0.007598758
    %v5162 = vmul.f32 %v5082, 0.007598758
    %v5163 = vmul.f32 %v5083, 0.007598758
    %v5164 = vmul.f32 %v5084, 0.007598758
    %v5165 = vmul.f32 %v5085, 0.007598758
    %v5166 = vmul.f32 %v5086, 0.007598758
    %v5167 = vmul.f32 %v5087, 0.007598758
    %v5168 = vmul.f32 %v5088, 0.007598758
    %v5169 = vmul.f32 %v5089, 0.007598758
    %v5170 = vmul.f32 %v5090, 0.007598758
    %v5171 = vmul.f32 %v5091, 0.007598758
    %v5172 = vmul.f32 %v5092, 0.007598758
    %v5173 = vmul.f32 %v5093, 0.007598758
    %v5174 = vmul.f32 %v5094, 0.007598758
    %v5175 = vmul.f32 %v5095, 0.007598758
    %v5176 = vmul.f32 %v5096, 0.007598758
    %v5177 = vmul.f32 %v5097, 0.007598758
    %v5178 = vmul.f32 %v5098, 0.007598758
    %v5179 = vmul.f32 %v5099, 0.007598758
    %v5180 = vmul.f32 %v5100, 0.007598758
    %v5181 = vmul.f32 %v5101, 0.007598758
    %v5182 = vmul.f32 %v5102, 0.007598758
    %v5183 = vmul.f32 %v5103, 0.007598758
    %v5184 = vmul.f32 %v5104, 0.007598758
    %v5185 = vmul.f32 %v5105, 0.007598758
    %v5186 = vmul.f32 %v5106, 0.007598758
    %v5187 = vmul.f32 %v5107, 0.007598758
    %v5188 = vmul.f32 %v5108, 0.007598758
    %v5189 = vmul.f32 %v5109, 0.007598758
    %v5190 = vmul.f32 %v5110, 0.007598758
    %v5191 = vmul.f32 %v5111, 0.007598758
    %v5192 = vmul.f32 %v5112, 0.007598758
    %v5193 = vmul.f32 %v5113, 0.007598758
    %v5194 = vmul.f32 %v5114, 0.007598758
    %v5195 = vmul.f32 %v5115, 0.007598758
    %v5196 = vmul.f32 %v5116, 0.007598758
    %v5197 = vmul.f32 %v5117, 0.007598758
    %v5198 = vmul.f32 %v5118, 0.007598758
    %v5199 = vmul.f32 %v5119, 0.007598758
    %v5200 = vmul.f32 %v5120, 0.007598758
    %v5201 = vmul.f32 %v5121, 0.007598758
    %v5202 = vmul.f32 %v5122, 0.007598758
    %v5203 = vmul.f32 %v5123, 0.007598758
    %v5204 = vmul.f32 %v5124, 0.007598758
    %v5205 = vmul.f32 %v5125, 0.007598758
    %v5206 = vmul.f32 %v5126, 0.007598758
    %v5207 = vmul.f32 %v5127, 0.007598758
    %v5208 = vmul.f32 %v5128, 0.007598758
    %v5209 = vmul.f32 %v5129, 0.007598758
    %v5210 = vmul.f32 %v5130, 0.007598758
    %v5211 = vmul.f32 %v5131, 0.007598758
    %v5212 = vmul.f32 %v5132, 0.007598758
    %v5213 = vmul.f32 %v5133, 0.007598758
    %v5214 = vmul.f32 %v5134, 0.007598758
    %v5215 = vmul.f32 %v5135, 0.007598758
    %v5216 = vmul.f32 %v5136, 0.007598758
    %v5217 = vmul.f32 %v5137, 0.007598758
    %v5218 = vmul.f32 %v5138, 0.007598758
    %v5219 = vmul.f32 %v5139, 0.007598758
    %v5220 = vadd.f32 %v4900, %v5140
    %v5221 = vadd.f32 %v4901, %v5141
    %v5222 = vadd.f32 %v4902, %v5142
    %v5223 = vadd.f32 %v4903, %v5143
    %v5224 = vadd.f32 %v4904, %v5144
    %v5225 = vadd.f32 %v4905, %v5145
    %v5226 = vadd.f32 %v4906, %v5146
    %v5227 = vadd.f32 %v4907, %v5147
    %v5228 = vadd.f32 %v4908, %v5148
    %v5229 = vadd.f32 %v4909, %v5149
    %v5230 = vadd.f32 %v4910, %v5150
    %v5231 = vadd.f32 %v4911, %v5151
    %v5232 = vadd.f32 %v4912, %v5152
    %v5233 = vadd.f32 %v4913, %v5153
    %v5234 = vadd.f32 %v4914, %v5154
    %v5235 = vadd.f32 %v4915, %v5155
    %v5236 = vadd.f32 %v4916, %v5156
    %v5237 = vadd.f32 %v4917, %v5157
    %v5238 = vadd.f32 %v4918, %v5158
    %v5239 = vadd.f32 %v4919, %v5159
    %v5240 = vadd.f32 %v4920, %v5160
    %v5241 = vadd.f32 %v4921, %v5161
    %v5242 = vadd.f32 %v4922, %v5162
    %v5243 = vadd.f32 %v4923, %v5163
    %v5244 = vadd.f32 %v4924, %v5164
    %v5245 = vadd.f32 %v4925, %v5165
    %v5246 = vadd.f32 %v4926, %v5166
    %v5247 = vadd.f32 %v4927, %v5167
    %v5248 = vadd.f32 %v4928, %v5168
    %v5249 = vadd.f32 %v4929, %v5169
    %v5250 = vadd.f32 %v4930, %v5170
    %v5251 = vadd.f32 %v4931, %v5171
    %v5252 = vadd.f32 %v4932, %v5172
    %v5253 = vadd.f32 %v4933, %v5173
    %v5254 = vadd.f32 %v4934, %v5174
    %v5255 = vadd.f32 %v4935, %v5175
    %v5256 = vadd.f32 %v4936, %v5176
    %v5257 = vadd.f32 %v4937, %v5177
    %v5258 = vadd.f32 %v4938, %v5178
    %v5259 = vadd.f32 %v4939, %v5179
    %v5260 = vadd.f32 %v4940, %v5180
    %v5261 = vadd.f32 %v4941, %v5181
    %v5262 = vadd.f32 %v4942, %v5182
    %v5263 = vadd.f32 %v4943, %v5183
    %v5264 = vadd.f32 %v4944, %v5184
    %v5265 = vadd.f32 %v4945, %v5185
    %v5266 = vadd.f32 %v4946, %v5186
    %v5267 = vadd.f32 %v4947, %v5187
    %v5268 = vadd.f32 %v4948, %v5188
    %v5269 = vadd.f32 %v4949, %v5189
    %v5270 = vadd.f32 %v4950, %v5190
    %v5271 = vadd.f32 %v4951, %v5191
    %v5272 = vadd.f32 %v4952, %v5192
    %v5273 = vadd.f32 %v4953, %v5193
    %v5274 = vadd.f32 %v4954, %v5194
    %v5275 = vadd.f32 %v4955, %v5195
    %v5276 = vadd.f32 %v4956, %v5196
    %v5277 = vadd.f32 %v4957, %v5197
    %v5278 = vadd.f32 %v4958, %v5198
    %v5279 = vadd.f32 %v4959, %v5199
    %v5280 = vadd.f32 %v4960, %v5200
    %v5281 = vadd.f32 %v4961, %v5201
    %v5282 = vadd.f32 %v4962, %v5202
    %v5283 = vadd.f32 %v4963, %v5203
    %v5284 = vadd.f32 %v4964, %v5204
    %v5285 = vadd.f32 %v4965, %v5205
    %v5286 = vadd.f32 %v4966, %v5206
    %v5287 = vadd.f32 %v4967, %v5207
    %v5288 = vadd.f32 %v4968, %v5208
    %v5289 = vadd.f32 %v4969, %v5209
    %v5290 = vadd.f32 %v4970, %v5210
    %v5291 = vadd.f32 %v4971, %v5211
    %v5292 = vadd.f32 %v4972, %v5212
    %v5293 = vadd.f32 %v4973, %v5213
    %v5294 = vadd.f32 %v4974, %v5214
    %v5295 = vadd.f32 %v4975, %v5215
    %v5296 = vadd.f32 %v4976, %v5216
    %v5297 = vadd.f32 %v4977, %v5217
    %v5298 = vadd.f32 %v4978, %v5218
    %v5299 = vadd.f32 %v4979, %v5219
    %vm5300 = vcmp.lt.s32.totalorder %v1053, 11
    %vm5301 = vcmp.lt.s32.totalorder %v1054, 11
    %vm5302 = vcmp.lt.s32.totalorder %v1055, 11
    %vm5303 = vcmp.lt.s32.totalorder %v1056, 11
    %vm5304 = vcmp.lt.s32.totalorder %v1057, 11
    %vm5305 = vcmp.lt.s32.totalorder %v1058, 11
    %vm5306 = vcmp.lt.s32.totalorder %v1059, 11
    %vm5307 = vcmp.lt.s32.totalorder %v1060, 11
    %vm5308 = vcmp.lt.s32.totalorder %v1061, 11
    %vm5309 = vcmp.lt.s32.totalorder %v1062, 11
    %vm5310 = vcmp.lt.s32.totalorder %v1063, 11
    %vm5311 = vcmp.lt.s32.totalorder %v1064, 11
    %vm5312 = vcmp.lt.s32.totalorder %v1065, 11
    %vm5313 = vcmp.lt.s32.totalorder %v1066, 11
    %vm5314 = vcmp.lt.s32.totalorder %v1067, 11
    %vm5315 = vcmp.lt.s32.totalorder %v1068, 11
    %vm5316 = vcmp.lt.s32.totalorder %v1069, 11
    %vm5317 = vcmp.lt.s32.totalorder %v1070, 11
    %vm5318 = vcmp.lt.s32.totalorder %v1071, 11
    %vm5319 = vcmp.lt.s32.totalorder %v1072, 11
    %vm5320 = vcmp.lt.s32.totalorder %v1073, 11
    %vm5321 = vcmp.lt.s32.totalorder %v1074, 11
    %vm5322 = vcmp.lt.s32.totalorder %v1075, 11
    %vm5323 = vcmp.lt.s32.totalorder %v1076, 11
    %vm5324 = vcmp.lt.s32.totalorder %v1077, 11
    %vm5325 = vcmp.lt.s32.totalorder %v1078, 11
    %vm5326 = vcmp.lt.s32.totalorder %v1079, 11
    %vm5327 = vcmp.lt.s32.totalorder %v1080, 11
    %vm5328 = vcmp.lt.s32.totalorder %v1081, 11
    %vm5329 = vcmp.lt.s32.totalorder %v1082, 11
    %vm5330 = vcmp.lt.s32.totalorder %v1083, 11
    %vm5331 = vcmp.lt.s32.totalorder %v1084, 11
    %vm5332 = vcmp.lt.s32.totalorder %v1085, 11
    %vm5333 = vcmp.lt.s32.totalorder %v1086, 11
    %vm5334 = vcmp.lt.s32.totalorder %v1087, 11
    %vm5335 = vcmp.lt.s32.totalorder %v1088, 11
    %vm5336 = vcmp.lt.s32.totalorder %v1089, 11
    %vm5337 = vcmp.lt.s32.totalorder %v1090, 11
    %vm5338 = vcmp.lt.s32.totalorder %v1091, 11
    %vm5339 = vcmp.lt.s32.totalorder %v1092, 11
    %vm5340 = vcmp.lt.s32.totalorder %v1093, 11
    %vm5341 = vcmp.lt.s32.totalorder %v1094, 11
    %vm5342 = vcmp.lt.s32.totalorder %v1095, 11
    %vm5343 = vcmp.lt.s32.totalorder %v1096, 11
    %vm5344 = vcmp.lt.s32.totalorder %v1097, 11
    %vm5345 = vcmp.lt.s32.totalorder %v1098, 11
    %vm5346 = vcmp.lt.s32.totalorder %v1099, 11
    %vm5347 = vcmp.lt.s32.totalorder %v1100, 11
    %vm5348 = vcmp.lt.s32.totalorder %v1101, 11
    %vm5349 = vcmp.lt.s32.totalorder %v1102, 11
    %vm5350 = vcmp.lt.s32.totalorder %v1103, 11
    %vm5351 = vcmp.lt.s32.totalorder %v1104, 11
    %vm5352 = vcmp.lt.s32.totalorder %v1105, 11
    %vm5353 = vcmp.lt.s32.totalorder %v1106, 11
    %vm5354 = vcmp.lt.s32.totalorder %v1107, 11
    %vm5355 = vcmp.lt.s32.totalorder %v1108, 11
    %vm5356 = vcmp.lt.s32.totalorder %v1109, 11
    %vm5357 = vcmp.lt.s32.totalorder %v1110, 11
    %vm5358 = vcmp.lt.s32.totalorder %v1111, 11
    %vm5359 = vcmp.lt.s32.totalorder %v1112, 11
    %vm5360 = vcmp.lt.s32.totalorder %v1113, 11
    %vm5361 = vcmp.lt.s32.totalorder %v1114, 11
    %vm5362 = vcmp.lt.s32.totalorder %v1115, 11
    %vm5363 = vcmp.lt.s32.totalorder %v1116, 11
    %vm5364 = vcmp.lt.s32.totalorder %v1117, 11
    %vm5365 = vcmp.lt.s32.totalorder %v1118, 11
    %vm5366 = vcmp.lt.s32.totalorder %v1119, 11
    %vm5367 = vcmp.lt.s32.totalorder %v1120, 11
    %vm5368 = vcmp.lt.s32.totalorder %v1121, 11
    %vm5369 = vcmp.lt.s32.totalorder %v1122, 11
    %vm5370 = vcmp.lt.s32.totalorder %v1123, 11
    %vm5371 = vcmp.lt.s32.totalorder %v1124, 11
    %vm5372 = vcmp.lt.s32.totalorder %v1125, 11
    %vm5373 = vcmp.lt.s32.totalorder %v1126, 11
    %vm5374 = vcmp.lt.s32.totalorder %v1127, 11
    %vm5375 = vcmp.lt.s32.totalorder %v1128, 11
    %vm5376 = vcmp.lt.s32.totalorder %v1129, 11
    %vm5377 = vcmp.lt.s32.totalorder %v1130, 11
    %vm5378 = vcmp.lt.s32.totalorder %v1131, 11
    %vm5379 = vcmp.lt.s32.totalorder %v1132, 11
    %v5380 = vsel %vm5300, %v2254, 0.0
    %v5381 = vsel %vm5301, %v2253, 0.0
    %v5382 = vsel %vm5302, %v2252, 0.0
    %v5383 = vsel %vm5303, %v2251, 0.0
    %v5384 = vsel %vm5304, %v2250, 0.0
    %v5385 = vsel %vm5305, %v2249, 0.0
    %v5386 = vsel %vm5306, %v2248, 0.0
    %v5387 = vsel %vm5307, %v2247, 0.0
    %v5388 = vsel %vm5308, %v2246, 0.0
    %v5389 = vsel %vm5309, %v2245, 0.0
    %v5390 = vsel %vm5310, %v2244, 0.0
    %v5391 = vsel %vm5311, %v2243, 0.0
    %v5392 = vsel %vm5312, %v2242, 0.0
    %v5393 = vsel %vm5313, %v2241, 0.0
    %v5394 = vsel %vm5314, %v2240, 0.0
    %v5395 = vsel %vm5315, %v2239, 0.0
    %v5396 = vsel %vm5316, %v2238, 0.0
    %v5397 = vsel %vm5317, %v2237, 0.0
    %v5398 = vsel %vm5318, %v2236, 0.0
    %v5399 = vsel %vm5319, %v2235, 0.0
    %v5400 = vsel %vm5320, %v2234, 0.0
    %v5401 = vsel %vm5321, %v2233, 0.0
    %v5402 = vsel %vm5322, %v2232, 0.0
    %v5403 = vsel %vm5323, %v2231, 0.0
    %v5404 = vsel %vm5324, %v2230, 0.0
    %v5405 = vsel %vm5325, %v2229, 0.0
    %v5406 = vsel %vm5326, %v2228, 0.0
    %v5407 = vsel %vm5327, %v2227, 0.0
    %v5408 = vsel %vm5328, %v2226, 0.0
    %v5409 = vsel %vm5329, %v2225, 0.0
    %v5410 = vsel %vm5330, %v2224, 0.0
    %v5411 = vsel %vm5331, %v2223, 0.0
    %v5412 = vsel %vm5332, %v2222, 0.0
    %v5413 = vsel %vm5333, %v2221, 0.0
    %v5414 = vsel %vm5334, %v2220, 0.0
    %v5415 = vsel %vm5335, %v2219, 0.0
    %v5416 = vsel %vm5336, %v2218, 0.0
    %v5417 = vsel %vm5337, %v2217, 0.0
    %v5418 = vsel %vm5338, %v2216, 0.0
    %v5419 = vsel %vm5339, %v2215, 0.0
    %v5420 = vsel %vm5340, %v2214, 0.0
    %v5421 = vsel %vm5341, %v2213, 0.0
    %v5422 = vsel %vm5342, %v2212, 0.0
    %v5423 = vsel %vm5343, %v2211, 0.0
    %v5424 = vsel %vm5344, %v2210, 0.0
    %v5425 = vsel %vm5345, %v2209, 0.0
    %v5426 = vsel %vm5346, %v2208, 0.0
    %v5427 = vsel %vm5347, %v2207, 0.0
    %v5428 = vsel %vm5348, %v2206, 0.0
    %v5429 = vsel %vm5349, %v2205, 0.0
    %v5430 = vsel %vm5350, %v2204, 0.0
    %v5431 = vsel %vm5351, %v2203, 0.0
    %v5432 = vsel %vm5352, %v2202, 0.0
    %v5433 = vsel %vm5353, %v2201, 0.0
    %v5434 = vsel %vm5354, %v2200, 0.0
    %v5435 = vsel %vm5355, %v2199, 0.0
    %v5436 = vsel %vm5356, %v2198, 0.0
    %v5437 = vsel %vm5357, %v2197, 0.0
    %v5438 = vsel %vm5358, %v2196, 0.0
    %v5439 = vsel %vm5359, %v2195, 0.0
    %v5440 = vsel %vm5360, %v2194, 0.0
    %v5441 = vsel %vm5361, %v2193, 0.0
    %v5442 = vsel %vm5362, %v2192, 0.0
    %v5443 = vsel %vm5363, %v2191, 0.0
    %v5444 = vsel %vm5364, %v2190, 0.0
    %v5445 = vsel %vm5365, %v2189, 0.0
    %v5446 = vsel %vm5366, %v2188, 0.0
    %v5447 = vsel %vm5367, %v2187, 0.0
    %v5448 = vsel %vm5368, %v2186, 0.0
    %v5449 = vsel %vm5369, %v2185, 0.0
    %v5450 = vsel %vm5370, %v2184, 0.0
    %v5451 = vsel %vm5371, %v2183, 0.0
    %v5452 = vsel %vm5372, %v2182, 0.0
    %v5453 = vsel %vm5373, %v2181, 0.0
    %v5454 = vsel %vm5374, %v2180, 0.0
    %v5455 = vsel %vm5375, %v2179, 0.0
    %v5456 = vsel %vm5376, %v2178, 0.0
    %v5457 = vsel %vm5377, %v2177, 0.0
    %v5458 = vsel %vm5378, %v2176, 0.0
    %v5459 = vsel %vm5379, %v2255, 0.0
    %v5460 = vmul.f32 %v5380, 0.0010283801
    %v5461 = vmul.f32 %v5381, 0.0010283801
    %v5462 = vmul.f32 %v5382, 0.0010283801
    %v5463 = vmul.f32 %v5383, 0.0010283801
    %v5464 = vmul.f32 %v5384, 0.0010283801
    %v5465 = vmul.f32 %v5385, 0.0010283801
    %v5466 = vmul.f32 %v5386, 0.0010283801
    %v5467 = vmul.f32 %v5387, 0.0010283801
    %v5468 = vmul.f32 %v5388, 0.0010283801
    %v5469 = vmul.f32 %v5389, 0.0010283801
    %v5470 = vmul.f32 %v5390, 0.0010283801
    %v5471 = vmul.f32 %v5391, 0.0010283801
    %v5472 = vmul.f32 %v5392, 0.0010283801
    %v5473 = vmul.f32 %v5393, 0.0010283801
    %v5474 = vmul.f32 %v5394, 0.0010283801
    %v5475 = vmul.f32 %v5395, 0.0010283801
    %v5476 = vmul.f32 %v5396, 0.0010283801
    %v5477 = vmul.f32 %v5397, 0.0010283801
    %v5478 = vmul.f32 %v5398, 0.0010283801
    %v5479 = vmul.f32 %v5399, 0.0010283801
    %v5480 = vmul.f32 %v5400, 0.0010283801
    %v5481 = vmul.f32 %v5401, 0.0010283801
    %v5482 = vmul.f32 %v5402, 0.0010283801
    %v5483 = vmul.f32 %v5403, 0.0010283801
    %v5484 = vmul.f32 %v5404, 0.0010283801
    %v5485 = vmul.f32 %v5405, 0.0010283801
    %v5486 = vmul.f32 %v5406, 0.0010283801
    %v5487 = vmul.f32 %v5407, 0.0010283801
    %v5488 = vmul.f32 %v5408, 0.0010283801
    %v5489 = vmul.f32 %v5409, 0.0010283801
    %v5490 = vmul.f32 %v5410, 0.0010283801
    %v5491 = vmul.f32 %v5411, 0.0010283801
    %v5492 = vmul.f32 %v5412, 0.0010283801
    %v5493 = vmul.f32 %v5413, 0.0010283801
    %v5494 = vmul.f32 %v5414, 0.0010283801
    %v5495 = vmul.f32 %v5415, 0.0010283801
    %v5496 = vmul.f32 %v5416, 0.0010283801
    %v5497 = vmul.f32 %v5417, 0.0010283801
    %v5498 = vmul.f32 %v5418, 0.0010283801
    %v5499 = vmul.f32 %v5419, 0.0010283801
    %v5500 = vmul.f32 %v5420, 0.0010283801
    %v5501 = vmul.f32 %v5421, 0.0010283801
    %v5502 = vmul.f32 %v5422, 0.0010283801
    %v5503 = vmul.f32 %v5423, 0.0010283801
    %v5504 = vmul.f32 %v5424, 0.0010283801
    %v5505 = vmul.f32 %v5425, 0.0010283801
    %v5506 = vmul.f32 %v5426, 0.0010283801
    %v5507 = vmul.f32 %v5427, 0.0010283801
    %v5508 = vmul.f32 %v5428, 0.0010283801
    %v5509 = vmul.f32 %v5429, 0.0010283801
    %v5510 = vmul.f32 %v5430, 0.0010283801
    %v5511 = vmul.f32 %v5431, 0.0010283801
    %v5512 = vmul.f32 %v5432, 0.0010283801
    %v5513 = vmul.f32 %v5433, 0.0010283801
    %v5514 = vmul.f32 %v5434, 0.0010283801
    %v5515 = vmul.f32 %v5435, 0.0010283801
    %v5516 = vmul.f32 %v5436, 0.0010283801
    %v5517 = vmul.f32 %v5437, 0.0010283801
    %v5518 = vmul.f32 %v5438, 0.0010283801
    %v5519 = vmul.f32 %v5439, 0.0010283801
    %v5520 = vmul.f32 %v5440, 0.0010283801
    %v5521 = vmul.f32 %v5441, 0.0010283801
    %v5522 = vmul.f32 %v5442, 0.0010283801
    %v5523 = vmul.f32 %v5443, 0.0010283801
    %v5524 = vmul.f32 %v5444, 0.0010283801
    %v5525 = vmul.f32 %v5445, 0.0010283801
    %v5526 = vmul.f32 %v5446, 0.0010283801
    %v5527 = vmul.f32 %v5447, 0.0010283801
    %v5528 = vmul.f32 %v5448, 0.0010283801
    %v5529 = vmul.f32 %v5449, 0.0010283801
    %v5530 = vmul.f32 %v5450, 0.0010283801
    %v5531 = vmul.f32 %v5451, 0.0010283801
    %v5532 = vmul.f32 %v5452, 0.0010283801
    %v5533 = vmul.f32 %v5453, 0.0010283801
    %v5534 = vmul.f32 %v5454, 0.0010283801
    %v5535 = vmul.f32 %v5455, 0.0010283801
    %v5536 = vmul.f32 %v5456, 0.0010283801
    %v5537 = vmul.f32 %v5457, 0.0010283801
    %v5538 = vmul.f32 %v5458, 0.0010283801
    %v5539 = vmul.f32 %v5459, 0.0010283801
    %v5540 = vadd.f32 %v5220, %v5460
    %v5541 = vadd.f32 %v5221, %v5461
    %v5542 = vadd.f32 %v5222, %v5462
    %v5543 = vadd.f32 %v5223, %v5463
    %v5544 = vadd.f32 %v5224, %v5464
    %v5545 = vadd.f32 %v5225, %v5465
    %v5546 = vadd.f32 %v5226, %v5466
    %v5547 = vadd.f32 %v5227, %v5467
    %v5548 = vadd.f32 %v5228, %v5468
    %v5549 = vadd.f32 %v5229, %v5469
    %v5550 = vadd.f32 %v5230, %v5470
    %v5551 = vadd.f32 %v5231, %v5471
    %v5552 = vadd.f32 %v5232, %v5472
    %v5553 = vadd.f32 %v5233, %v5473
    %v5554 = vadd.f32 %v5234, %v5474
    %v5555 = vadd.f32 %v5235, %v5475
    %v5556 = vadd.f32 %v5236, %v5476
    %v5557 = vadd.f32 %v5237, %v5477
    %v5558 = vadd.f32 %v5238, %v5478
    %v5559 = vadd.f32 %v5239, %v5479
    %v5560 = vadd.f32 %v5240, %v5480
    %v5561 = vadd.f32 %v5241, %v5481
    %v5562 = vadd.f32 %v5242, %v5482
    %v5563 = vadd.f32 %v5243, %v5483
    %v5564 = vadd.f32 %v5244, %v5484
    %v5565 = vadd.f32 %v5245, %v5485
    %v5566 = vadd.f32 %v5246, %v5486
    %v5567 = vadd.f32 %v5247, %v5487
    %v5568 = vadd.f32 %v5248, %v5488
    %v5569 = vadd.f32 %v5249, %v5489
    %v5570 = vadd.f32 %v5250, %v5490
    %v5571 = vadd.f32 %v5251, %v5491
    %v5572 = vadd.f32 %v5252, %v5492
    %v5573 = vadd.f32 %v5253, %v5493
    %v5574 = vadd.f32 %v5254, %v5494
    %v5575 = vadd.f32 %v5255, %v5495
    %v5576 = vadd.f32 %v5256, %v5496
    %v5577 = vadd.f32 %v5257, %v5497
    %v5578 = vadd.f32 %v5258, %v5498
    %v5579 = vadd.f32 %v5259, %v5499
    %v5580 = vadd.f32 %v5260, %v5500
    %v5581 = vadd.f32 %v5261, %v5501
    %v5582 = vadd.f32 %v5262, %v5502
    %v5583 = vadd.f32 %v5263, %v5503
    %v5584 = vadd.f32 %v5264, %v5504
    %v5585 = vadd.f32 %v5265, %v5505
    %v5586 = vadd.f32 %v5266, %v5506
    %v5587 = vadd.f32 %v5267, %v5507
    %v5588 = vadd.f32 %v5268, %v5508
    %v5589 = vadd.f32 %v5269, %v5509
    %v5590 = vadd.f32 %v5270, %v5510
    %v5591 = vadd.f32 %v5271, %v5511
    %v5592 = vadd.f32 %v5272, %v5512
    %v5593 = vadd.f32 %v5273, %v5513
    %v5594 = vadd.f32 %v5274, %v5514
    %v5595 = vadd.f32 %v5275, %v5515
    %v5596 = vadd.f32 %v5276, %v5516
    %v5597 = vadd.f32 %v5277, %v5517
    %v5598 = vadd.f32 %v5278, %v5518
    %v5599 = vadd.f32 %v5279, %v5519
    %v5600 = vadd.f32 %v5280, %v5520
    %v5601 = vadd.f32 %v5281, %v5521
    %v5602 = vadd.f32 %v5282, %v5522
    %v5603 = vadd.f32 %v5283, %v5523
    %v5604 = vadd.f32 %v5284, %v5524
    %v5605 = vadd.f32 %v5285, %v5525
    %v5606 = vadd.f32 %v5286, %v5526
    %v5607 = vadd.f32 %v5287, %v5527
    %v5608 = vadd.f32 %v5288, %v5528
    %v5609 = vadd.f32 %v5289, %v5529
    %v5610 = vadd.f32 %v5290, %v5530
    %v5611 = vadd.f32 %v5291, %v5531
    %v5612 = vadd.f32 %v5292, %v5532
    %v5613 = vadd.f32 %v5293, %v5533
    %v5614 = vadd.f32 %v5294, %v5534
    %v5615 = vadd.f32 %v5295, %v5535
    %v5616 = vadd.f32 %v5296, %v5536
    %v5617 = vadd.f32 %v5297, %v5537
    %v5618 = vadd.f32 %v5298, %v5538
    %v5619 = vadd.f32 %v5299, %v5539
    %v5620 = vmul.f32 %v5540, %v5540
    %v5621 = vmul.f32 %v5541, %v5541
    %v5622 = vmul.f32 %v5542, %v5542
    %v5623 = vmul.f32 %v5543, %v5543
    %v5624 = vmul.f32 %v5544, %v5544
    %v5625 = vmul.f32 %v5545, %v5545
    %v5626 = vmul.f32 %v5546, %v5546
    %v5627 = vmul.f32 %v5547, %v5547
    %v5628 = vmul.f32 %v5548, %v5548
    %v5629 = vmul.f32 %v5549, %v5549
    %v5630 = vmul.f32 %v5550, %v5550
    %v5631 = vmul.f32 %v5551, %v5551
    %v5632 = vmul.f32 %v5552, %v5552
    %v5633 = vmul.f32 %v5553, %v5553
    %v5634 = vmul.f32 %v5554, %v5554
    %v5635 = vmul.f32 %v5555, %v5555
    %v5636 = vmul.f32 %v5556, %v5556
    %v5637 = vmul.f32 %v5557, %v5557
    %v5638 = vmul.f32 %v5558, %v5558
    %v5639 = vmul.f32 %v5559, %v5559
    %v5640 = vmul.f32 %v5560, %v5560
    %v5641 = vmul.f32 %v5561, %v5561
    %v5642 = vmul.f32 %v5562, %v5562
    %v5643 = vmul.f32 %v5563, %v5563
    %v5644 = vmul.f32 %v5564, %v5564
    %v5645 = vmul.f32 %v5565, %v5565
    %v5646 = vmul.f32 %v5566, %v5566
    %v5647 = vmul.f32 %v5567, %v5567
    %v5648 = vmul.f32 %v5568, %v5568
    %v5649 = vmul.f32 %v5569, %v5569
    %v5650 = vmul.f32 %v5570, %v5570
    %v5651 = vmul.f32 %v5571, %v5571
    %v5652 = vmul.f32 %v5540, %v5556
    %v5653 = vmul.f32 %v5541, %v5557
    %v5654 = vmul.f32 %v5542, %v5558
    %v5655 = vmul.f32 %v5543, %v5559
    %v5656 = vmul.f32 %v5544, %v5560
    %v5657 = vmul.f32 %v5545, %v5561
    %v5658 = vmul.f32 %v5546, %v5562
    %v5659 = vmul.f32 %v5547, %v5563
    %v5660 = vmul.f32 %v5548, %v5564
    %v5661 = vmul.f32 %v5549, %v5565
    %v5662 = vmul.f32 %v5550, %v5566
    %v5663 = vmul.f32 %v5551, %v5567
    %v5664 = vmul.f32 %v5552, %v5568
    %v5665 = vmul.f32 %v5553, %v5569
    %v5666 = vmul.f32 %v5554, %v5570
    %v5667 = vmul.f32 %v5555, %v5571
    %v5668 = vsub.f32 %v5572, %v5620
    %v5669 = vsub.f32 %v5573, %v5621
    %v5670 = vsub.f32 %v5574, %v5622
    %v5671 = vsub.f32 %v5575, %v5623
    %v5672 = vsub.f32 %v5576, %v5624
    %v5673 = vsub.f32 %v5577, %v5625
    %v5674 = vsub.f32 %v5578, %v5626
    %v5675 = vsub.f32 %v5579, %v5627
    %v5676 = vsub.f32 %v5580, %v5628
    %v5677 = vsub.f32 %v5581, %v5629
    %v5678 = vsub.f32 %v5582, %v5630
    %v5679 = vsub.f32 %v5583, %v5631
    %v5680 = vsub.f32 %v5584, %v5632
    %v5681 = vsub.f32 %v5585, %v5633
    %v5682 = vsub.f32 %v5586, %v5634
    %v5683 = vsub.f32 %v5587, %v5635
    %v5684 = vsub.f32 %v5588, %v5636
    %v5685 = vsub.f32 %v5589, %v5637
    %v5686 = vsub.f32 %v5590, %v5638
    %v5687 = vsub.f32 %v5591, %v5639
    %v5688 = vsub.f32 %v5592, %v5640
    %v5689 = vsub.f32 %v5593, %v5641
    %v5690 = vsub.f32 %v5594, %v5642
    %v5691 = vsub.f32 %v5595, %v5643
    %v5692 = vsub.f32 %v5596, %v5644
    %v5693 = vsub.f32 %v5597, %v5645
    %v5694 = vsub.f32 %v5598, %v5646
    %v5695 = vsub.f32 %v5599, %v5647
    %v5696 = vsub.f32 %v5600, %v5648
    %v5697 = vsub.f32 %v5601, %v5649
    %v5698 = vsub.f32 %v5602, %v5650
    %v5699 = vsub.f32 %v5603, %v5651
    %v5700 = vsub.f32 %v5604, %v5652
    %v5701 = vsub.f32 %v5605, %v5653
    %v5702 = vsub.f32 %v5606, %v5654
    %v5703 = vsub.f32 %v5607, %v5655
    %v5704 = vsub.f32 %v5608, %v5656
    %v5705 = vsub.f32 %v5609, %v5657
    %v5706 = vsub.f32 %v5610, %v5658
    %v5707 = vsub.f32 %v5611, %v5659
    %v5708 = vsub.f32 %v5612, %v5660
    %v5709 = vsub.f32 %v5613, %v5661
    %v5710 = vsub.f32 %v5614, %v5662
    %v5711 = vsub.f32 %v5615, %v5663
    %v5712 = vsub.f32 %v5616, %v5664
    %v5713 = vsub.f32 %v5617, %v5665
    %v5714 = vsub.f32 %v5618, %v5666
    %v5715 = vsub.f32 %v5619, %v5667
    %v5716 = vmul.f32 %v5652, 2.0
    %v5717 = vmul.f32 %v5653, 2.0
    %v5718 = vmul.f32 %v5654, 2.0
    %v5719 = vmul.f32 %v5655, 2.0
    %v5720 = vmul.f32 %v5656, 2.0
    %v5721 = vmul.f32 %v5657, 2.0
    %v5722 = vmul.f32 %v5658, 2.0
    %v5723 = vmul.f32 %v5659, 2.0
    %v5724 = vmul.f32 %v5660, 2.0
    %v5725 = vmul.f32 %v5661, 2.0
    %v5726 = vmul.f32 %v5662, 2.0
    %v5727 = vmul.f32 %v5663, 2.0
    %v5728 = vmul.f32 %v5664, 2.0
    %v5729 = vmul.f32 %v5665, 2.0
    %v5730 = vmul.f32 %v5666, 2.0
    %v5731 = vmul.f32 %v5667, 2.0
    %v5732 = vadd.f32 %v5716, 0.0001
    %v5733 = vadd.f32 %v5717, 0.0001
    %v5734 = vadd.f32 %v5718, 0.0001
    %v5735 = vadd.f32 %v5719, 0.0001
    %v5736 = vadd.f32 %v5720, 0.0001
    %v5737 = vadd.f32 %v5721, 0.0001
    %v5738 = vadd.f32 %v5722, 0.0001
    %v5739 = vadd.f32 %v5723, 0.0001
    %v5740 = vadd.f32 %v5724, 0.0001
    %v5741 = vadd.f32 %v5725, 0.0001
    %v5742 = vadd.f32 %v5726, 0.0001
    %v5743 = vadd.f32 %v5727, 0.0001
    %v5744 = vadd.f32 %v5728, 0.0001
    %v5745 = vadd.f32 %v5729, 0.0001
    %v5746 = vadd.f32 %v5730, 0.0001
    %v5747 = vadd.f32 %v5731, 0.0001
    %v5748 = vmul.f32 %v5700, 2.0
    %v5749 = vmul.f32 %v5701, 2.0
    %v5750 = vmul.f32 %v5702, 2.0
    %v5751 = vmul.f32 %v5703, 2.0
    %v5752 = vmul.f32 %v5704, 2.0
    %v5753 = vmul.f32 %v5705, 2.0
    %v5754 = vmul.f32 %v5706, 2.0
    %v5755 = vmul.f32 %v5707, 2.0
    %v5756 = vmul.f32 %v5708, 2.0
    %v5757 = vmul.f32 %v5709, 2.0
    %v5758 = vmul.f32 %v5710, 2.0
    %v5759 = vmul.f32 %v5711, 2.0
    %v5760 = vmul.f32 %v5712, 2.0
    %v5761 = vmul.f32 %v5713, 2.0
    %v5762 = vmul.f32 %v5714, 2.0
    %v5763 = vmul.f32 %v5715, 2.0
    %v5764 = vadd.f32 %v5748, 0.0009
    %v5765 = vadd.f32 %v5749, 0.0009
    %v5766 = vadd.f32 %v5750, 0.0009
    %v5767 = vadd.f32 %v5751, 0.0009
    %v5768 = vadd.f32 %v5752, 0.0009
    %v5769 = vadd.f32 %v5753, 0.0009
    %v5770 = vadd.f32 %v5754, 0.0009
    %v5771 = vadd.f32 %v5755, 0.0009
    %v5772 = vadd.f32 %v5756, 0.0009
    %v5773 = vadd.f32 %v5757, 0.0009
    %v5774 = vadd.f32 %v5758, 0.0009
    %v5775 = vadd.f32 %v5759, 0.0009
    %v5776 = vadd.f32 %v5760, 0.0009
    %v5777 = vadd.f32 %v5761, 0.0009
    %v5778 = vadd.f32 %v5762, 0.0009
    %v5779 = vadd.f32 %v5763, 0.0009
    %v5780 = vmul.f32 %v5732, %v5764
    %v5781 = vmul.f32 %v5733, %v5765
    %v5782 = vmul.f32 %v5734, %v5766
    %v5783 = vmul.f32 %v5735, %v5767
    %v5784 = vmul.f32 %v5736, %v5768
    %v5785 = vmul.f32 %v5737, %v5769
    %v5786 = vmul.f32 %v5738, %v5770
    %v5787 = vmul.f32 %v5739, %v5771
    %v5788 = vmul.f32 %v5740, %v5772
    %v5789 = vmul.f32 %v5741, %v5773
    %v5790 = vmul.f32 %v5742, %v5774
    %v5791 = vmul.f32 %v5743, %v5775
    %v5792 = vmul.f32 %v5744, %v5776
    %v5793 = vmul.f32 %v5745, %v5777
    %v5794 = vmul.f32 %v5746, %v5778
    %v5795 = vmul.f32 %v5747, %v5779
    %v5796 = vadd.f32 %v5620, %v5636
    %v5797 = vadd.f32 %v5621, %v5637
    %v5798 = vadd.f32 %v5622, %v5638
    %v5799 = vadd.f32 %v5623, %v5639
    %v5800 = vadd.f32 %v5624, %v5640
    %v5801 = vadd.f32 %v5625, %v5641
    %v5802 = vadd.f32 %v5626, %v5642
    %v5803 = vadd.f32 %v5627, %v5643
    %v5804 = vadd.f32 %v5628, %v5644
    %v5805 = vadd.f32 %v5629, %v5645
    %v5806 = vadd.f32 %v5630, %v5646
    %v5807 = vadd.f32 %v5631, %v5647
    %v5808 = vadd.f32 %v5632, %v5648
    %v5809 = vadd.f32 %v5633, %v5649
    %v5810 = vadd.f32 %v5634, %v5650
    %v5811 = vadd.f32 %v5635, %v5651
    %v5812 = vadd.f32 %v5796, 0.0001
    %v5813 = vadd.f32 %v5797, 0.0001
    %v5814 = vadd.f32 %v5798, 0.0001
    %v5815 = vadd.f32 %v5799, 0.0001
    %v5816 = vadd.f32 %v5800, 0.0001
    %v5817 = vadd.f32 %v5801, 0.0001
    %v5818 = vadd.f32 %v5802, 0.0001
    %v5819 = vadd.f32 %v5803, 0.0001
    %v5820 = vadd.f32 %v5804, 0.0001
    %v5821 = vadd.f32 %v5805, 0.0001
    %v5822 = vadd.f32 %v5806, 0.0001
    %v5823 = vadd.f32 %v5807, 0.0001
    %v5824 = vadd.f32 %v5808, 0.0001
    %v5825 = vadd.f32 %v5809, 0.0001
    %v5826 = vadd.f32 %v5810, 0.0001
    %v5827 = vadd.f32 %v5811, 0.0001
    %v5828 = vadd.f32 %v5668, %v5684
    %v5829 = vadd.f32 %v5669, %v5685
    %v5830 = vadd.f32 %v5670, %v5686
    %v5831 = vadd.f32 %v5671, %v5687
    %v5832 = vadd.f32 %v5672, %v5688
    %v5833 = vadd.f32 %v5673, %v5689
    %v5834 = vadd.f32 %v5674, %v5690
    %v5835 = vadd.f32 %v5675, %v5691
    %v5836 = vadd.f32 %v5676, %v5692
    %v5837 = vadd.f32 %v5677, %v5693
    %v5838 = vadd.f32 %v5678, %v5694
    %v5839 = vadd.f32 %v5679, %v5695
    %v5840 = vadd.f32 %v5680, %v5696
    %v5841 = vadd.f32 %v5681, %v5697
    %v5842 = vadd.f32 %v5682, %v5698
    %v5843 = vadd.f32 %v5683, %v5699
    %v5844 = vadd.f32 %v5828, 0.0009
    %v5845 = vadd.f32 %v5829, 0.0009
    %v5846 = vadd.f32 %v5830, 0.0009
    %v5847 = vadd.f32 %v5831, 0.0009
    %v5848 = vadd.f32 %v5832, 0.0009
    %v5849 = vadd.f32 %v5833, 0.0009
    %v5850 = vadd.f32 %v5834, 0.0009
    %v5851 = vadd.f32 %v5835, 0.0009
    %v5852 = vadd.f32 %v5836, 0.0009
    %v5853 = vadd.f32 %v5837, 0.0009
    %v5854 = vadd.f32 %v5838, 0.0009
    %v5855 = vadd.f32 %v5839, 0.0009
    %v5856 = vadd.f32 %v5840, 0.0009
    %v5857 = vadd.f32 %v5841, 0.0009
    %v5858 = vadd.f32 %v5842, 0.0009
    %v5859 = vadd.f32 %v5843, 0.0009
    %v5860 = vmul.f32 %v5812, %v5844
    %v5861 = vmul.f32 %v5813, %v5845
    %v5862 = vmul.f32 %v5814, %v5846
    %v5863 = vmul.f32 %v5815, %v5847
    %v5864 = vmul.f32 %v5816, %v5848
    %v5865 = vmul.f32 %v5817, %v5849
    %v5866 = vmul.f32 %v5818, %v5850
    %v5867 = vmul.f32 %v5819, %v5851
    %v5868 = vmul.f32 %v5820, %v5852
    %v5869 = vmul.f32 %v5821, %v5853
    %v5870 = vmul.f32 %v5822, %v5854
    %v5871 = vmul.f32 %v5823, %v5855
    %v5872 = vmul.f32 %v5824, %v5856
    %v5873 = vmul.f32 %v5825, %v5857
    %v5874 = vmul.f32 %v5826, %v5858
    %v5875 = vmul.f32 %v5827, %v5859
    %v5876 = vrcp.pop %v5860
    %v5877 = vrcp.pop %v5861
    %v5878 = vrcp.pop %v5862
    %v5879 = vrcp.pop %v5863
    %v5880 = vrcp.pop %v5864
    %v5881 = vrcp.pop %v5865
    %v5882 = vrcp.pop %v5866
    %v5883 = vrcp.pop %v5867
    %v5884 = vrcp.pop %v5868
    %v5885 = vrcp.pop %v5869
    %v5886 = vrcp.pop %v5870
    %v5887 = vrcp.pop %v5871
    %v5888 = vrcp.pop %v5872
    %v5889 = vrcp.pop %v5873
    %v5890 = vrcp.pop %v5874
    %v5891 = vrcp.pop %v5875
    %v5892 = vmul.f32 %v5860, %v5876
    %v5893 = vmul.f32 %v5861, %v5877
    %v5894 = vmul.f32 %v5862, %v5878
    %v5895 = vmul.f32 %v5863, %v5879
    %v5896 = vmul.f32 %v5864, %v5880
    %v5897 = vmul.f32 %v5865, %v5881
    %v5898 = vmul.f32 %v5866, %v5882
    %v5899 = vmul.f32 %v5867, %v5883
    %v5900 = vmul.f32 %v5868, %v5884
    %v5901 = vmul.f32 %v5869, %v5885
    %v5902 = vmul.f32 %v5870, %v5886
    %v5903 = vmul.f32 %v5871, %v5887
    %v5904 = vmul.f32 %v5872, %v5888
    %v5905 = vmul.f32 %v5873, %v5889
    %v5906 = vmul.f32 %v5874, %v5890
    %v5907 = vmul.f32 %v5875, %v5891
    %v5908 = vsub.f32 2.0, %v5892
    %v5909 = vsub.f32 2.0, %v5893
    %v5910 = vsub.f32 2.0, %v5894
    %v5911 = vsub.f32 2.0, %v5895
    %v5912 = vsub.f32 2.0, %v5896
    %v5913 = vsub.f32 2.0, %v5897
    %v5914 = vsub.f32 2.0, %v5898
    %v5915 = vsub.f32 2.0, %v5899
    %v5916 = vsub.f32 2.0, %v5900
    %v5917 = vsub.f32 2.0, %v5901
    %v5918 = vsub.f32 2.0, %v5902
    %v5919 = vsub.f32 2.0, %v5903
    %v5920 = vsub.f32 2.0, %v5904
    %v5921 = vsub.f32 2.0, %v5905
    %v5922 = vsub.f32 2.0, %v5906
    %v5923 = vsub.f32 2.0, %v5907
    %v5924 = vmul.f32 %v5876, %v5908
    %v5925 = vmul.f32 %v5877, %v5909
    %v5926 = vmul.f32 %v5878, %v5910
    %v5927 = vmul.f32 %v5879, %v5911
    %v5928 = vmul.f32 %v5880, %v5912
    %v5929 = vmul.f32 %v5881, %v5913
    %v5930 = vmul.f32 %v5882, %v5914
    %v5931 = vmul.f32 %v5883, %v5915
    %v5932 = vmul.f32 %v5884, %v5916
    %v5933 = vmul.f32 %v5885, %v5917
    %v5934 = vmul.f32 %v5886, %v5918
    %v5935 = vmul.f32 %v5887, %v5919
    %v5936 = vmul.f32 %v5888, %v5920
    %v5937 = vmul.f32 %v5889, %v5921
    %v5938 = vmul.f32 %v5890, %v5922
    %v5939 = vmul.f32 %v5891, %v5923
    %v5940 = vmul.f32 %v5780, %v5924
    %v5941 = vmul.f32 %v5781, %v5925
    %v5942 = vmul.f32 %v5782, %v5926
    %v5943 = vmul.f32 %v5783, %v5927
    %v5944 = vmul.f32 %v5784, %v5928
    %v5945 = vmul.f32 %v5785, %v5929
    %v5946 = vmul.f32 %v5786, %v5930
    %v5947 = vmul.f32 %v5787, %v5931
    %v5948 = vmul.f32 %v5788, %v5932
    %v5949 = vmul.f32 %v5789, %v5933
    %v5950 = vmul.f32 %v5790, %v5934
    %v5951 = vmul.f32 %v5791, %v5935
    %v5952 = vmul.f32 %v5792, %v5936
    %v5953 = vmul.f32 %v5793, %v5937
    %v5954 = vmul.f32 %v5794, %v5938
    %v5955 = vmul.f32 %v5795, %v5939
    %v5956 = vld [vmem:[#allocation2] sm:$0xff]
    %v5957 = vld [vmem:[#allocation2 + $0x8] sm:$0xff]
    %v5958 = vld [vmem:[#allocation2 + $0x10] sm:$0xff]
    %v5959 = vld [vmem:[#allocation2 + $0x18] sm:$0xff]
    %v5960 = vld [vmem:[#allocation2 + $0x20] sm:$0xff]
    %v5961 = vld [vmem:[#allocation2 + $0x28] sm:$0xff]
    %v5962 = vld [vmem:[#allocation2 + $0x30] sm:$0xff]
    %v5963 = vld [vmem:[#allocation2 + $0x38] sm:$0xff]
    %v5964 = vld [vmem:[#allocation2 + $0x40] sm:$0xff]
    %v5965 = vld [vmem:[#allocation2 + $0x48] sm:$0xff]
    %v5966 = vld [vmem:[#allocation2 + $0x50] sm:$0xff]
    %v5967 = vld [vmem:[#allocation2 + $0x58] sm:$0xff]
    %v5968 = vld [vmem:[#allocation2 + $0x60] sm:$0xff]
    %v5969 = vld [vmem:[#allocation2 + $0x68] sm:$0xff]
    %v5970 = vld [vmem:[#allocation2 + $0x70] sm:$0xff]
    %v5971 = vld [vmem:[#allocation2 + $0x78] sm:$0xff]
    %v5972 = vsub.f32 %v243, %v5940
    %v5973 = vsub.f32 %v255, %v5941
    %v5974 = vsub.f32 %v267, %v5942
    %v5975 = vsub.f32 %v279, %v5943
    %v5976 = vsub.f32 %v291, %v5944
    %v5977 = vsub.f32 %v303, %v5945
    %v5978 = vsub.f32 %v315, %v5946
    %v5979 = vsub.f32 %v327, %v5947
    %v5980 = vsub.f32 %v339, %v5948
    %v5981 = vsub.f32 %v351, %v5949
    %v5982 = vsub.f32 %v363, %v5950
    %v5983 = vsub.f32 %v375, %v5951
    %v5984 = vsub.f32 %v387, %v5952
    %v5985 = vsub.f32 %v399, %v5953
    %v5986 = vsub.f32 %v411, %v5954
    %v5987 = vsub.f32 %v423, %v5955
    %v5988 = vadd.f32 %v5956, %v5972
    %v5989 = vadd.f32 %v5957, %v5973
    %v5990 = vadd.f32 %v5958, %v5974
    %v5991 = vadd.f32 %v5959, %v5975
    %v5992 = vadd.f32 %v5960, %v5976
    %v5993 = vadd.f32 %v5961, %v5977
    %v5994 = vadd.f32 %v5962, %v5978
    %v5995 = vadd.f32 %v5963, %v5979
    %v5996 = vadd.f32 %v5964, %v5980
    %v5997 = vadd.f32 %v5965, %v5981
    %v5998 = vadd.f32 %v5966, %v5982
    %v5999 = vadd.f32 %v5967, %v5983
    %v6000 = vadd.f32 %v5968, %v5984
    %v6001 = vadd.f32 %v5969, %v5985
    %v6002 = vadd.f32 %v5970, %v5986
    %v6003 = vadd.f32 %v5971, %v5987
    %6004 = vst.msk [vmem:[#allocation2] sm:$0xff] %vm474, %v5988
    %6005 = vst.msk [vmem:[#allocation2 + $0x8] sm:$0xff] %vm474, %v5989
    %6006 = vst.msk [vmem:[#allocation2 + $0x10] sm:$0xff] %vm474, %v5990
    %6007 = vst.msk [vmem:[#allocation2 + $0x18] sm:$0xff] %vm474, %v5991
    %6008 = vst.msk [vmem:[#allocation2 + $0x20] sm:$0xff] %vm474, %v5992
    %6009 = vst.msk [vmem:[#allocation2 + $0x28] sm:$0xff] %vm474, %v5993
    %6010 = vst.msk [vmem:[#allocation2 + $0x30] sm:$0xff] %vm474, %v5994
    %6011 = vst.msk [vmem:[#allocation2 + $0x38] sm:$0xff] %vm474, %v5995
    %6012 = vst.msk [vmem:[#allocation2 + $0x40] sm:$0xff] %vm474, %v5996
    %6013 = vst.msk [vmem:[#allocation2 + $0x48] sm:$0xff] %vm474, %v5997
    %6014 = vst.msk [vmem:[#allocation2 + $0x50] sm:$0xff] %vm474, %v5998
    %6015 = vst.msk [vmem:[#allocation2 + $0x58] sm:$0xff] %vm474, %v5999
    %6016 = vst.msk [vmem:[#allocation2 + $0x60] sm:$0xff] %vm474, %v6000
    %6017 = vst.msk [vmem:[#allocation2 + $0x68] sm:$0xff] %vm474, %v6001
    %6018 = vst.msk [vmem:[#allocation2 + $0x70] sm:$0xff] %vm474, %v6002
    %6019 = vst.msk [vmem:[#allocation2 + $0x78] sm:$0xff] %vm474, %v6003
    // Predicated region
    $region14: #{tpu_custom_call.1} parent=1 // pred_check
      %p6020 = pneg %p56
    $region15: #{tpu_custom_call.1} parent=1 // pred_check_branch
      %6022 = sbr.rel (%p6020) target = $region17
    $region16: #{tpu_custom_call.1} parent=1 // pred_region
      %v6023 = vld [vmem:[#allocation2] sm:$0xff]
      %v6024 = vld [vmem:[#allocation2 + $0x8] sm:$0xff]
      %v6025 = vld [vmem:[#allocation2 + $0x10] sm:$0xff]
      %v6026 = vld [vmem:[#allocation2 + $0x18] sm:$0xff]
      %v6027 = vld [vmem:[#allocation2 + $0x20] sm:$0xff]
      %v6028 = vld [vmem:[#allocation2 + $0x28] sm:$0xff]
      %v6029 = vld [vmem:[#allocation2 + $0x30] sm:$0xff]
      %v6030 = vld [vmem:[#allocation2 + $0x38] sm:$0xff]
      %v6031 = vld [vmem:[#allocation2 + $0x40] sm:$0xff]
      %v6032 = vld [vmem:[#allocation2 + $0x48] sm:$0xff]
      %v6033 = vld [vmem:[#allocation2 + $0x50] sm:$0xff]
      %v6034 = vld [vmem:[#allocation2 + $0x58] sm:$0xff]
      %v6035 = vld [vmem:[#allocation2 + $0x60] sm:$0xff]
      %v6036 = vld [vmem:[#allocation2 + $0x68] sm:$0xff]
      %v6037 = vld [vmem:[#allocation2 + $0x70] sm:$0xff]
      %v6038 = vld [vmem:[#allocation2 + $0x78] sm:$0xff]
      %v6039 = vsel %vm474, %v6023, 0.0
      %v6040 = vsel %vm474, %v6024, 0.0
      %v6041 = vadd.f32 %v6039, %v6040
      %v6042 = vsel %vm474, %v6025, 0.0
      %v6043 = vadd.f32 %v6041, %v6042
      %v6044 = vsel %vm474, %v6026, 0.0
      %v6045 = vadd.f32 %v6043, %v6044
      %v6046 = vsel %vm474, %v6027, 0.0
      %v6047 = vadd.f32 %v6045, %v6046
      %v6048 = vsel %vm474, %v6028, 0.0
      %v6049 = vadd.f32 %v6047, %v6048
      %v6050 = vsel %vm474, %v6029, 0.0
      %v6051 = vadd.f32 %v6049, %v6050
      %v6052 = vsel %vm474, %v6030, 0.0
      %v6053 = vadd.f32 %v6051, %v6052
      %v6054 = vsel %vm474, %v6031, 0.0
      %v6055 = vadd.f32 %v6053, %v6054
      %v6056 = vsel %vm474, %v6032, 0.0
      %v6057 = vadd.f32 %v6055, %v6056
      %v6058 = vsel %vm474, %v6033, 0.0
      %v6059 = vadd.f32 %v6057, %v6058
      %v6060 = vsel %vm474, %v6034, 0.0
      %v6061 = vadd.f32 %v6059, %v6060
      %v6062 = vsel %vm474, %v6035, 0.0
      %v6063 = vadd.f32 %v6061, %v6062
      %v6064 = vsel %vm474, %v6036, 0.0
      %v6065 = vadd.f32 %v6063, %v6064
      %v6066 = vsel %vm474, %v6037, 0.0
      %v6067 = vadd.f32 %v6065, %v6066
      %v6068 = vsel %vm474, %v6038, 0.0
      %v6069 = vadd.f32 %v6067, %v6068
      %6070 = vadd.xlane.f32.xlu0 %v6069
      %v6071 = vpop.xlane.xlu0 %6070
      %v6072 = vrot.slane %v6071, 4
      %v6073 = vadd.f32 %v6071, %v6072
      %v6074 = vrot.slane %v6073, 2
      %v6075 = vadd.f32 %v6073, %v6074
      %v6076 = vrot.slane %v6075, 1
      %v6077 = vadd.f32 %v6075, %v6076
      %s6078 = vtos %v6077
      %v6079 = vstv %s6078
      %v6080 = vadd.f32 %v6079, 0.0
      %6081 = vst [vmem:[#allocation4] sm:$0x1] %v6080
    $region17: #{tpu_custom_call.1} parent=1 // pred_fallthru
      _
    // Predicated region
    $region18: #{tpu_custom_call.1} parent=1 // pred_check
      _
    $region19: #{tpu_custom_call.1} parent=1 // pred_check_branch
      %6083 = sbr.rel (0) target = $region21
    $region20: #{tpu_custom_call.1} parent=1 // pred_region
      %6085 = vsyncadd [#allocation5], 0
      %s6087 = sshll.u32 [#allocation4], 4
      %s6088 = int_to_ptr.vmem [resolvable:$true] %s6087
      %s6089 = sshll.u32 %s2, 4
      %s6090 = int_to_ptr.hbm [resolvable:$true] %s6089
      %6092 = dma.vmem_to_hbm [thread:$0]  %s6088, 16, %s6090, [#allocation5]
    $region21: #{tpu_custom_call.1} parent=1 // pred_fallthru
      _
    // Predicated region
    $region22: #{tpu_custom_call.1} parent=1 // pred_check
      _
    $region23: #{tpu_custom_call.1} parent=1 // pred_check_branch
      %6094 = sbr.rel (0) target = $region25
    $region24: #{tpu_custom_call.1} parent=1 // pred_region
      %6096 = dma.done [#allocation5], 16
    $region25: #{tpu_custom_call.1} parent=1 // pred_fallthru
      _
    %6097 = vsyncpa [#allocation5], 1

</llo_original>
